<compile_context>
chip_gen: v5e
topology: v5e:2x2
jax: 0.10.0
libtpu: 0.0.40
codegen_flags: <defaults>
</compile_context>

<pallas_src>
import jax
import jax.numpy as jnp
import numpy as np
from jax.experimental import pallas as pl
from jax.experimental.pallas import tpu as pltpu


def _relu(x):
    return jnp.maximum(x, 0.0)


# ----------------------------------------------------------------------------
# Kernel 1: encoder (5x conv->BN->ReLU), max over points, FC head (3x Linear+ReLU)
# ----------------------------------------------------------------------------
def encoder_head_kernel(
    x_ref,
    cw1, cb1, cw2, cb2, cw3, cb3, cw4, cb4, cw5, cb5,
    fw1, fb1, fw2, fb2, fw3, fb3,
    h_ref,
):
    tb, L, cin = x_ref.shape
    x = x_ref[...].reshape(tb * L, cin)
    a = _relu(jnp.dot(x, cw1[...], preferred_element_type=jnp.float32) + cb1[...])
    a = _relu(jnp.dot(a, cw2[...], preferred_element_type=jnp.float32) + cb2[...])
    a = _relu(jnp.dot(a, cw3[...], preferred_element_type=jnp.float32) + cb3[...])
    a = _relu(jnp.dot(a, cw4[...], preferred_element_type=jnp.float32) + cb4[...])
    a = _relu(jnp.dot(a, cw5[...], preferred_element_type=jnp.float32) + cb5[...])
    # torch.max(fifth, dim=2)[0]  ->  max over each cloud's points axis.
    z = jnp.max(a.reshape(tb, L, a.shape[-1]), axis=1)               # (tb, 128)
    h = _relu(jnp.dot(z, fw1[...], preferred_element_type=jnp.float32) + fb1[...])
    h = _relu(jnp.dot(h, fw2[...], preferred_element_type=jnp.float32) + fb2[...])
    h = _relu(jnp.dot(h, fw3[...], preferred_element_type=jnp.float32) + fb3[...])
    h_ref[...] = h                                                    # (tb, 6144)


def _pick_tb(B, L, Cin):
    """Largest divisor of B whose (tb, L, Cin) input tile stays small in VMEM."""
    budget = 4 * 1024 * 1024
    tb = 1
    for cand in range(1, B + 1):
        if B % cand == 0 and cand * L * Cin * 4 <= budget:
            tb = cand
    return tb


def run_encoder_head(x_blc, conv_params, fc_head_params):
    B, L, Cin = x_blc.shape
    tb = _pick_tb(B, L, Cin)
    n_hidden = fc_head_params[-1][0].shape[1]                         # 6144

    in_specs = [pl.BlockSpec((tb, L, Cin), lambda b: (b, 0, 0))]
    flat = []
    for w, bias in list(conv_params) + list(fc_head_params):
        flat += [w, bias]
        in_specs += [
            pl.BlockSpec(w.shape, lambda b: (0, 0)),
            pl.BlockSpec(bias.shape, lambda b: (0, 0)),
        ]

    # TODO(synk): constant-index weights are still double-buffered by the
    # default pipeliner; single-buffering them would halve their VMEM share.
    weight_bytes = sum(
        int(w.size + b.size) * 4 for w, b in list(conv_params) + list(fc_head_params)
    )
    vmem_limit = int(
        2 * tb * L * Cin * 4            # input tile (double-buffered)
        + 2 * tb * n_hidden * 4         # output tile (double-buffered)
        + 2 * weight_bytes              # weights/biases (double-buffered)
        + 8 * tb * L * 256 * 4          # intermediate activation headroom
        + 8 * 1024 * 1024               # slack
    )

    return pl.pallas_call(
        encoder_head_kernel,
        out_shape=jax.ShapeDtypeStruct((B, n_hidden), jnp.float32),
        grid=(B // tb,),
        in_specs=in_specs,
        out_specs=pl.BlockSpec((tb, n_hidden), lambda b: (b, 0)),
        compiler_params=pltpu.CompilerParams(
            dimension_semantics=("parallel",),   # independent batch tiles (v7x: 2 TCs)
            vmem_limit_bytes=vmem_limit,
        ),
    )(x_blc, *flat)


# ----------------------------------------------------------------------------
# Kernel 2: final Linear(6144, 6144) (no ReLU), tiled over output columns with
# a pre-packed weight so every grid step streams one contiguous (K, tn) slab.
# ----------------------------------------------------------------------------
def final_linear_kernel(h_ref, w_ref, b_ref, o_ref):
    o_ref[...] = (
        jnp.dot(h_ref[...], w_ref[...], preferred_element_type=jnp.float32)
        + b_ref[...]
    )


def _pick_tn(K, N):
    """Output-column tile: as big as comfortably fits (double-buffered) in VMEM."""
    try:
        vmem = pltpu.get_tpu_info().vmem_capacity_bytes
    except Exception:
        vmem = 64 * 1024 * 1024          # conservative fallback (v7x per-core VMEM)
    budget = vmem // 2                    # double-buffered weight tile + headroom
    tn = 2048
    while tn > 128 and (N % tn != 0 or 2 * K * tn * 4 > budget):
        tn //= 2
    if N % tn != 0:
        tn = N
    return tn


def pack_final_weight(w, tn):
    """(K, N) row-major -> (N//tn, K, tn): one contiguous HBM slab per output tile."""
    K, N = w.shape
    assert N % tn == 0, (N, tn)
    return jnp.transpose(w.reshape(K, N // tn, tn), (1, 0, 2))


def run_final(h, w_tiled, bias):
    B, K = h.shape
    NT, Kw, tn = w_tiled.shape
    assert Kw == K
    N = NT * tn
    # Derive the VMEM limit from the actual need instead of a blanket 100 MiB
    # (which exceeds v7x's 64 MiB physical VMEM).
    vmem_limit = int(2 * K * tn * 4 + 2 * B * K * 4 + 8 * 1024 * 1024)
    return pl.pallas_call(
        final_linear_kernel,
        out_shape=jax.ShapeDtypeStruct((B, N), jnp.float32),
        grid=(NT,),
        in_specs=[
            pl.BlockSpec((B, K), lambda j: (0, 0)),            # resident activations
            pl.BlockSpec((None, K, tn), lambda j: (j, 0, 0)),  # contiguous weight slab
            pl.BlockSpec((1, tn), lambda j: (0, j)),
        ],
        out_specs=pl.BlockSpec((B, tn), lambda j: (0, j)),
        compiler_params=pltpu.CompilerParams(
            dimension_semantics=("parallel",),   # independent output tiles (v7x: 2 TCs)
            vmem_limit_bytes=vmem_limit,
        ),
    )(h, w_tiled, bias)


# ----------------------------------------------------------------------------
# Parameter construction (deterministic, PyTorch-style fan-in init), with
# eval-mode BatchNorm folded into the convs.
# ----------------------------------------------------------------------------
def _uniform(key, shape, bound):
    return jax.random.uniform(key, shape, jnp.float32, -bound, bound)


def init_params(key, encoding_dim):
    conv_dims = [(encoding_dim, 64), (64, 128), (128, 128), (128, 256), (256, 128)]
    fc_dims = [(128, 256), (256, 256), (256, 6144), (6144, 6144)]
    keys = jax.random.split(key, len(conv_dims) + len(fc_dims))

    conv_params = []
    for k, (cin, cout) in zip(keys[: len(conv_dims)], conv_dims):
        kw, kb, kg, kbe, km, kv = jax.random.split(k, 6)
        bound = 1.0 / np.sqrt(cin)
        w = _uniform(kw, (cin, cout), bound)      # Conv1d weight (cout, cin, 1), transposed
        b = _uniform(kb, (cout,), bound)
        gamma = jax.random.uniform(kg, (cout,), jnp.float32, 0.5, 1.5)
        beta = _uniform(kbe, (cout,), 0.1)
        mean = _uniform(km, (cout,), 0.1)
        var = jax.random.uniform(kv, (cout,), jnp.float32, 0.5, 1.5)
        scale = gamma / jnp.sqrt(var + 1e-5)
        w_f = w * scale[None, :]
        b_f = ((b - mean) * scale + beta)[None, :]  # (1, cout)
        conv_params.append((w_f, b_f))

    fc_params = []
    for k, (fin, fout) in zip(keys[len(conv_dims):], fc_dims):
        kw, kb = jax.random.split(k)
        bound = 1.0 / np.sqrt(fin)
        fc_params.append((_uniform(kw, (fin, fout), bound), _uniform(kb, (1, fout), bound)))
    return conv_params, fc_params


def point_autoencoder_forward(x_bcl, conv_params, fc_params, packed_final=None):
    """x_bcl: PyTorch-layout input (B, encoding_dim, L)."""
    x_blc = jnp.transpose(x_bcl, (0, 2, 1))                       # -> (B, L, C_in)
    h = run_encoder_head(x_blc, conv_params, fc_params[:3])       # (B, 6144)
    w4, b4 = fc_params[3]
    if packed_final is None:
        packed_final = pack_final_weight(w4, _pick_tn(*w4.shape))
    return run_final(h, packed_final, b4)                         # (B, 6144)


def reference_forward(x_bcl, conv_params, fc_params):
    h = jnp.transpose(x_bcl, (0, 2, 1))
    for w, b in conv_params:
        h = jnp.maximum(h @ w + b, 0.0)
    z = jnp.max(h, axis=1)
    for i, (w, b) in enumerate(fc_params):
        z = z @ w + b
        if i < 3:
            z = jnp.maximum(z, 0.0)
    return z


if __name__ == "__main__":
    B, L, ENC_DIM = 2, 16, 256  # small encoding_dim (module default is 2048)
    key = jax.random.PRNGKey(0)
    kx, kp = jax.random.split(key)
    x = jax.random.normal(kx, (B, ENC_DIM, L), jnp.float32)  # PyTorch NCL input

    conv_params, fc_params = init_params(kp, ENC_DIM)

    # Pre-pack the bandwidth-dominant final weight once (per-tile contiguous slabs);
    # in a real model this is done at weight-load time, not per forward pass.
    w4, b4 = fc_params[3]
    tn = _pick_tn(*w4.shape)
    w4_packed = pack_final_weight(w4, tn)

    out = point_autoencoder_forward(x, conv_params, fc_params, packed_final=w4_packed)
    out = jax.block_until_ready(out)

    assert out.shape == (B, 6144), out.shape
    ref = reference_forward(x, conv_params, fc_params)
    np.testing.assert_allclose(np.asarray(out), np.asarray(ref), rtol=2e-2, atol=2e-2)
    print("KERNEL_OK")
</pallas_src>

<mosaic_0001>
module attributes {stable_mosaic.version = 11 : i64} {
  func.func @encoder_head_kernel(%arg0: i32, %arg1: memref<2x16x256xf32, #tpu.memory_space<vmem>>, %arg2: memref<256x64xf32, #tpu.memory_space<vmem>>, %arg3: memref<1x64xf32, #tpu.memory_space<vmem>>, %arg4: memref<64x128xf32, #tpu.memory_space<vmem>>, %arg5: memref<1x128xf32, #tpu.memory_space<vmem>>, %arg6: memref<128x128xf32, #tpu.memory_space<vmem>>, %arg7: memref<1x128xf32, #tpu.memory_space<vmem>>, %arg8: memref<128x256xf32, #tpu.memory_space<vmem>>, %arg9: memref<1x256xf32, #tpu.memory_space<vmem>>, %arg10: memref<256x128xf32, #tpu.memory_space<vmem>>, %arg11: memref<1x128xf32, #tpu.memory_space<vmem>>, %arg12: memref<128x256xf32, #tpu.memory_space<vmem>>, %arg13: memref<1x256xf32, #tpu.memory_space<vmem>>, %arg14: memref<256x256xf32, #tpu.memory_space<vmem>>, %arg15: memref<1x256xf32, #tpu.memory_space<vmem>>, %arg16: memref<256x6144xf32, #tpu.memory_space<vmem>>, %arg17: memref<1x6144xf32, #tpu.memory_space<vmem>>, %arg18: memref<2x6144xf32, #tpu.memory_space<vmem>>) attributes {dimension_semantics = [#tpu.dimension_semantics<parallel>], iteration_bounds = array<i64: 1>, scalar_prefetch = 0 : i64, scratch_operands = 0 : i64, tpu.core_type = #tpu.core_type<tc>, window_params = [{transform_indices = @transform_0, window_bounds = array<i64: 2, 16, 256>}, {pipeline_mode = #tpu.pipeline_mode<synchronous>, transform_indices = @transform_1, window_bounds = array<i64: 256, 64>}, {pipeline_mode = #tpu.pipeline_mode<synchronous>, transform_indices = @transform_2, window_bounds = array<i64: 1, 64>}, {pipeline_mode = #tpu.pipeline_mode<synchronous>, transform_indices = @transform_3, window_bounds = array<i64: 64, 128>}, {pipeline_mode = #tpu.pipeline_mode<synchronous>, transform_indices = @transform_4, window_bounds = array<i64: 1, 128>}, {pipeline_mode = #tpu.pipeline_mode<synchronous>, transform_indices = @transform_5, window_bounds = array<i64: 128, 128>}, {pipeline_mode = #tpu.pipeline_mode<synchronous>, transform_indices = @transform_6, window_bounds = array<i64: 1, 128>}, {pipeline_mode = #tpu.pipeline_mode<synchronous>, transform_indices = @transform_7, window_bounds = array<i64: 128, 256>}, {pipeline_mode = #tpu.pipeline_mode<synchronous>, transform_indices = @transform_8, window_bounds = array<i64: 1, 256>}, {pipeline_mode = #tpu.pipeline_mode<synchronous>, transform_indices = @transform_9, window_bounds = array<i64: 256, 128>}, {pipeline_mode = #tpu.pipeline_mode<synchronous>, transform_indices = @transform_10, window_bounds = array<i64: 1, 128>}, {pipeline_mode = #tpu.pipeline_mode<synchronous>, transform_indices = @transform_11, window_bounds = array<i64: 128, 256>}, {pipeline_mode = #tpu.pipeline_mode<synchronous>, transform_indices = @transform_12, window_bounds = array<i64: 1, 256>}, {pipeline_mode = #tpu.pipeline_mode<synchronous>, transform_indices = @transform_13, window_bounds = array<i64: 256, 256>}, {pipeline_mode = #tpu.pipeline_mode<synchronous>, transform_indices = @transform_14, window_bounds = array<i64: 1, 256>}, {pipeline_mode = #tpu.pipeline_mode<synchronous>, transform_indices = @transform_15, window_bounds = array<i64: 256, 6144>}, {pipeline_mode = #tpu.pipeline_mode<synchronous>, transform_indices = @transform_16, window_bounds = array<i64: 1, 6144>}, {transform_indices = @transform_17, window_bounds = array<i64: 2, 6144>}]} {
    %c0 = arith.constant 0 : index
    %c0_0 = arith.constant 0 : index
    %c0_1 = arith.constant 0 : index
    %0 = vector.load %arg1[%c0, %c0_0, %c0_1] : memref<2x16x256xf32, #tpu.memory_space<vmem>>, vector<2x16x256xf32>
    %1 = vector.shape_cast %0 : vector<2x16x256xf32> to vector<32x256xf32>
    %c0_2 = arith.constant 0 : index
    %c0_3 = arith.constant 0 : index
    %2 = vector.load %arg2[%c0_2, %c0_3] : memref<256x64xf32, #tpu.memory_space<vmem>>, vector<256x64xf32>
    %cst = arith.constant dense<0.000000e+00> : vector<32x64xf32>
    %3 = tpu.matmul %1, %2, %cst {dimension_numbers = #tpu.dot_dimension_numbers<[1], [0], [0], [1], [0, 0, 1, 1], [], []>} : vector<32x256xf32>, vector<256x64xf32>, vector<32x64xf32> -> vector<32x64xf32>
    %c0_4 = arith.constant 0 : index
    %c0_5 = arith.constant 0 : index
    %4 = vector.load %arg3[%c0_4, %c0_5] : memref<1x64xf32, #tpu.memory_space<vmem>>, vector<1x64xf32>
    %5 = vector.broadcast %4 : vector<1x64xf32> to vector<32x64xf32>
    %6 = arith.addf %3, %5 : vector<32x64xf32>
    %cst_6 = arith.constant 0.000000e+00 : f32
    %7 = vector.broadcast %cst_6 : f32 to vector<32x64xf32>
    %8 = arith.maximumf %6, %7 : vector<32x64xf32>
    %c0_7 = arith.constant 0 : index
    %c0_8 = arith.constant 0 : index
    %9 = vector.load %arg4[%c0_7, %c0_8] : memref<64x128xf32, #tpu.memory_space<vmem>>, vector<64x128xf32>
    %cst_9 = arith.constant dense<0.000000e+00> : vector<32x128xf32>
    %10 = tpu.matmul %8, %9, %cst_9 {dimension_numbers = #tpu.dot_dimension_numbers<[1], [0], [0], [1], [0, 0, 1, 1], [], []>} : vector<32x64xf32>, vector<64x128xf32>, vector<32x128xf32> -> vector<32x128xf32>
    %c0_10 = arith.constant 0 : index
    %c0_11 = arith.constant 0 : index
    %11 = vector.load %arg5[%c0_10, %c0_11] : memref<1x128xf32, #tpu.memory_space<vmem>>, vector<1x128xf32>
    %12 = vector.broadcast %11 : vector<1x128xf32> to vector<32x128xf32>
    %13 = arith.addf %10, %12 : vector<32x128xf32>
    %cst_12 = arith.constant 0.000000e+00 : f32
    %14 = vector.broadcast %cst_12 : f32 to vector<32x128xf32>
    %15 = arith.maximumf %13, %14 : vector<32x128xf32>
    %c0_13 = arith.constant 0 : index
    %c0_14 = arith.constant 0 : index
    %16 = vector.load %arg6[%c0_13, %c0_14] : memref<128x128xf32, #tpu.memory_space<vmem>>, vector<128x128xf32>
    %cst_15 = arith.constant dense<0.000000e+00> : vector<32x128xf32>
    %17 = tpu.matmul %15, %16, %cst_15 {dimension_numbers = #tpu.dot_dimension_numbers<[1], [0], [0], [1], [0, 0, 1, 1], [], []>} : vector<32x128xf32>, vector<128x128xf32>, vector<32x128xf32> -> vector<32x128xf32>
    %c0_16 = arith.constant 0 : index
    %c0_17 = arith.constant 0 : index
    %18 = vector.load %arg7[%c0_16, %c0_17] : memref<1x128xf32, #tpu.memory_space<vmem>>, vector<1x128xf32>
    %19 = vector.broadcast %18 : vector<1x128xf32> to vector<32x128xf32>
    %20 = arith.addf %17, %19 : vector<32x128xf32>
    %cst_18 = arith.constant 0.000000e+00 : f32
    %21 = vector.broadcast %cst_18 : f32 to vector<32x128xf32>
    %22 = arith.maximumf %20, %21 : vector<32x128xf32>
    %c0_19 = arith.constant 0 : index
    %c0_20 = arith.constant 0 : index
    %23 = vector.load %arg8[%c0_19, %c0_20] : memref<128x256xf32, #tpu.memory_space<vmem>>, vector<128x256xf32>
    %cst_21 = arith.constant dense<0.000000e+00> : vector<32x256xf32>
    %24 = tpu.matmul %22, %23, %cst_21 {dimension_numbers = #tpu.dot_dimension_numbers<[1], [0], [0], [1], [0, 0, 1, 1], [], []>} : vector<32x128xf32>, vector<128x256xf32>, vector<32x256xf32> -> vector<32x256xf32>
    %c0_22 = arith.constant 0 : index
    %c0_23 = arith.constant 0 : index
    %25 = vector.load %arg9[%c0_22, %c0_23] : memref<1x256xf32, #tpu.memory_space<vmem>>, vector<1x256xf32>
    %26 = vector.broadcast %25 : vector<1x256xf32> to vector<32x256xf32>
    %27 = arith.addf %24, %26 : vector<32x256xf32>
    %cst_24 = arith.constant 0.000000e+00 : f32
    %28 = vector.broadcast %cst_24 : f32 to vector<32x256xf32>
    %29 = arith.maximumf %27, %28 : vector<32x256xf32>
    %c0_25 = arith.constant 0 : index
    %c0_26 = arith.constant 0 : index
    %30 = vector.load %arg10[%c0_25, %c0_26] : memref<256x128xf32, #tpu.memory_space<vmem>>, vector<256x128xf32>
    %cst_27 = arith.constant dense<0.000000e+00> : vector<32x128xf32>
    %31 = tpu.matmul %29, %30, %cst_27 {dimension_numbers = #tpu.dot_dimension_numbers<[1], [0], [0], [1], [0, 0, 1, 1], [], []>} : vector<32x256xf32>, vector<256x128xf32>, vector<32x128xf32> -> vector<32x128xf32>
    %c0_28 = arith.constant 0 : index
    %c0_29 = arith.constant 0 : index
    %32 = vector.load %arg11[%c0_28, %c0_29] : memref<1x128xf32, #tpu.memory_space<vmem>>, vector<1x128xf32>
    %33 = vector.broadcast %32 : vector<1x128xf32> to vector<32x128xf32>
    %34 = arith.addf %31, %33 : vector<32x128xf32>
    %cst_30 = arith.constant 0.000000e+00 : f32
    %35 = vector.broadcast %cst_30 : f32 to vector<32x128xf32>
    %36 = arith.maximumf %34, %35 : vector<32x128xf32>
    %37 = vector.shape_cast %36 : vector<32x128xf32> to vector<2x16x128xf32>
    %cst_31 = arith.constant dense<0xFF800000> : vector<2x128xf32>
    %38 = vector.multi_reduction <maximumf>, %37, %cst_31 [1] : vector<2x16x128xf32> to vector<2x128xf32>
    %c0_32 = arith.constant 0 : index
    %c0_33 = arith.constant 0 : index
    %39 = vector.load %arg12[%c0_32, %c0_33] : memref<128x256xf32, #tpu.memory_space<vmem>>, vector<128x256xf32>
    %cst_34 = arith.constant dense<0.000000e+00> : vector<2x256xf32>
    %40 = tpu.matmul %38, %39, %cst_34 {dimension_numbers = #tpu.dot_dimension_numbers<[1], [0], [0], [1], [0, 0, 1, 1], [], []>} : vector<2x128xf32>, vector<128x256xf32>, vector<2x256xf32> -> vector<2x256xf32>
    %c0_35 = arith.constant 0 : index
    %c0_36 = arith.constant 0 : index
    %41 = vector.load %arg13[%c0_35, %c0_36] : memref<1x256xf32, #tpu.memory_space<vmem>>, vector<1x256xf32>
    %42 = vector.broadcast %41 : vector<1x256xf32> to vector<2x256xf32>
    %43 = arith.addf %40, %42 : vector<2x256xf32>
    %cst_37 = arith.constant 0.000000e+00 : f32
    %44 = vector.broadcast %cst_37 : f32 to vector<2x256xf32>
    %45 = arith.maximumf %43, %44 : vector<2x256xf32>
    %c0_38 = arith.constant 0 : index
    %c0_39 = arith.constant 0 : index
    %46 = vector.load %arg14[%c0_38, %c0_39] : memref<256x256xf32, #tpu.memory_space<vmem>>, vector<256x256xf32>
    %cst_40 = arith.constant dense<0.000000e+00> : vector<2x256xf32>
    %47 = tpu.matmul %45, %46, %cst_40 {dimension_numbers = #tpu.dot_dimension_numbers<[1], [0], [0], [1], [0, 0, 1, 1], [], []>} : vector<2x256xf32>, vector<256x256xf32>, vector<2x256xf32> -> vector<2x256xf32>
    %c0_41 = arith.constant 0 : index
    %c0_42 = arith.constant 0 : index
    %48 = vector.load %arg15[%c0_41, %c0_42] : memref<1x256xf32, #tpu.memory_space<vmem>>, vector<1x256xf32>
    %49 = vector.broadcast %48 : vector<1x256xf32> to vector<2x256xf32>
    %50 = arith.addf %47, %49 : vector<2x256xf32>
    %cst_43 = arith.constant 0.000000e+00 : f32
    %51 = vector.broadcast %cst_43 : f32 to vector<2x256xf32>
    %52 = arith.maximumf %50, %51 : vector<2x256xf32>
    %c0_44 = arith.constant 0 : index
    %c0_45 = arith.constant 0 : index
    %53 = vector.load %arg16[%c0_44, %c0_45] : memref<256x6144xf32, #tpu.memory_space<vmem>>, vector<256x6144xf32>
    %cst_46 = arith.constant dense<0.000000e+00> : vector<2x6144xf32>
    %54 = tpu.matmul %52, %53, %cst_46 {dimension_numbers = #tpu.dot_dimension_numbers<[1], [0], [0], [1], [0, 0, 1, 1], [], []>} : vector<2x256xf32>, vector<256x6144xf32>, vector<2x6144xf32> -> vector<2x6144xf32>
    %c0_47 = arith.constant 0 : index
    %c0_48 = arith.constant 0 : index
    %55 = vector.load %arg17[%c0_47, %c0_48] : memref<1x6144xf32, #tpu.memory_space<vmem>>, vector<1x6144xf32>
    %56 = vector.broadcast %55 : vector<1x6144xf32> to vector<2x6144xf32>
    %57 = arith.addf %54, %56 : vector<2x6144xf32>
    %cst_49 = arith.constant 0.000000e+00 : f32
    %58 = vector.broadcast %cst_49 : f32 to vector<2x6144xf32>
    %59 = arith.maximumf %57, %58 : vector<2x6144xf32>
    %c0_50 = arith.constant 0 : index
    %c0_51 = arith.constant 0 : index
    %60 = vector.load %arg18[%c0_50, %c0_51] : memref<2x6144xf32, #tpu.memory_space<vmem>>, vector<2x6144xf32>
    tpu.vector_store %arg18[%c0_50, %c0_51], %59 {strides = array<i32>} : memref<2x6144xf32, #tpu.memory_space<vmem>>, vector<2x6144xf32>,
    return
  }
  func.func @transform_0(%arg0: i32) -> (i32, i32, i32) {
    %c0_i32 = arith.constant 0 : i32
    %c0_i32_0 = arith.constant 0 : i32
    %c0_i32_1 = arith.constant 0 : i32
    return %arg0, %c0_i32, %c0_i32_0 : i32, i32, i32
  }
  func.func @transform_1(%arg0: i32) -> (i32, i32) {
    %c0_i32 = arith.constant 0 : i32
    %c0_i32_0 = arith.constant 0 : i32
    %c0_i32_1 = arith.constant 0 : i32
    return %c0_i32, %c0_i32_0 : i32, i32
  }
  func.func @transform_2(%arg0: i32) -> (i32, i32) {
    %c0_i32 = arith.constant 0 : i32
    %c0_i32_0 = arith.constant 0 : i32
    %c0_i32_1 = arith.constant 0 : i32
    return %c0_i32, %c0_i32_0 : i32, i32
  }
  func.func @transform_3(%arg0: i32) -> (i32, i32) {
    %c0_i32 = arith.constant 0 : i32
    %c0_i32_0 = arith.constant 0 : i32
    %c0_i32_1 = arith.constant 0 : i32
    return %c0_i32, %c0_i32_0 : i32, i32
  }
  func.func @transform_4(%arg0: i32) -> (i32, i32) {
    %c0_i32 = arith.constant 0 : i32
    %c0_i32_0 = arith.constant 0 : i32
    %c0_i32_1 = arith.constant 0 : i32
    return %c0_i32, %c0_i32_0 : i32, i32
  }
  func.func @transform_5(%arg0: i32) -> (i32, i32) {
    %c0_i32 = arith.constant 0 : i32
    %c0_i32_0 = arith.constant 0 : i32
    %c0_i32_1 = arith.constant 0 : i32
    return %c0_i32, %c0_i32_0 : i32, i32
  }
  func.func @transform_6(%arg0: i32) -> (i32, i32) {
    %c0_i32 = arith.constant 0 : i32
    %c0_i32_0 = arith.constant 0 : i32
    %c0_i32_1 = arith.constant 0 : i32
    return %c0_i32, %c0_i32_0 : i32, i32
  }
  func.func @transform_7(%arg0: i32) -> (i32, i32) {
    %c0_i32 = arith.constant 0 : i32
    %c0_i32_0 = arith.constant 0 : i32
    %c0_i32_1 = arith.constant 0 : i32
    return %c0_i32, %c0_i32_0 : i32, i32
  }
  func.func @transform_8(%arg0: i32) -> (i32, i32) {
    %c0_i32 = arith.constant 0 : i32
    %c0_i32_0 = arith.constant 0 : i32
    %c0_i32_1 = arith.constant 0 : i32
    return %c0_i32, %c0_i32_0 : i32, i32
  }
  func.func @transform_9(%arg0: i32) -> (i32, i32) {
    %c0_i32 = arith.constant 0 : i32
    %c0_i32_0 = arith.constant 0 : i32
    %c0_i32_1 = arith.constant 0 : i32
    return %c0_i32, %c0_i32_0 : i32, i32
  }
  func.func @transform_10(%arg0: i32) -> (i32, i32) {
    %c0_i32 = arith.constant 0 : i32
    %c0_i32_0 = arith.constant 0 : i32
    %c0_i32_1 = arith.constant 0 : i32
    return %c0_i32, %c0_i32_0 : i32, i32
  }
  func.func @transform_11(%arg0: i32) -> (i32, i32) {
    %c0_i32 = arith.constant 0 : i32
    %c0_i32_0 = arith.constant 0 : i32
    %c0_i32_1 = arith.constant 0 : i32
    return %c0_i32, %c0_i32_0 : i32, i32
  }
  func.func @transform_12(%arg0: i32) -> (i32, i32) {
    %c0_i32 = arith.constant 0 : i32
    %c0_i32_0 = arith.constant 0 : i32
    %c0_i32_1 = arith.constant 0 : i32
    return %c0_i32, %c0_i32_0 : i32, i32
  }
  func.func @transform_13(%arg0: i32) -> (i32, i32) {
    %c0_i32 = arith.constant 0 : i32
    %c0_i32_0 = arith.constant 0 : i32
    %c0_i32_1 = arith.constant 0 : i32
    return %c0_i32, %c0_i32_0 : i32, i32
  }
  func.func @transform_14(%arg0: i32) -> (i32, i32) {
    %c0_i32 = arith.constant 0 : i32
    %c0_i32_0 = arith.constant 0 : i32
    %c0_i32_1 = arith.constant 0 : i32
    return %c0_i32, %c0_i32_0 : i32, i32
  }
  func.func @transform_15(%arg0: i32) -> (i32, i32) {
    %c0_i32 = arith.constant 0 : i32
    %c0_i32_0 = arith.constant 0 : i32
    %c0_i32_1 = arith.constant 0 : i32
    return %c0_i32, %c0_i32_0 : i32, i32
  }
  func.func @transform_16(%arg0: i32) -> (i32, i32) {
    %c0_i32 = arith.constant 0 : i32
    %c0_i32_0 = arith.constant 0 : i32
    %c0_i32_1 = arith.constant 0 : i32
    return %c0_i32, %c0_i32_0 : i32, i32
  }
  func.func @transform_17(%arg0: i32) -> (i32, i32) {
    %c0_i32 = arith.constant 0 : i32
    %c0_i32_0 = arith.constant 0 : i32
    return %arg0, %c0_i32 : i32, i32
  }
}

</mosaic_0001>

<llo_original>
// kernel: tpu_custom_call.1
$region0: #{tpu_custom_call.1}
  #allocation0 [shape = 'u32[]', space=smem, size = 0x4, offset = 0x4, fixed_abs, tag = 'smem constant byte address 0x4 - core index']
  #allocation1 [shape = 'u32[72,128]{1,0:T(1,128)}', space=vmem, size = 0x9000, scoped, tag = 'internal scratch']
  %s0 = inlined_call_operand.hbm [shape: f32[2,16,256], index: 0, kind: input, shape index: {}]
  %s1 = inlined_call_operand.vmem [shape: f32[256,64], index: 1, kind: input, shape index: {}]
  %s2 = inlined_call_operand.hbm [shape: f32[1,64], index: 2, kind: input, shape index: {}]
  %s3 = inlined_call_operand.hbm [shape: f32[64,128], index: 3, kind: input, shape index: {}]
  %s4 = inlined_call_operand.hbm [shape: f32[1,128], index: 4, kind: input, shape index: {}]
  %s5 = inlined_call_operand.hbm [shape: f32[128,128], index: 5, kind: input, shape index: {}]
  %s6 = inlined_call_operand.hbm [shape: f32[1,128], index: 6, kind: input, shape index: {}]
  %s7 = inlined_call_operand.hbm [shape: f32[128,256], index: 7, kind: input, shape index: {}]
  %s8 = inlined_call_operand.hbm [shape: f32[1,256], index: 8, kind: input, shape index: {}]
  %s9 = inlined_call_operand.hbm [shape: f32[256,128], index: 9, kind: input, shape index: {}]
  %s10 = inlined_call_operand.hbm [shape: f32[1,128], index: 10, kind: input, shape index: {}]
  %s11 = inlined_call_operand.hbm [shape: f32[128,256], index: 11, kind: input, shape index: {}]
  %s12 = inlined_call_operand.hbm [shape: f32[1,256], index: 12, kind: input, shape index: {}]
  %s13 = inlined_call_operand.hbm [shape: f32[256,256], index: 13, kind: input, shape index: {}]
  %s14 = inlined_call_operand.hbm [shape: f32[1,256], index: 14, kind: input, shape index: {}]
  %s15 = inlined_call_operand.hbm [shape: f32[256,6144], index: 15, kind: input, shape index: {}]
  %s16 = inlined_call_operand.hbm [shape: f32[1,6144], index: 16, kind: input, shape index: {}]
  %s17 = inlined_call_operand.hbm [shape: f32[2,6144], index: 17, kind: output, shape index: {}]
  %s18 = sld [smem:[#allocation0]]
  $region142: #{tpu_custom_call.1} parent=0
    _
  %s20 = ssub.s32 1, %s18
  %s21 = scalar_select 0, %s20, %s18
  $region1: #{tpu_custom_call.1} parent=0
    #allocation2 [shape = 'u8[32768]{0}', space=vmem, size = 0x8000, scoped, tag = 'input window, operand 0, single buffered']
    #allocation3 [shape = 's32[1]{0}', space=sflag, size = 0x4, scoped, tag = 'scoped memory for tpu_custom_call.1']
    #allocation4 [shape = 's32[1]{0}', space=sflag, size = 0x4, scoped, tag = 'scoped memory for tpu_custom_call.1']
    #allocation5 [shape = 'u8[512]{0}', space=vmem, size = 0x400, scoped, tag = 'input window, operand 2, single buffered']
    #allocation6 [shape = 's32[1]{0}', space=sflag, size = 0x4, scoped, tag = 'scoped memory for tpu_custom_call.1']
    #allocation7 [shape = 'u8[32768]{0}', space=vmem, size = 0x8000, scoped, tag = 'input window, operand 3, single buffered']
    #allocation8 [shape = 'u8[512]{0}', space=vmem, size = 0x400, scoped, tag = 'input window, operand 4, single buffered']
    #allocation9 [shape = 's32[1]{0}', space=sflag, size = 0x4, scoped, tag = 'scoped memory for tpu_custom_call.1']
    #allocation10 [shape = 'u8[65536]{0}', space=vmem, size = 0x10000, scoped, tag = 'input window, operand 5, single buffered']
    #allocation11 [shape = 'u8[512]{0}', space=vmem, size = 0x400, scoped, tag = 'input window, operand 6, single buffered']
    #allocation12 [shape = 's32[1]{0}', space=sflag, size = 0x4, scoped, tag = 'scoped memory for tpu_custom_call.1']
    #allocation13 [shape = 'u8[131072]{0}', space=vmem, size = 0x20000, scoped, tag = 'input window, operand 7, single buffered']
    #allocation14 [shape = 'u8[1024]{0}', space=vmem, size = 0x400, scoped, tag = 'input window, operand 8, single buffered']
    #allocation15 [shape = 's32[1]{0}', space=sflag, size = 0x4, scoped, tag = 'scoped memory for tpu_custom_call.1']
    #allocation16 [shape = 'u8[131072]{0}', space=vmem, size = 0x20000, scoped, tag = 'input window, operand 9, single buffered']
    #allocation17 [shape = 'u8[512]{0}', space=vmem, size = 0x400, scoped, tag = 'input window, operand 10, single buffered']
    #allocation18 [shape = 's32[1]{0}', space=sflag, size = 0x4, scoped, tag = 'scoped memory for tpu_custom_call.1']
    #allocation19 [shape = 'u8[131072]{0}', space=vmem, size = 0x20000, scoped, tag = 'input window, operand 11, single buffered']
    #allocation20 [shape = 'u8[1024]{0}', space=vmem, size = 0x400, scoped, tag = 'input window, operand 12, single buffered']
    #allocation21 [shape = 's32[1]{0}', space=sflag, size = 0x4, scoped, tag = 'scoped memory for tpu_custom_call.1']
    #allocation22 [shape = 'u8[262144]{0}', space=vmem, size = 0x40000, scoped, tag = 'input window, operand 13, single buffered']
    #allocation23 [shape = 'u8[1024]{0}', space=vmem, size = 0x400, scoped, tag = 'input window, operand 14, single buffered']
    #allocation24 [shape = 's32[1]{0}', space=sflag, size = 0x4, scoped, tag = 'scoped memory for tpu_custom_call.1']
    #allocation25 [shape = 'u8[6291456]{0}', space=vmem, size = 0x600000, scoped, tag = 'input window, operand 15, single buffered']
    #allocation26 [shape = 'u8[24576]{0}', space=vmem, size = 0x6000, scoped, tag = 'input window, operand 16, single buffered']
    #allocation27 [shape = 's32[1]{0}', space=sflag, size = 0x4, scoped, tag = 'scoped memory for tpu_custom_call.1']
    #allocation28 [shape = 'u8[49152]{0}', space=vmem, size = 0xc000, scoped, tag = 'output window, operand 0, single buffered']
    %22 = vsyncpa [#allocation3], 0
    %23 = vsyncpa [#allocation6], 0
    %24 = vsyncpa [#allocation9], 0
    %25 = vsyncpa [#allocation12], 0
    %26 = vsyncpa [#allocation15], 0
    %27 = vsyncpa [#allocation18], 0
    %28 = vsyncpa [#allocation21], 0
    %29 = vsyncpa [#allocation24], 0
    %30 = vsyncpa [#allocation27], 0
    %31 = vsyncpa [#allocation4], 0
    // Predicated region
    $region2: #{tpu_custom_call.1} parent=1 // pred_check
      _
    $region3: #{tpu_custom_call.1} parent=1 // pred_check_branch
      %33 = sbr.rel (0) target = $region5
    $region4: #{tpu_custom_call.1} parent=1 // pred_region
      %35 = vsyncadd [#allocation3], 0
      %s36 = sshll.u32 %s0, 4
      %s37 = int_to_ptr.hbm [resolvable:$true] %s36
      %s38 = sshll.u32 [#allocation2], 4
      %s39 = int_to_ptr.vmem [resolvable:$true] %s38
      %44 = dma.hbm_to_vmem [thread:$0]  %s37, 1024, %s39, [#allocation3], 256, 256, 16
    $region5: #{tpu_custom_call.1} parent=1 // pred_fallthru
      _
    // Predicated region
    $region6: #{tpu_custom_call.1} parent=1 // pred_check
      _
    $region7: #{tpu_custom_call.1} parent=1 // pred_check_branch
      %46 = sbr.rel (0) target = $region9
    $region8: #{tpu_custom_call.1} parent=1 // pred_region
      _
    $region9: #{tpu_custom_call.1} parent=1 // pred_fallthru
      _
    // Predicated region
    $region10: #{tpu_custom_call.1} parent=1 // pred_check
      _
    $region11: #{tpu_custom_call.1} parent=1 // pred_check_branch
      %48 = sbr.rel (0) target = $region13
    $region12: #{tpu_custom_call.1} parent=1 // pred_region
      %50 = vsyncadd [#allocation6], 0
      %s52 = sshll.u32 %s2, 4
      %s53 = int_to_ptr.hbm [resolvable:$true] %s52
      %s54 = sshll.u32 [#allocation5], 4
      %s55 = int_to_ptr.vmem [resolvable:$true] %s54
      %57 = dma.hbm_to_vmem [thread:$0]  %s53, 16, %s55, [#allocation6]
    $region13: #{tpu_custom_call.1} parent=1 // pred_fallthru
      _
    // Predicated region
    $region14: #{tpu_custom_call.1} parent=1 // pred_check
      _
    $region15: #{tpu_custom_call.1} parent=1 // pred_check_branch
      %59 = sbr.rel (0) target = $region17
    $region16: #{tpu_custom_call.1} parent=1 // pred_region
      %61 = vsyncadd [#allocation6], 0
      %s62 = sshll.u32 %s3, 4
      %s63 = int_to_ptr.hbm [resolvable:$true] %s62
      %s64 = sshll.u32 [#allocation7], 4
      %s65 = int_to_ptr.vmem [resolvable:$true] %s64
      %70 = dma.hbm_to_vmem [thread:$0]  %s63, 1024, %s65, [#allocation6], 128, 128, 8
    $region17: #{tpu_custom_call.1} parent=1 // pred_fallthru
      _
    // Predicated region
    $region18: #{tpu_custom_call.1} parent=1 // pred_check
      _
    $region19: #{tpu_custom_call.1} parent=1 // pred_check_branch
      %72 = sbr.rel (0) target = $region21
    $region20: #{tpu_custom_call.1} parent=1 // pred_region
      %74 = vsyncadd [#allocation9], 0
      %s76 = sshll.u32 %s4, 4
      %s77 = int_to_ptr.hbm [resolvable:$true] %s76
      %s78 = sshll.u32 [#allocation8], 4
      %s79 = int_to_ptr.vmem [resolvable:$true] %s78
      %81 = dma.hbm_to_vmem [thread:$0]  %s77, 16, %s79, [#allocation9]
    $region21: #{tpu_custom_call.1} parent=1 // pred_fallthru
      _
    // Predicated region
    $region22: #{tpu_custom_call.1} parent=1 // pred_check
      _
    $region23: #{tpu_custom_call.1} parent=1 // pred_check_branch
      %83 = sbr.rel (0) target = $region25
    $region24: #{tpu_custom_call.1} parent=1 // pred_region
      %85 = vsyncadd [#allocation9], 0
      %s86 = sshll.u32 %s5, 4
      %s87 = int_to_ptr.hbm [resolvable:$true] %s86
      %s88 = sshll.u32 [#allocation10], 4
      %s89 = int_to_ptr.vmem [resolvable:$true] %s88
      %94 = dma.hbm_to_vmem [thread:$0]  %s87, 2048, %s89, [#allocation9], 128, 128, 8
    $region25: #{tpu_custom_call.1} parent=1 // pred_fallthru
      _
    // Predicated region
    $region26: #{tpu_custom_call.1} parent=1 // pred_check
      _
    $region27: #{tpu_custom_call.1} parent=1 // pred_check_branch
      %96 = sbr.rel (0) target = $region29
    $region28: #{tpu_custom_call.1} parent=1 // pred_region
      %98 = vsyncadd [#allocation12], 0
      %s100 = sshll.u32 %s6, 4
      %s101 = int_to_ptr.hbm [resolvable:$true] %s100
      %s102 = sshll.u32 [#allocation11], 4
      %s103 = int_to_ptr.vmem [resolvable:$true] %s102
      %105 = dma.hbm_to_vmem [thread:$0]  %s101, 16, %s103, [#allocation12]
    $region29: #{tpu_custom_call.1} parent=1 // pred_fallthru
      _
    // Predicated region
    $region30: #{tpu_custom_call.1} parent=1 // pred_check
      _
    $region31: #{tpu_custom_call.1} parent=1 // pred_check_branch
      %107 = sbr.rel (0) target = $region33
    $region32: #{tpu_custom_call.1} parent=1 // pred_region
      %109 = vsyncadd [#allocation12], 0
      %s110 = sshll.u32 %s7, 4
      %s111 = int_to_ptr.hbm [resolvable:$true] %s110
      %s112 = sshll.u32 [#allocation13], 4
      %s113 = int_to_ptr.vmem [resolvable:$true] %s112
      %118 = dma.hbm_to_vmem [thread:$0]  %s111, 4096, %s113, [#allocation12], 256, 256, 16
    $region33: #{tpu_custom_call.1} parent=1 // pred_fallthru
      _
    // Predicated region
    $region34: #{tpu_custom_call.1} parent=1 // pred_check
      _
    $region35: #{tpu_custom_call.1} parent=1 // pred_check_branch
      %120 = sbr.rel (0) target = $region37
    $region36: #{tpu_custom_call.1} parent=1 // pred_region
      %122 = vsyncadd [#allocation15], 0
      %s124 = sshll.u32 %s8, 4
      %s125 = int_to_ptr.hbm [resolvable:$true] %s124
      %s126 = sshll.u32 [#allocation14], 4
      %s127 = int_to_ptr.vmem [resolvable:$true] %s126
      %129 = dma.hbm_to_vmem [thread:$0]  %s125, 32, %s127, [#allocation15]
    $region37: #{tpu_custom_call.1} parent=1 // pred_fallthru
      _
    // Predicated region
    $region38: #{tpu_custom_call.1} parent=1 // pred_check
      _
    $region39: #{tpu_custom_call.1} parent=1 // pred_check_branch
      %131 = sbr.rel (0) target = $region41
    $region40: #{tpu_custom_call.1} parent=1 // pred_region
      %133 = vsyncadd [#allocation15], 0
      %s134 = sshll.u32 %s9, 4
      %s135 = int_to_ptr.hbm [resolvable:$true] %s134
      %s136 = sshll.u32 [#allocation16], 4
      %s137 = int_to_ptr.vmem [resolvable:$true] %s136
      %142 = dma.hbm_to_vmem [thread:$0]  %s135, 4096, %s137, [#allocation15], 128, 128, 8
    $region41: #{tpu_custom_call.1} parent=1 // pred_fallthru
      _
    // Predicated region
    $region42: #{tpu_custom_call.1} parent=1 // pred_check
      _
    $region43: #{tpu_custom_call.1} parent=1 // pred_check_branch
      %144 = sbr.rel (0) target = $region45
    $region44: #{tpu_custom_call.1} parent=1 // pred_region
      %146 = vsyncadd [#allocation18], 0
      %s148 = sshll.u32 %s10, 4
      %s149 = int_to_ptr.hbm [resolvable:$true] %s148
      %s150 = sshll.u32 [#allocation17], 4
      %s151 = int_to_ptr.vmem [resolvable:$true] %s150
      %153 = dma.hbm_to_vmem [thread:$0]  %s149, 16, %s151, [#allocation18]
    $region45: #{tpu_custom_call.1} parent=1 // pred_fallthru
      _
    // Predicated region
    $region46: #{tpu_custom_call.1} parent=1 // pred_check
      _
    $region47: #{tpu_custom_call.1} parent=1 // pred_check_branch
      %155 = sbr.rel (0) target = $region49
    $region48: #{tpu_custom_call.1} parent=1 // pred_region
      %157 = vsyncadd [#allocation18], 0
      %s158 = sshll.u32 %s11, 4
      %s159 = int_to_ptr.hbm [resolvable:$true] %s158
      %s160 = sshll.u32 [#allocation19], 4
      %s161 = int_to_ptr.vmem [resolvable:$true] %s160
      %166 = dma.hbm_to_vmem [thread:$0]  %s159, 4096, %s161, [#allocation18], 256, 256, 16
    $region49: #{tpu_custom_call.1} parent=1 // pred_fallthru
      _
    // Predicated region
    $region50: #{tpu_custom_call.1} parent=1 // pred_check
      _
    $region51: #{tpu_custom_call.1} parent=1 // pred_check_branch
      %168 = sbr.rel (0) target = $region53
    $region52: #{tpu_custom_call.1} parent=1 // pred_region
      %170 = vsyncadd [#allocation21], 0
      %s172 = sshll.u32 %s12, 4
      %s173 = int_to_ptr.hbm [resolvable:$true] %s172
      %s174 = sshll.u32 [#allocation20], 4
      %s175 = int_to_ptr.vmem [resolvable:$true] %s174
      %177 = dma.hbm_to_vmem [thread:$0]  %s173, 32, %s175, [#allocation21]
    $region53: #{tpu_custom_call.1} parent=1 // pred_fallthru
      _
    // Predicated region
    $region54: #{tpu_custom_call.1} parent=1 // pred_check
      _
    $region55: #{tpu_custom_call.1} parent=1 // pred_check_branch
      %179 = sbr.rel (0) target = $region57
    $region56: #{tpu_custom_call.1} parent=1 // pred_region
      %181 = vsyncadd [#allocation21], 0
      %s182 = sshll.u32 %s13, 4
      %s183 = int_to_ptr.hbm [resolvable:$true] %s182
      %s184 = sshll.u32 [#allocation22], 4
      %s185 = int_to_ptr.vmem [resolvable:$true] %s184
      %190 = dma.hbm_to_vmem [thread:$0]  %s183, 8192, %s185, [#allocation21], 256, 256, 16
    $region57: #{tpu_custom_call.1} parent=1 // pred_fallthru
      _
    // Predicated region
    $region58: #{tpu_custom_call.1} parent=1 // pred_check
      _
    $region59: #{tpu_custom_call.1} parent=1 // pred_check_branch
      %192 = sbr.rel (0) target = $region61
    $region60: #{tpu_custom_call.1} parent=1 // pred_region
      %194 = vsyncadd [#allocation24], 0
      %s196 = sshll.u32 %s14, 4
      %s197 = int_to_ptr.hbm [resolvable:$true] %s196
      %s198 = sshll.u32 [#allocation23], 4
      %s199 = int_to_ptr.vmem [resolvable:$true] %s198
      %201 = dma.hbm_to_vmem [thread:$0]  %s197, 32, %s199, [#allocation24]
    $region61: #{tpu_custom_call.1} parent=1 // pred_fallthru
      _
    // Predicated region
    $region62: #{tpu_custom_call.1} parent=1 // pred_check
      _
    $region63: #{tpu_custom_call.1} parent=1 // pred_check_branch
      %203 = sbr.rel (0) target = $region65
    $region64: #{tpu_custom_call.1} parent=1 // pred_region
      %205 = vsyncadd [#allocation24], 0
      %s206 = sshll.u32 %s15, 4
      %s207 = int_to_ptr.hbm [resolvable:$true] %s206
      %s208 = sshll.u32 [#allocation25], 4
      %s209 = int_to_ptr.vmem [resolvable:$true] %s208
      %214 = dma.hbm_to_vmem [thread:$0]  %s207, 196608, %s209, [#allocation24], 6144, 6144, 384
    $region65: #{tpu_custom_call.1} parent=1 // pred_fallthru
      _
    // Predicated region
    $region66: #{tpu_custom_call.1} parent=1 // pred_check
      _
    $region67: #{tpu_custom_call.1} parent=1 // pred_check_branch
      %216 = sbr.rel (0) target = $region69
    $region68: #{tpu_custom_call.1} parent=1 // pred_region
      %218 = vsyncadd [#allocation27], 0
      %s220 = sshll.u32 %s16, 4
      %s221 = int_to_ptr.hbm [resolvable:$true] %s220
      %s222 = sshll.u32 [#allocation26], 4
      %s223 = int_to_ptr.vmem [resolvable:$true] %s222
      %225 = dma.hbm_to_vmem [thread:$0]  %s221, 768, %s223, [#allocation27]
    $region69: #{tpu_custom_call.1} parent=1 // pred_fallthru
      _
    // Predicated region
    $region70: #{tpu_custom_call.1} parent=1 // pred_check
      _
    $region71: #{tpu_custom_call.1} parent=1 // pred_check_branch
      %227 = sbr.rel (0) target = $region73
    $region72: #{tpu_custom_call.1} parent=1 // pred_region
      %229 = dma.done [#allocation3], 1024
    $region73: #{tpu_custom_call.1} parent=1 // pred_fallthru
      _
    // Predicated region
    $region74: #{tpu_custom_call.1} parent=1 // pred_check
      _
    $region75: #{tpu_custom_call.1} parent=1 // pred_check_branch
      %231 = sbr.rel (0) target = $region77
    $region76: #{tpu_custom_call.1} parent=1 // pred_region
      %233 = dma.done [#allocation6], 16
    $region77: #{tpu_custom_call.1} parent=1 // pred_fallthru
      _
    // Predicated region
    $region78: #{tpu_custom_call.1} parent=1 // pred_check
      _
    $region79: #{tpu_custom_call.1} parent=1 // pred_check_branch
      %235 = sbr.rel (0) target = $region81
    $region80: #{tpu_custom_call.1} parent=1 // pred_region
      %237 = dma.done [#allocation6], 1024
    $region81: #{tpu_custom_call.1} parent=1 // pred_fallthru
      _
    // Predicated region
    $region82: #{tpu_custom_call.1} parent=1 // pred_check
      _
    $region83: #{tpu_custom_call.1} parent=1 // pred_check_branch
      %239 = sbr.rel (0) target = $region85
    $region84: #{tpu_custom_call.1} parent=1 // pred_region
      %241 = dma.done [#allocation9], 16
    $region85: #{tpu_custom_call.1} parent=1 // pred_fallthru
      _
    // Predicated region
    $region86: #{tpu_custom_call.1} parent=1 // pred_check
      _
    $region87: #{tpu_custom_call.1} parent=1 // pred_check_branch
      %243 = sbr.rel (0) target = $region89
    $region88: #{tpu_custom_call.1} parent=1 // pred_region
      %245 = dma.done [#allocation9], 2048
    $region89: #{tpu_custom_call.1} parent=1 // pred_fallthru
      _
    // Predicated region
    $region90: #{tpu_custom_call.1} parent=1 // pred_check
      _
    $region91: #{tpu_custom_call.1} parent=1 // pred_check_branch
      %247 = sbr.rel (0) target = $region93
    $region92: #{tpu_custom_call.1} parent=1 // pred_region
      %249 = dma.done [#allocation12], 16
    $region93: #{tpu_custom_call.1} parent=1 // pred_fallthru
      _
    // Predicated region
    $region94: #{tpu_custom_call.1} parent=1 // pred_check
      _
    $region95: #{tpu_custom_call.1} parent=1 // pred_check_branch
      %251 = sbr.rel (0) target = $region97
    $region96: #{tpu_custom_call.1} parent=1 // pred_region
      %253 = dma.done [#allocation12], 4096
    $region97: #{tpu_custom_call.1} parent=1 // pred_fallthru
      _
    // Predicated region
    $region98: #{tpu_custom_call.1} parent=1 // pred_check
      _
    $region99: #{tpu_custom_call.1} parent=1 // pred_check_branch
      %255 = sbr.rel (0) target = $region101
    $region100: #{tpu_custom_call.1} parent=1 // pred_region
      %257 = dma.done [#allocation15], 32
    $region101: #{tpu_custom_call.1} parent=1 // pred_fallthru
      _
    // Predicated region
    $region102: #{tpu_custom_call.1} parent=1 // pred_check
      _
    $region103: #{tpu_custom_call.1} parent=1 // pred_check_branch
      %259 = sbr.rel (0) target = $region105
    $region104: #{tpu_custom_call.1} parent=1 // pred_region
      %261 = dma.done [#allocation15], 4096
    $region105: #{tpu_custom_call.1} parent=1 // pred_fallthru
      _
    // Predicated region
    $region106: #{tpu_custom_call.1} parent=1 // pred_check
      _
    $region107: #{tpu_custom_call.1} parent=1 // pred_check_branch
      %263 = sbr.rel (0) target = $region109
    $region108: #{tpu_custom_call.1} parent=1 // pred_region
      %265 = dma.done [#allocation18], 16
    $region109: #{tpu_custom_call.1} parent=1 // pred_fallthru
      _
    // Predicated region
    $region110: #{tpu_custom_call.1} parent=1 // pred_check
      _
    $region111: #{tpu_custom_call.1} parent=1 // pred_check_branch
      %267 = sbr.rel (0) target = $region113
    $region112: #{tpu_custom_call.1} parent=1 // pred_region
      %269 = dma.done [#allocation18], 4096
    $region113: #{tpu_custom_call.1} parent=1 // pred_fallthru
      _
    // Predicated region
    $region114: #{tpu_custom_call.1} parent=1 // pred_check
      _
    $region115: #{tpu_custom_call.1} parent=1 // pred_check_branch
      %271 = sbr.rel (0) target = $region117
    $region116: #{tpu_custom_call.1} parent=1 // pred_region
      %273 = dma.done [#allocation21], 32
    $region117: #{tpu_custom_call.1} parent=1 // pred_fallthru
      _
    // Predicated region
    $region118: #{tpu_custom_call.1} parent=1 // pred_check
      _
    $region119: #{tpu_custom_call.1} parent=1 // pred_check_branch
      %275 = sbr.rel (0) target = $region121
    $region120: #{tpu_custom_call.1} parent=1 // pred_region
      %277 = dma.done [#allocation21], 8192
    $region121: #{tpu_custom_call.1} parent=1 // pred_fallthru
      _
    // Predicated region
    $region122: #{tpu_custom_call.1} parent=1 // pred_check
      _
    $region123: #{tpu_custom_call.1} parent=1 // pred_check_branch
      %279 = sbr.rel (0) target = $region125
    $region124: #{tpu_custom_call.1} parent=1 // pred_region
      %281 = dma.done [#allocation24], 32
    $region125: #{tpu_custom_call.1} parent=1 // pred_fallthru
      _
    // Predicated region
    $region126: #{tpu_custom_call.1} parent=1 // pred_check
      _
    $region127: #{tpu_custom_call.1} parent=1 // pred_check_branch
      %283 = sbr.rel (0) target = $region129
    $region128: #{tpu_custom_call.1} parent=1 // pred_region
      %285 = dma.done [#allocation24], 196608
    $region129: #{tpu_custom_call.1} parent=1 // pred_fallthru
      _
    // Predicated region
    $region130: #{tpu_custom_call.1} parent=1 // pred_check
      _
    $region131: #{tpu_custom_call.1} parent=1 // pred_check_branch
      %287 = sbr.rel (0) target = $region133
    $region132: #{tpu_custom_call.1} parent=1 // pred_region
      %289 = dma.done [#allocation27], 768
    $region133: #{tpu_custom_call.1} parent=1 // pred_fallthru
      _
    %v290 = vld [vmem:[#allocation2] sm:$0xff]
    %v291 = vld [vmem:[#allocation2 + $0x8] sm:$0xff]
    %v292 = vld [vmem:[#allocation2 + $0x10] sm:$0xff]
    %v293 = vld [vmem:[#allocation2 + $0x18] sm:$0xff]
    %v294 = vld [vmem:[#allocation2 + $0x20] sm:$0xff]
    %v295 = vld [vmem:[#allocation2 + $0x28] sm:$0xff]
    %v296 = vld [vmem:[#allocation2 + $0x30] sm:$0xff]
    %v297 = vld [vmem:[#allocation2 + $0x38] sm:$0xff]
    %v298 = vld [vmem:[%s1] sm:$0xff]
    %v299 = vld [vmem:[%s1 + $0x8] sm:$0xff]
    %v300 = vld [vmem:[%s1 + $0x10] sm:$0xff]
    %v301 = vld [vmem:[%s1 + $0x18] sm:$0xff]
    %v302 = vld [vmem:[%s1 + $0x20] sm:$0xff]
    %v303 = vld [vmem:[%s1 + $0x28] sm:$0xff]
    %v304 = vld [vmem:[%s1 + $0x30] sm:$0xff]
    %v305 = vld [vmem:[%s1 + $0x38] sm:$0xff]
    %v306 = vld [vmem:[%s1 + $0x40] sm:$0xff]
    %v307 = vld [vmem:[%s1 + $0x48] sm:$0xff]
    %v308 = vld [vmem:[%s1 + $0x50] sm:$0xff]
    %v309 = vld [vmem:[%s1 + $0x58] sm:$0xff]
    %v310 = vld [vmem:[%s1 + $0x60] sm:$0xff]
    %v311 = vld [vmem:[%s1 + $0x68] sm:$0xff]
    %v312 = vld [vmem:[%s1 + $0x70] sm:$0xff]
    %v313 = vld [vmem:[%s1 + $0x78] sm:$0xff]
    %v314 = vld [vmem:[%s1 + $0x80] sm:$0xff]
    %v315 = vld [vmem:[%s1 + $0x88] sm:$0xff]
    %v316 = vld [vmem:[%s1 + $0x90] sm:$0xff]
    %v317 = vld [vmem:[%s1 + $0x98] sm:$0xff]
    %v318 = vld [vmem:[%s1 + $0xa0] sm:$0xff]
    %v319 = vld [vmem:[%s1 + $0xa8] sm:$0xff]
    %v320 = vld [vmem:[%s1 + $0xb0] sm:$0xff]
    %v321 = vld [vmem:[%s1 + $0xb8] sm:$0xff]
    %v322 = vld [vmem:[%s1 + $0xc0] sm:$0xff]
    %v323 = vld [vmem:[%s1 + $0xc8] sm:$0xff]
    %v324 = vld [vmem:[%s1 + $0xd0] sm:$0xff]
    %v325 = vld [vmem:[%s1 + $0xd8] sm:$0xff]
    %v326 = vld [vmem:[%s1 + $0xe0] sm:$0xff]
    %v327 = vld [vmem:[%s1 + $0xe8] sm:$0xff]
    %v328 = vld [vmem:[%s1 + $0xf0] sm:$0xff]
    %v329 = vld [vmem:[%s1 + $0xf8] sm:$0xff]
    %v330 = vld [vmem:[#allocation5] sm:$0x1]
    %v332 = vperm.slane %v330, 0
    %334 = vmatpush.msra.mxu0 %v313
    %335 = vmatpush.msra.mxu0 %v312
    %336 = vmatpush.msra.mxu0 %v311
    %337 = vmatpush.msra.mxu0 %v310
    %338 = vmatpush.msra.mxu0 %v309
    %339 = vmatpush.msra.mxu0 %v308
    %340 = vmatpush.msra.mxu0 %v307
    %341 = vmatpush.msra.mxu0 %v306
    %342 = vmatpush.msra.mxu0 %v305
    %343 = vmatpush.msra.mxu0 %v304
    %344 = vmatpush.msra.mxu0 %v303
    %345 = vmatpush.msra.mxu0 %v302
    %346 = vmatpush.msra.mxu0 %v301
    %347 = vmatpush.msra.mxu0 %v300
    %348 = vmatpush.msra.mxu0 %v299
    %349 = vmatpush.msra.mxu0 %v298
    %350 = vmatmul.f32.gmra.mxu0 %v290
    %v351 = vpop.f32.mrf.mxu0
    %v352 = vadd.f32 %v332, %v351
    %353 = vmatmul.f32.gmra.mxu0 %v292
    %v354 = vpop.f32.mrf.mxu0
    %v355 = vadd.f32 %v332, %v354
    %356 = vmatmul.f32.gmra.mxu0 %v294
    %v357 = vpop.f32.mrf.mxu0
    %v358 = vadd.f32 %v332, %v357
    %359 = vmatmul.f32.gmra.mxu0 %v296
    %v360 = vpop.f32.mrf.mxu0
    %v361 = vadd.f32 %v332, %v360
    %362 = vdwg.mxu0
    %363 = vmatpush.msra.mxu0 %v329
    %364 = vmatpush.msra.mxu0 %v328
    %365 = vmatpush.msra.mxu0 %v327
    %366 = vmatpush.msra.mxu0 %v326
    %367 = vmatpush.msra.mxu0 %v325
    %368 = vmatpush.msra.mxu0 %v324
    %369 = vmatpush.msra.mxu0 %v323
    %370 = vmatpush.msra.mxu0 %v322
    %371 = vmatpush.msra.mxu0 %v321
    %372 = vmatpush.msra.mxu0 %v320
    %373 = vmatpush.msra.mxu0 %v319
    %374 = vmatpush.msra.mxu0 %v318
    %375 = vmatpush.msra.mxu0 %v317
    %376 = vmatpush.msra.mxu0 %v316
    %377 = vmatpush.msra.mxu0 %v315
    %378 = vmatpush.msra.mxu0 %v314
    %379 = vmatmul.f32.gmra.mxu0 %v291
    %v380 = vpop.f32.mrf.mxu0
    %v381 = vadd.f32 %v352, %v380
    %382 = vmatmul.f32.gmra.mxu0 %v293
    %v383 = vpop.f32.mrf.mxu0
    %v384 = vadd.f32 %v355, %v383
    %385 = vmatmul.f32.gmra.mxu0 %v295
    %v386 = vpop.f32.mrf.mxu0
    %v387 = vadd.f32 %v358, %v386
    %388 = vmatmul.f32.gmra.mxu0 %v297
    %v389 = vpop.f32.mrf.mxu0
    %v390 = vadd.f32 %v361, %v389
    %391 = vdwg.mxu0
    %v392 = vmax.f32 %v381, 0.0
    %v393 = vmax.f32 %v384, 0.0
    %v394 = vmax.f32 %v387, 0.0
    %v395 = vmax.f32 %v390, 0.0
    %v396 = vld [vmem:[#allocation7] sm:$0xff]
    %v397 = vld [vmem:[#allocation7 + $0x8] sm:$0xff]
    %v398 = vld [vmem:[#allocation7 + $0x10] sm:$0xff]
    %v399 = vld [vmem:[#allocation7 + $0x18] sm:$0xff]
    %v400 = vld [vmem:[#allocation7 + $0x20] sm:$0xff]
    %v401 = vld [vmem:[#allocation7 + $0x28] sm:$0xff]
    %v402 = vld [vmem:[#allocation7 + $0x30] sm:$0xff]
    %v403 = vld [vmem:[#allocation7 + $0x38] sm:$0xff]
    %v404 = vld [vmem:[#allocation8] sm:$0x1]
    %v406 = vperm.slane %v404, 0
    %vm408 = vcmask 523264
    %v410 = vsel %vm408, %v392, 0
    %v413 = vsel %vm408, %v393, 0
    %v416 = vsel %vm408, %v394, 0
    %v419 = vsel %vm408, %v395, 0
    %421 = vmatpush.msra.mxu0 0.0
    %422 = vmatpush.msra.mxu0 0.0
    %423 = vmatpush.msra.mxu0 0.0
    %424 = vmatpush.msra.mxu0 0.0
    %425 = vmatpush.msra.mxu0 0.0
    %426 = vmatpush.msra.mxu0 0.0
    %427 = vmatpush.msra.mxu0 0.0
    %428 = vmatpush.msra.mxu0 0.0
    %429 = vmatpush.msra.mxu0 %v403
    %430 = vmatpush.msra.mxu0 %v402
    %431 = vmatpush.msra.mxu0 %v401
    %432 = vmatpush.msra.mxu0 %v400
    %433 = vmatpush.msra.mxu0 %v399
    %434 = vmatpush.msra.mxu0 %v398
    %435 = vmatpush.msra.mxu0 %v397
    %436 = vmatpush.msra.mxu0 %v396
    %437 = vmatmul.f32.gmra.mxu0 %v410
    %v438 = vpop.f32.mrf.mxu0
    %v439 = vadd.f32 %v406, %v438
    %440 = vmatmul.f32.gmra.mxu0 %v413
    %v441 = vpop.f32.mrf.mxu0
    %v442 = vadd.f32 %v406, %v441
    %443 = vmatmul.f32.gmra.mxu0 %v416
    %v444 = vpop.f32.mrf.mxu0
    %v445 = vadd.f32 %v406, %v444
    %446 = vmatmul.f32.gmra.mxu0 %v419
    %v447 = vpop.f32.mrf.mxu0
    %v448 = vadd.f32 %v406, %v447
    %449 = vdwg.mxu0
    %v450 = vmax.f32 %v439, 0.0
    %v451 = vmax.f32 %v442, 0.0
    %v452 = vmax.f32 %v445, 0.0
    %v453 = vmax.f32 %v448, 0.0
    %v454 = vld [vmem:[#allocation10] sm:$0xff]
    %v455 = vld [vmem:[#allocation10 + $0x8] sm:$0xff]
    %v456 = vld [vmem:[#allocation10 + $0x10] sm:$0xff]
    %v457 = vld [vmem:[#allocation10 + $0x18] sm:$0xff]
    %v458 = vld [vmem:[#allocation10 + $0x20] sm:$0xff]
    %v459 = vld [vmem:[#allocation10 + $0x28] sm:$0xff]
    %v460 = vld [vmem:[#allocation10 + $0x30] sm:$0xff]
    %v461 = vld [vmem:[#allocation10 + $0x38] sm:$0xff]
    %v462 = vld [vmem:[#allocation10 + $0x40] sm:$0xff]
    %v463 = vld [vmem:[#allocation10 + $0x48] sm:$0xff]
    %v464 = vld [vmem:[#allocation10 + $0x50] sm:$0xff]
    %v465 = vld [vmem:[#allocation10 + $0x58] sm:$0xff]
    %v466 = vld [vmem:[#allocation10 + $0x60] sm:$0xff]
    %v467 = vld [vmem:[#allocation10 + $0x68] sm:$0xff]
    %v468 = vld [vmem:[#allocation10 + $0x70] sm:$0xff]
    %v469 = vld [vmem:[#allocation10 + $0x78] sm:$0xff]
    %v470 = vld [vmem:[#allocation11] sm:$0x1]
    %v472 = vperm.slane %v470, 0
    %474 = vmatpush.msra.mxu0 %v469
    %475 = vmatpush.msra.mxu0 %v468
    %476 = vmatpush.msra.mxu0 %v467
    %477 = vmatpush.msra.mxu0 %v466
    %478 = vmatpush.msra.mxu0 %v465
    %479 = vmatpush.msra.mxu0 %v464
    %480 = vmatpush.msra.mxu0 %v463
    %481 = vmatpush.msra.mxu0 %v462
    %482 = vmatpush.msra.mxu0 %v461
    %483 = vmatpush.msra.mxu0 %v460
    %484 = vmatpush.msra.mxu0 %v459
    %485 = vmatpush.msra.mxu0 %v458
    %486 = vmatpush.msra.mxu0 %v457
    %487 = vmatpush.msra.mxu0 %v456
    %488 = vmatpush.msra.mxu0 %v455
    %489 = vmatpush.msra.mxu0 %v454
    %490 = vmatmul.f32.gmra.mxu0 %v450
    %v491 = vpop.f32.mrf.mxu0
    %v492 = vadd.f32 %v472, %v491
    %493 = vmatmul.f32.gmra.mxu0 %v451
    %v494 = vpop.f32.mrf.mxu0
    %v495 = vadd.f32 %v472, %v494
    %496 = vmatmul.f32.gmra.mxu0 %v452
    %v497 = vpop.f32.mrf.mxu0
    %v498 = vadd.f32 %v472, %v497
    %499 = vmatmul.f32.gmra.mxu0 %v453
    %v500 = vpop.f32.mrf.mxu0
    %v501 = vadd.f32 %v472, %v500
    %502 = vdwg.mxu0
    %v503 = vmax.f32 %v492, 0.0
    %v504 = vmax.f32 %v495, 0.0
    %v505 = vmax.f32 %v498, 0.0
    %v506 = vmax.f32 %v501, 0.0
    %v507 = vld [vmem:[#allocation13] sm:$0xff]
    %v508 = vld [vmem:[#allocation13 + $0x8] sm:$0xff]
    %v509 = vld [vmem:[#allocation13 + $0x10] sm:$0xff]
    %v510 = vld [vmem:[#allocation13 + $0x18] sm:$0xff]
    %v511 = vld [vmem:[#allocation13 + $0x20] sm:$0xff]
    %v512 = vld [vmem:[#allocation13 + $0x28] sm:$0xff]
    %v513 = vld [vmem:[#allocation13 + $0x30] sm:$0xff]
    %v514 = vld [vmem:[#allocation13 + $0x38] sm:$0xff]
    %v515 = vld [vmem:[#allocation13 + $0x40] sm:$0xff]
    %v516 = vld [vmem:[#allocation13 + $0x48] sm:$0xff]
    %v517 = vld [vmem:[#allocation13 + $0x50] sm:$0xff]
    %v518 = vld [vmem:[#allocation13 + $0x58] sm:$0xff]
    %v519 = vld [vmem:[#allocation13 + $0x60] sm:$0xff]
    %v520 = vld [vmem:[#allocation13 + $0x68] sm:$0xff]
    %v521 = vld [vmem:[#allocation13 + $0x70] sm:$0xff]
    %v522 = vld [vmem:[#allocation13 + $0x78] sm:$0xff]
    %v523 = vld [vmem:[#allocation13 + $0x80] sm:$0xff]
    %v524 = vld [vmem:[#allocation13 + $0x88] sm:$0xff]
    %v525 = vld [vmem:[#allocation13 + $0x90] sm:$0xff]
    %v526 = vld [vmem:[#allocation13 + $0x98] sm:$0xff]
    %v527 = vld [vmem:[#allocation13 + $0xa0] sm:$0xff]
    %v528 = vld [vmem:[#allocation13 + $0xa8] sm:$0xff]
    %v529 = vld [vmem:[#allocation13 + $0xb0] sm:$0xff]
    %v530 = vld [vmem:[#allocation13 + $0xb8] sm:$0xff]
    %v531 = vld [vmem:[#allocation13 + $0xc0] sm:$0xff]
    %v532 = vld [vmem:[#allocation13 + $0xc8] sm:$0xff]
    %v533 = vld [vmem:[#allocation13 + $0xd0] sm:$0xff]
    %v534 = vld [vmem:[#allocation13 + $0xd8] sm:$0xff]
    %v535 = vld [vmem:[#allocation13 + $0xe0] sm:$0xff]
    %v536 = vld [vmem:[#allocation13 + $0xe8] sm:$0xff]
    %v537 = vld [vmem:[#allocation13 + $0xf0] sm:$0xff]
    %v538 = vld [vmem:[#allocation13 + $0xf8] sm:$0xff]
    %v539 = vld [vmem:[#allocation14] sm:$0x3]
    %v541 = vperm.slane %v539, 0
    %v542 = vperm.slane %v539, 1
    %545 = vmatpush.msra.mxu0 %v537
    %546 = vmatpush.msra.mxu0 %v535
    %547 = vmatpush.msra.mxu0 %v533
    %548 = vmatpush.msra.mxu0 %v531
    %549 = vmatpush.msra.mxu0 %v529
    %550 = vmatpush.msra.mxu0 %v527
    %551 = vmatpush.msra.mxu0 %v525
    %552 = vmatpush.msra.mxu0 %v523
    %553 = vmatpush.msra.mxu0 %v521
    %554 = vmatpush.msra.mxu0 %v519
    %555 = vmatpush.msra.mxu0 %v517
    %556 = vmatpush.msra.mxu0 %v515
    %557 = vmatpush.msra.mxu0 %v513
    %558 = vmatpush.msra.mxu0 %v511
    %559 = vmatpush.msra.mxu0 %v509
    %560 = vmatpush.msra.mxu0 %v507
    %561 = vmatmul.f32.gmra.mxu0 %v503
    %v562 = vpop.f32.mrf.mxu0
    %v563 = vadd.f32 %v541, %v562
    %564 = vmatmul.f32.gmra.mxu0 %v504
    %v565 = vpop.f32.mrf.mxu0
    %v566 = vadd.f32 %v541, %v565
    %567 = vmatmul.f32.gmra.mxu0 %v505
    %v568 = vpop.f32.mrf.mxu0
    %v569 = vadd.f32 %v541, %v568
    %570 = vmatmul.f32.gmra.mxu0 %v506
    %v571 = vpop.f32.mrf.mxu0
    %v572 = vadd.f32 %v541, %v571
    %573 = vdwg.mxu0
    %574 = vmatpush.msra.mxu0 %v538
    %575 = vmatpush.msra.mxu0 %v536
    %576 = vmatpush.msra.mxu0 %v534
    %577 = vmatpush.msra.mxu0 %v532
    %578 = vmatpush.msra.mxu0 %v530
    %579 = vmatpush.msra.mxu0 %v528
    %580 = vmatpush.msra.mxu0 %v526
    %581 = vmatpush.msra.mxu0 %v524
    %582 = vmatpush.msra.mxu0 %v522
    %583 = vmatpush.msra.mxu0 %v520
    %584 = vmatpush.msra.mxu0 %v518
    %585 = vmatpush.msra.mxu0 %v516
    %586 = vmatpush.msra.mxu0 %v514
    %587 = vmatpush.msra.mxu0 %v512
    %588 = vmatpush.msra.mxu0 %v510
    %589 = vmatpush.msra.mxu0 %v508
    %590 = vmatmul.f32.gmra.mxu0 %v503
    %v591 = vpop.f32.mrf.mxu0
    %v592 = vadd.f32 %v542, %v591
    %593 = vmatmul.f32.gmra.mxu0 %v504
    %v594 = vpop.f32.mrf.mxu0
    %v595 = vadd.f32 %v542, %v594
    %596 = vmatmul.f32.gmra.mxu0 %v505
    %v597 = vpop.f32.mrf.mxu0
    %v598 = vadd.f32 %v542, %v597
    %599 = vmatmul.f32.gmra.mxu0 %v506
    %v600 = vpop.f32.mrf.mxu0
    %v601 = vadd.f32 %v542, %v600
    %602 = vdwg.mxu0
    %v603 = vmax.f32 %v563, 0.0
    %v604 = vmax.f32 %v592, 0.0
    %v605 = vmax.f32 %v566, 0.0
    %v606 = vmax.f32 %v595, 0.0
    %v607 = vmax.f32 %v569, 0.0
    %v608 = vmax.f32 %v598, 0.0
    %v609 = vmax.f32 %v572, 0.0
    %v610 = vmax.f32 %v601, 0.0
    %v611 = vld [vmem:[#allocation16] sm:$0xff]
    %v612 = vld [vmem:[#allocation16 + $0x8] sm:$0xff]
    %v613 = vld [vmem:[#allocation16 + $0x10] sm:$0xff]
    %v614 = vld [vmem:[#allocation16 + $0x18] sm:$0xff]
    %v615 = vld [vmem:[#allocation16 + $0x20] sm:$0xff]
    %v616 = vld [vmem:[#allocation16 + $0x28] sm:$0xff]
    %v617 = vld [vmem:[#allocation16 + $0x30] sm:$0xff]
    %v618 = vld [vmem:[#allocation16 + $0x38] sm:$0xff]
    %v619 = vld [vmem:[#allocation16 + $0x40] sm:$0xff]
    %v620 = vld [vmem:[#allocation16 + $0x48] sm:$0xff]
    %v621 = vld [vmem:[#allocation16 + $0x50] sm:$0xff]
    %v622 = vld [vmem:[#allocation16 + $0x58] sm:$0xff]
    %v623 = vld [vmem:[#allocation16 + $0x60] sm:$0xff]
    %v624 = vld [vmem:[#allocation16 + $0x68] sm:$0xff]
    %v625 = vld [vmem:[#allocation16 + $0x70] sm:$0xff]
    %v626 = vld [vmem:[#allocation16 + $0x78] sm:$0xff]
    %v627 = vld [vmem:[#allocation16 + $0x80] sm:$0xff]
    %v628 = vld [vmem:[#allocation16 + $0x88] sm:$0xff]
    %v629 = vld [vmem:[#allocation16 + $0x90] sm:$0xff]
    %v630 = vld [vmem:[#allocation16 + $0x98] sm:$0xff]
    %v631 = vld [vmem:[#allocation16 + $0xa0] sm:$0xff]
    %v632 = vld [vmem:[#allocation16 + $0xa8] sm:$0xff]
    %v633 = vld [vmem:[#allocation16 + $0xb0] sm:$0xff]
    %v634 = vld [vmem:[#allocation16 + $0xb8] sm:$0xff]
    %v635 = vld [vmem:[#allocation16 + $0xc0] sm:$0xff]
    %v636 = vld [vmem:[#allocation16 + $0xc8] sm:$0xff]
    %v637 = vld [vmem:[#allocation16 + $0xd0] sm:$0xff]
    %v638 = vld [vmem:[#allocation16 + $0xd8] sm:$0xff]
    %v639 = vld [vmem:[#allocation16 + $0xe0] sm:$0xff]
    %v640 = vld [vmem:[#allocation16 + $0xe8] sm:$0xff]
    %v641 = vld [vmem:[#allocation16 + $0xf0] sm:$0xff]
    %v642 = vld [vmem:[#allocation16 + $0xf8] sm:$0xff]
    %v643 = vld [vmem:[#allocation17] sm:$0x1]
    %v645 = vperm.slane %v643, 0
    %647 = vmatpush.msra.mxu0 %v626
    %648 = vmatpush.msra.mxu0 %v625
    %649 = vmatpush.msra.mxu0 %v624
    %650 = vmatpush.msra.mxu0 %v623
    %651 = vmatpush.msra.mxu0 %v622
    %652 = vmatpush.msra.mxu0 %v621
    %653 = vmatpush.msra.mxu0 %v620
    %654 = vmatpush.msra.mxu0 %v619
    %655 = vmatpush.msra.mxu0 %v618
    %656 = vmatpush.msra.mxu0 %v617
    %657 = vmatpush.msra.mxu0 %v616
    %658 = vmatpush.msra.mxu0 %v615
    %659 = vmatpush.msra.mxu0 %v614
    %660 = vmatpush.msra.mxu0 %v613
    %661 = vmatpush.msra.mxu0 %v612
    %662 = vmatpush.msra.mxu0 %v611
    %663 = vmatmul.f32.gmra.mxu0 %v603
    %v664 = vpop.f32.mrf.mxu0
    %v665 = vadd.f32 %v645, %v664
    %666 = vmatmul.f32.gmra.mxu0 %v605
    %v667 = vpop.f32.mrf.mxu0
    %v668 = vadd.f32 %v645, %v667
    %669 = vmatmul.f32.gmra.mxu0 %v607
    %v670 = vpop.f32.mrf.mxu0
    %v671 = vadd.f32 %v645, %v670
    %672 = vmatmul.f32.gmra.mxu0 %v609
    %v673 = vpop.f32.mrf.mxu0
    %v674 = vadd.f32 %v645, %v673
    %675 = vdwg.mxu0
    %676 = vmatpush.msra.mxu0 %v642
    %677 = vmatpush.msra.mxu0 %v641
    %678 = vmatpush.msra.mxu0 %v640
    %679 = vmatpush.msra.mxu0 %v639
    %680 = vmatpush.msra.mxu0 %v638
    %681 = vmatpush.msra.mxu0 %v637
    %682 = vmatpush.msra.mxu0 %v636
    %683 = vmatpush.msra.mxu0 %v635
    %684 = vmatpush.msra.mxu0 %v634
    %685 = vmatpush.msra.mxu0 %v633
    %686 = vmatpush.msra.mxu0 %v632
    %687 = vmatpush.msra.mxu0 %v631
    %688 = vmatpush.msra.mxu0 %v630
    %689 = vmatpush.msra.mxu0 %v629
    %690 = vmatpush.msra.mxu0 %v628
    %691 = vmatpush.msra.mxu0 %v627
    %692 = vmatmul.f32.gmra.mxu0 %v604
    %v693 = vpop.f32.mrf.mxu0
    %v694 = vadd.f32 %v665, %v693
    %695 = vmatmul.f32.gmra.mxu0 %v606
    %v696 = vpop.f32.mrf.mxu0
    %v697 = vadd.f32 %v668, %v696
    %698 = vmatmul.f32.gmra.mxu0 %v608
    %v699 = vpop.f32.mrf.mxu0
    %v700 = vadd.f32 %v671, %v699
    %701 = vmatmul.f32.gmra.mxu0 %v610
    %v702 = vpop.f32.mrf.mxu0
    %v703 = vadd.f32 %v674, %v702
    %704 = vdwg.mxu0
    %v705 = vmax.f32 %v694, 0.0
    %v706 = vmax.f32 %v697, 0.0
    %v707 = vmax.f32 %v700, 0.0
    %v708 = vmax.f32 %v703, 0.0
    %v709 = vmax.f32 %v705, %v706
    %v710 = vrot.slane %v709, 4
    %v711 = vmax.f32 %v709, %v710
    %v712 = vrot.slane %v711, 2
    %v713 = vmax.f32 %v711, %v712
    %v714 = vrot.slane %v713, 1
    %v715 = vmax.f32 %v713, %v714
    %v716 = vmax.f32 %v707, %v708
    %v717 = vrot.slane %v716, 4
    %v718 = vmax.f32 %v716, %v717
    %v719 = vrot.slane %v718, 2
    %v720 = vmax.f32 %v718, %v719
    %v721 = vrot.slane %v720, 1
    %v722 = vmax.f32 %v720, %v721
    %v723 = vld [vmem:[#allocation19] sm:$0xff]
    %v724 = vld [vmem:[#allocation19 + $0x8] sm:$0xff]
    %v725 = vld [vmem:[#allocation19 + $0x10] sm:$0xff]
    %v726 = vld [vmem:[#allocation19 + $0x18] sm:$0xff]
    %v727 = vld [vmem:[#allocation19 + $0x20] sm:$0xff]
    %v728 = vld [vmem:[#allocation19 + $0x28] sm:$0xff]
    %v729 = vld [vmem:[#allocation19 + $0x30] sm:$0xff]
    %v730 = vld [vmem:[#allocation19 + $0x38] sm:$0xff]
    %v731 = vld [vmem:[#allocation19 + $0x40] sm:$0xff]
    %v732 = vld [vmem:[#allocation19 + $0x48] sm:$0xff]
    %v733 = vld [vmem:[#allocation19 + $0x50] sm:$0xff]
    %v734 = vld [vmem:[#allocation19 + $0x58] sm:$0xff]
    %v735 = vld [vmem:[#allocation19 + $0x60] sm:$0xff]
    %v736 = vld [vmem:[#allocation19 + $0x68] sm:$0xff]
    %v737 = vld [vmem:[#allocation19 + $0x70] sm:$0xff]
    %v738 = vld [vmem:[#allocation19 + $0x78] sm:$0xff]
    %v739 = vld [vmem:[#allocation19 + $0x80] sm:$0xff]
    %v740 = vld [vmem:[#allocation19 + $0x88] sm:$0xff]
    %v741 = vld [vmem:[#allocation19 + $0x90] sm:$0xff]
    %v742 = vld [vmem:[#allocation19 + $0x98] sm:$0xff]
    %v743 = vld [vmem:[#allocation19 + $0xa0] sm:$0xff]
    %v744 = vld [vmem:[#allocation19 + $0xa8] sm:$0xff]
    %v745 = vld [vmem:[#allocation19 + $0xb0] sm:$0xff]
    %v746 = vld [vmem:[#allocation19 + $0xb8] sm:$0xff]
    %v747 = vld [vmem:[#allocation19 + $0xc0] sm:$0xff]
    %v748 = vld [vmem:[#allocation19 + $0xc8] sm:$0xff]
    %v749 = vld [vmem:[#allocation19 + $0xd0] sm:$0xff]
    %v750 = vld [vmem:[#allocation19 + $0xd8] sm:$0xff]
    %v751 = vld [vmem:[#allocation19 + $0xe0] sm:$0xff]
    %v752 = vld [vmem:[#allocation19 + $0xe8] sm:$0xff]
    %v753 = vld [vmem:[#allocation19 + $0xf0] sm:$0xff]
    %v754 = vld [vmem:[#allocation19 + $0xf8] sm:$0xff]
    %v755 = vld [vmem:[#allocation20] sm:$0x3]
    %v757 = vperm.slane %v755, 0
    %v758 = vperm.slane %v755, 1
    %vm763 = vcmask 1041409
    %v764 = vsel %vm763, %v722, %v715
    %766 = vmatpush.msra.mxu0 %v753
    %767 = vmatpush.msra.mxu0 %v751
    %768 = vmatpush.msra.mxu0 %v749
    %769 = vmatpush.msra.mxu0 %v747
    %770 = vmatpush.msra.mxu0 %v745
    %771 = vmatpush.msra.mxu0 %v743
    %772 = vmatpush.msra.mxu0 %v741
    %773 = vmatpush.msra.mxu0 %v739
    %774 = vmatpush.msra.mxu0 %v737
    %775 = vmatpush.msra.mxu0 %v735
    %776 = vmatpush.msra.mxu0 %v733
    %777 = vmatpush.msra.mxu0 %v731
    %778 = vmatpush.msra.mxu0 %v729
    %779 = vmatpush.msra.mxu0 %v727
    %780 = vmatpush.msra.mxu0 %v725
    %781 = vmatpush.msra.mxu0 %v723
    %782 = vmatmul.f32.gmra.mxu0 %v764
    %v783 = vpop.f32.mrf.mxu0
    %v784 = vadd.f32 %v757, %v783
    %785 = vdwg.mxu0
    %786 = vmatpush.msra.mxu0 %v754
    %787 = vmatpush.msra.mxu0 %v752
    %788 = vmatpush.msra.mxu0 %v750
    %789 = vmatpush.msra.mxu0 %v748
    %790 = vmatpush.msra.mxu0 %v746
    %791 = vmatpush.msra.mxu0 %v744
    %792 = vmatpush.msra.mxu0 %v742
    %793 = vmatpush.msra.mxu0 %v740
    %794 = vmatpush.msra.mxu0 %v738
    %795 = vmatpush.msra.mxu0 %v736
    %796 = vmatpush.msra.mxu0 %v734
    %797 = vmatpush.msra.mxu0 %v732
    %798 = vmatpush.msra.mxu0 %v730
    %799 = vmatpush.msra.mxu0 %v728
    %800 = vmatpush.msra.mxu0 %v726
    %801 = vmatpush.msra.mxu0 %v724
    %802 = vmatmul.f32.gmra.mxu0 %v764
    %v803 = vpop.f32.mrf.mxu0
    %v804 = vadd.f32 %v758, %v803
    %805 = vdwg.mxu0
    %v806 = vmax.f32 %v784, 0.0
    %v807 = vmax.f32 %v804, 0.0
    %v808 = vld [vmem:[#allocation22] sm:$0xff]
    %v809 = vld [vmem:[#allocation22 + $0x8] sm:$0xff]
    %v810 = vld [vmem:[#allocation22 + $0x10] sm:$0xff]
    %v811 = vld [vmem:[#allocation22 + $0x18] sm:$0xff]
    %v812 = vld [vmem:[#allocation22 + $0x20] sm:$0xff]
    %v813 = vld [vmem:[#allocation22 + $0x28] sm:$0xff]
    %v814 = vld [vmem:[#allocation22 + $0x30] sm:$0xff]
    %v815 = vld [vmem:[#allocation22 + $0x38] sm:$0xff]
    %v816 = vld [vmem:[#allocation22 + $0x40] sm:$0xff]
    %v817 = vld [vmem:[#allocation22 + $0x48] sm:$0xff]
    %v818 = vld [vmem:[#allocation22 + $0x50] sm:$0xff]
    %v819 = vld [vmem:[#allocation22 + $0x58] sm:$0xff]
    %v820 = vld [vmem:[#allocation22 + $0x60] sm:$0xff]
    %v821 = vld [vmem:[#allocation22 + $0x68] sm:$0xff]
    %v822 = vld [vmem:[#allocation22 + $0x70] sm:$0xff]
    %v823 = vld [vmem:[#allocation22 + $0x78] sm:$0xff]
    %v824 = vld [vmem:[#allocation22 + $0x80] sm:$0xff]
    %v825 = vld [vmem:[#allocation22 + $0x88] sm:$0xff]
    %v826 = vld [vmem:[#allocation22 + $0x90] sm:$0xff]
    %v827 = vld [vmem:[#allocation22 + $0x98] sm:$0xff]
    %v828 = vld [vmem:[#allocation22 + $0xa0] sm:$0xff]
    %v829 = vld [vmem:[#allocation22 + $0xa8] sm:$0xff]
    %v830 = vld [vmem:[#allocation22 + $0xb0] sm:$0xff]
    %v831 = vld [vmem:[#allocation22 + $0xb8] sm:$0xff]
    %v832 = vld [vmem:[#allocation22 + $0xc0] sm:$0xff]
    %v833 = vld [vmem:[#allocation22 + $0xc8] sm:$0xff]
    %v834 = vld [vmem:[#allocation22 + $0xd0] sm:$0xff]
    %v835 = vld [vmem:[#allocation22 + $0xd8] sm:$0xff]
    %v836 = vld [vmem:[#allocation22 + $0xe0] sm:$0xff]
    %v837 = vld [vmem:[#allocation22 + $0xe8] sm:$0xff]
    %v838 = vld [vmem:[#allocation22 + $0xf0] sm:$0xff]
    %v839 = vld [vmem:[#allocation22 + $0xf8] sm:$0xff]
    %v840 = vld [vmem:[#allocation22 + $0x100] sm:$0xff]
    %v841 = vld [vmem:[#allocation22 + $0x108] sm:$0xff]
    %v842 = vld [vmem:[#allocation22 + $0x110] sm:$0xff]
    %v843 = vld [vmem:[#allocation22 + $0x118] sm:$0xff]
    %v844 = vld [vmem:[#allocation22 + $0x120] sm:$0xff]
    %v845 = vld [vmem:[#allocation22 + $0x128] sm:$0xff]
    %v846 = vld [vmem:[#allocation22 + $0x130] sm:$0xff]
    %v847 = vld [vmem:[#allocation22 + $0x138] sm:$0xff]
    %v848 = vld [vmem:[#allocation22 + $0x140] sm:$0xff]
    %v849 = vld [vmem:[#allocation22 + $0x148] sm:$0xff]
    %v850 = vld [vmem:[#allocation22 + $0x150] sm:$0xff]
    %v851 = vld [vmem:[#allocation22 + $0x158] sm:$0xff]
    %v852 = vld [vmem:[#allocation22 + $0x160] sm:$0xff]
    %v853 = vld [vmem:[#allocation22 + $0x168] sm:$0xff]
    %v854 = vld [vmem:[#allocation22 + $0x170] sm:$0xff]
    %v855 = vld [vmem:[#allocation22 + $0x178] sm:$0xff]
    %v856 = vld [vmem:[#allocation22 + $0x180] sm:$0xff]
    %v857 = vld [vmem:[#allocation22 + $0x188] sm:$0xff]
    %v858 = vld [vmem:[#allocation22 + $0x190] sm:$0xff]
    %v859 = vld [vmem:[#allocation22 + $0x198] sm:$0xff]
    %v860 = vld [vmem:[#allocation22 + $0x1a0] sm:$0xff]
    %v861 = vld [vmem:[#allocation22 + $0x1a8] sm:$0xff]
    %v862 = vld [vmem:[#allocation22 + $0x1b0] sm:$0xff]
    %v863 = vld [vmem:[#allocation22 + $0x1b8] sm:$0xff]
    %v864 = vld [vmem:[#allocation22 + $0x1c0] sm:$0xff]
    %v865 = vld [vmem:[#allocation22 + $0x1c8] sm:$0xff]
    %v866 = vld [vmem:[#allocation22 + $0x1d0] sm:$0xff]
    %v867 = vld [vmem:[#allocation22 + $0x1d8] sm:$0xff]
    %v868 = vld [vmem:[#allocation22 + $0x1e0] sm:$0xff]
    %v869 = vld [vmem:[#allocation22 + $0x1e8] sm:$0xff]
    %v870 = vld [vmem:[#allocation22 + $0x1f0] sm:$0xff]
    %v871 = vld [vmem:[#allocation22 + $0x1f8] sm:$0xff]
    %v872 = vld [vmem:[#allocation23] sm:$0x3]
    %v874 = vperm.slane %v872, 0
    %v875 = vperm.slane %v872, 1
    %878 = vmatpush.msra.mxu0 %v838
    %879 = vmatpush.msra.mxu0 %v836
    %880 = vmatpush.msra.mxu0 %v834
    %881 = vmatpush.msra.mxu0 %v832
    %882 = vmatpush.msra.mxu0 %v830
    %883 = vmatpush.msra.mxu0 %v828
    %884 = vmatpush.msra.mxu0 %v826
    %885 = vmatpush.msra.mxu0 %v824
    %886 = vmatpush.msra.mxu0 %v822
    %887 = vmatpush.msra.mxu0 %v820
    %888 = vmatpush.msra.mxu0 %v818
    %889 = vmatpush.msra.mxu0 %v816
    %890 = vmatpush.msra.mxu0 %v814
    %891 = vmatpush.msra.mxu0 %v812
    %892 = vmatpush.msra.mxu0 %v810
    %893 = vmatpush.msra.mxu0 %v808
    %894 = vmatmul.f32.gmra.mxu0 %v806
    %v895 = vpop.f32.mrf.mxu0
    %v896 = vadd.f32 %v874, %v895
    %897 = vdwg.mxu0
    %898 = vmatpush.msra.mxu0 %v870
    %899 = vmatpush.msra.mxu0 %v868
    %900 = vmatpush.msra.mxu0 %v866
    %901 = vmatpush.msra.mxu0 %v864
    %902 = vmatpush.msra.mxu0 %v862
    %903 = vmatpush.msra.mxu0 %v860
    %904 = vmatpush.msra.mxu0 %v858
    %905 = vmatpush.msra.mxu0 %v856
    %906 = vmatpush.msra.mxu0 %v854
    %907 = vmatpush.msra.mxu0 %v852
    %908 = vmatpush.msra.mxu0 %v850
    %909 = vmatpush.msra.mxu0 %v848
    %910 = vmatpush.msra.mxu0 %v846
    %911 = vmatpush.msra.mxu0 %v844
    %912 = vmatpush.msra.mxu0 %v842
    %913 = vmatpush.msra.mxu0 %v840
    %914 = vmatmul.f32.gmra.mxu0 %v807
    %v915 = vpop.f32.mrf.mxu0
    %v916 = vadd.f32 %v896, %v915
    %917 = vdwg.mxu0
    %918 = vmatpush.msra.mxu0 %v839
    %919 = vmatpush.msra.mxu0 %v837
    %920 = vmatpush.msra.mxu0 %v835
    %921 = vmatpush.msra.mxu0 %v833
    %922 = vmatpush.msra.mxu0 %v831
    %923 = vmatpush.msra.mxu0 %v829
    %924 = vmatpush.msra.mxu0 %v827
    %925 = vmatpush.msra.mxu0 %v825
    %926 = vmatpush.msra.mxu0 %v823
    %927 = vmatpush.msra.mxu0 %v821
    %928 = vmatpush.msra.mxu0 %v819
    %929 = vmatpush.msra.mxu0 %v817
    %930 = vmatpush.msra.mxu0 %v815
    %931 = vmatpush.msra.mxu0 %v813
    %932 = vmatpush.msra.mxu0 %v811
    %933 = vmatpush.msra.mxu0 %v809
    %934 = vmatmul.f32.gmra.mxu0 %v806
    %v935 = vpop.f32.mrf.mxu0
    %v936 = vadd.f32 %v875, %v935
    %937 = vdwg.mxu0
    %938 = vmatpush.msra.mxu0 %v871
    %939 = vmatpush.msra.mxu0 %v869
    %940 = vmatpush.msra.mxu0 %v867
    %941 = vmatpush.msra.mxu0 %v865
    %942 = vmatpush.msra.mxu0 %v863
    %943 = vmatpush.msra.mxu0 %v861
    %944 = vmatpush.msra.mxu0 %v859
    %945 = vmatpush.msra.mxu0 %v857
    %946 = vmatpush.msra.mxu0 %v855
    %947 = vmatpush.msra.mxu0 %v853
    %948 = vmatpush.msra.mxu0 %v851
    %949 = vmatpush.msra.mxu0 %v849
    %950 = vmatpush.msra.mxu0 %v847
    %951 = vmatpush.msra.mxu0 %v845
    %952 = vmatpush.msra.mxu0 %v843
    %953 = vmatpush.msra.mxu0 %v841
    %954 = vmatmul.f32.gmra.mxu0 %v807
    %v955 = vpop.f32.mrf.mxu0
    %v956 = vadd.f32 %v936, %v955
    %957 = vdwg.mxu0
    %v958 = vmax.f32 %v916, 0.0
    %v959 = vmax.f32 %v956, 0.0
    %v960 = vld [vmem:[#allocation25] sm:$0xff]
    %v961 = vld [vmem:[#allocation25 + $0x8] sm:$0xff]
    %v962 = vld [vmem:[#allocation25 + $0x10] sm:$0xff]
    %v963 = vld [vmem:[#allocation25 + $0x18] sm:$0xff]
    %v964 = vld [vmem:[#allocation25 + $0x20] sm:$0xff]
    %v965 = vld [vmem:[#allocation25 + $0x28] sm:$0xff]
    %v966 = vld [vmem:[#allocation25 + $0x30] sm:$0xff]
    %v967 = vld [vmem:[#allocation25 + $0x38] sm:$0xff]
    %v968 = vld [vmem:[#allocation25 + $0x40] sm:$0xff]
    %v969 = vld [vmem:[#allocation25 + $0x48] sm:$0xff]
    %v970 = vld [vmem:[#allocation25 + $0x50] sm:$0xff]
    %v971 = vld [vmem:[#allocation25 + $0x58] sm:$0xff]
    %v972 = vld [vmem:[#allocation25 + $0x60] sm:$0xff]
    %v973 = vld [vmem:[#allocation25 + $0x68] sm:$0xff]
    %v974 = vld [vmem:[#allocation25 + $0x70] sm:$0xff]
    %v975 = vld [vmem:[#allocation25 + $0x78] sm:$0xff]
    %v976 = vld [vmem:[#allocation25 + $0x80] sm:$0xff]
    %v977 = vld [vmem:[#allocation25 + $0x88] sm:$0xff]
    %v978 = vld [vmem:[#allocation25 + $0x90] sm:$0xff]
    %v979 = vld [vmem:[#allocation25 + $0x98] sm:$0xff]
    %v980 = vld [vmem:[#allocation25 + $0xa0] sm:$0xff]
    %v981 = vld [vmem:[#allocation25 + $0xa8] sm:$0xff]
    %v982 = vld [vmem:[#allocation25 + $0xb0] sm:$0xff]
    %v983 = vld [vmem:[#allocation25 + $0xb8] sm:$0xff]
    %v984 = vld [vmem:[#allocation25 + $0xc0] sm:$0xff]
    %v985 = vld [vmem:[#allocation25 + $0xc8] sm:$0xff]
    %v986 = vld [vmem:[#allocation25 + $0xd0] sm:$0xff]
    %v987 = vld [vmem:[#allocation25 + $0xd8] sm:$0xff]
    %v988 = vld [vmem:[#allocation25 + $0xe0] sm:$0xff]
    %v989 = vld [vmem:[#allocation25 + $0xe8] sm:$0xff]
    %v990 = vld [vmem:[#allocation25 + $0xf0] sm:$0xff]
    %v991 = vld [vmem:[#allocation25 + $0xf8] sm:$0xff]
    %v992 = vld [vmem:[#allocation25 + $0x100] sm:$0xff]
    %v993 = vld [vmem:[#allocation25 + $0x108] sm:$0xff]
    %v994 = vld [vmem:[#allocation25 + $0x110] sm:$0xff]
    %v995 = vld [vmem:[#allocation25 + $0x118] sm:$0xff]
    %v996 = vld [vmem:[#allocation25 + $0x120] sm:$0xff]
    %v997 = vld [vmem:[#allocation25 + $0x128] sm:$0xff]
    %v998 = vld [vmem:[#allocation25 + $0x130] sm:$0xff]
    %v999 = vld [vmem:[#allocation25 + $0x138] sm:$0xff]
    %v1000 = vld [vmem:[#allocation25 + $0x140] sm:$0xff]
    %v1001 = vld [vmem:[#allocation25 + $0x148] sm:$0xff]
    %v1002 = vld [vmem:[#allocation25 + $0x150] sm:$0xff]
    %v1003 = vld [vmem:[#allocation25 + $0x158] sm:$0xff]
    %v1004 = vld [vmem:[#allocation25 + $0x160] sm:$0xff]
    %v1005 = vld [vmem:[#allocation25 + $0x168] sm:$0xff]
    %v1006 = vld [vmem:[#allocation25 + $0x170] sm:$0xff]
    %v1007 = vld [vmem:[#allocation25 + $0x178] sm:$0xff]
    %v1008 = vld [vmem:[#allocation25 + $0x180] sm:$0xff]
    %v1009 = vld [vmem:[#allocation25 + $0x188] sm:$0xff]
    %v1010 = vld [vmem:[#allocation25 + $0x190] sm:$0xff]
    %v1011 = vld [vmem:[#allocation25 + $0x198] sm:$0xff]
    %v1012 = vld [vmem:[#allocation25 + $0x1a0] sm:$0xff]
    %v1013 = vld [vmem:[#allocation25 + $0x1a8] sm:$0xff]
    %v1014 = vld [vmem:[#allocation25 + $0x1b0] sm:$0xff]
    %v1015 = vld [vmem:[#allocation25 + $0x1b8] sm:$0xff]
    %v1016 = vld [vmem:[#allocation25 + $0x1c0] sm:$0xff]
    %v1017 = vld [vmem:[#allocation25 + $0x1c8] sm:$0xff]
    %v1018 = vld [vmem:[#allocation25 + $0x1d0] sm:$0xff]
    %v1019 = vld [vmem:[#allocation25 + $0x1d8] sm:$0xff]
    %v1020 = vld [vmem:[#allocation25 + $0x1e0] sm:$0xff]
    %v1021 = vld [vmem:[#allocation25 + $0x1e8] sm:$0xff]
    %v1022 = vld [vmem:[#allocation25 + $0x1f0] sm:$0xff]
    %v1023 = vld [vmem:[#allocation25 + $0x1f8] sm:$0xff]
    %v1024 = vld [vmem:[#allocation25 + $0x200] sm:$0xff]
    %v1025 = vld [vmem:[#allocation25 + $0x208] sm:$0xff]
    %v1026 = vld [vmem:[#allocation25 + $0x210] sm:$0xff]
    %v1027 = vld [vmem:[#allocation25 + $0x218] sm:$0xff]
    %v1028 = vld [vmem:[#allocation25 + $0x220] sm:$0xff]
    %v1029 = vld [vmem:[#allocation25 + $0x228] sm:$0xff]
    %v1030 = vld [vmem:[#allocation25 + $0x230] sm:$0xff]
    %v1031 = vld [vmem:[#allocation25 + $0x238] sm:$0xff]
    %v1032 = vld [vmem:[#allocation25 + $0x240] sm:$0xff]
    %v1033 = vld [vmem:[#allocation25 + $0x248] sm:$0xff]
    %v1034 = vld [vmem:[#allocation25 + $0x250] sm:$0xff]
    %v1035 = vld [vmem:[#allocation25 + $0x258] sm:$0xff]
    %v1036 = vld [vmem:[#allocation25 + $0x260] sm:$0xff]
    %v1037 = vld [vmem:[#allocation25 + $0x268] sm:$0xff]
    %v1038 = vld [vmem:[#allocation25 + $0x270] sm:$0xff]
    %v1039 = vld [vmem:[#allocation25 + $0x278] sm:$0xff]
    %v1040 = vld [vmem:[#allocation25 + $0x280] sm:$0xff]
    %v1041 = vld [vmem:[#allocation25 + $0x288] sm:$0xff]
    %v1042 = vld [vmem:[#allocation25 + $0x290] sm:$0xff]
    %v1043 = vld [vmem:[#allocation25 + $0x298] sm:$0xff]
    %v1044 = vld [vmem:[#allocation25 + $0x2a0] sm:$0xff]
    %v1045 = vld [vmem:[#allocation25 + $0x2a8] sm:$0xff]
    %v1046 = vld [vmem:[#allocation25 + $0x2b0] sm:$0xff]
    %v1047 = vld [vmem:[#allocation25 + $0x2b8] sm:$0xff]
    %v1048 = vld [vmem:[#allocation25 + $0x2c0] sm:$0xff]
    %v1049 = vld [vmem:[#allocation25 + $0x2c8] sm:$0xff]
    %v1050 = vld [vmem:[#allocation25 + $0x2d0] sm:$0xff]
    %v1051 = vld [vmem:[#allocation25 + $0x2d8] sm:$0xff]
    %v1052 = vld [vmem:[#allocation25 + $0x2e0] sm:$0xff]
    %v1053 = vld [vmem:[#allocation25 + $0x2e8] sm:$0xff]
    %v1054 = vld [vmem:[#allocation25 + $0x2f0] sm:$0xff]
    %v1055 = vld [vmem:[#allocation25 + $0x2f8] sm:$0xff]
    %v1056 = vld [vmem:[#allocation25 + $0x300] sm:$0xff]
    %v1057 = vld [vmem:[#allocation25 + $0x308] sm:$0xff]
    %v1058 = vld [vmem:[#allocation25 + $0x310] sm:$0xff]
    %v1059 = vld [vmem:[#allocation25 + $0x318] sm:$0xff]
    %v1060 = vld [vmem:[#allocation25 + $0x320] sm:$0xff]
    %v1061 = vld [vmem:[#allocation25 + $0x328] sm:$0xff]
    %v1062 = vld [vmem:[#allocation25 + $0x330] sm:$0xff]
    %v1063 = vld [vmem:[#allocation25 + $0x338] sm:$0xff]
    %v1064 = vld [vmem:[#allocation25 + $0x340] sm:$0xff]
    %v1065 = vld [vmem:[#allocation25 + $0x348] sm:$0xff]
    %v1066 = vld [vmem:[#allocation25 + $0x350] sm:$0xff]
    %v1067 = vld [vmem:[#allocation25 + $0x358] sm:$0xff]
    %v1068 = vld [vmem:[#allocation25 + $0x360] sm:$0xff]
    %v1069 = vld [vmem:[#allocation25 + $0x368] sm:$0xff]
    %v1070 = vld [vmem:[#allocation25 + $0x370] sm:$0xff]
    %v1071 = vld [vmem:[#allocation25 + $0x378] sm:$0xff]
    %v1072 = vld [vmem:[#allocation25 + $0x380] sm:$0xff]
    %v1073 = vld [vmem:[#allocation25 + $0x388] sm:$0xff]
    %v1074 = vld [vmem:[#allocation25 + $0x390] sm:$0xff]
    %v1075 = vld [vmem:[#allocation25 + $0x398] sm:$0xff]
    %v1076 = vld [vmem:[#allocation25 + $0x3a0] sm:$0xff]
    %v1077 = vld [vmem:[#allocation25 + $0x3a8] sm:$0xff]
    %v1078 = vld [vmem:[#allocation25 + $0x3b0] sm:$0xff]
    %v1079 = vld [vmem:[#allocation25 + $0x3b8] sm:$0xff]
    %v1080 = vld [vmem:[#allocation25 + $0x3c0] sm:$0xff]
    %v1081 = vld [vmem:[#allocation25 + $0x3c8] sm:$0xff]
    %v1082 = vld [vmem:[#allocation25 + $0x3d0] sm:$0xff]
    %v1083 = vld [vmem:[#allocation25 + $0x3d8] sm:$0xff]
    %v1084 = vld [vmem:[#allocation25 + $0x3e0] sm:$0xff]
    %v1085 = vld [vmem:[#allocation25 + $0x3e8] sm:$0xff]
    %v1086 = vld [vmem:[#allocation25 + $0x3f0] sm:$0xff]
    %v1087 = vld [vmem:[#allocation25 + $0x3f8] sm:$0xff]
    %v1088 = vld [vmem:[#allocation25 + $0x400] sm:$0xff]
    %v1089 = vld [vmem:[#allocation25 + $0x408] sm:$0xff]
    %v1090 = vld [vmem:[#allocation25 + $0x410] sm:$0xff]
    %v1091 = vld [vmem:[#allocation25 + $0x418] sm:$0xff]
    %v1092 = vld [vmem:[#allocation25 + $0x420] sm:$0xff]
    %v1093 = vld [vmem:[#allocation25 + $0x428] sm:$0xff]
    %v1094 = vld [vmem:[#allocation25 + $0x430] sm:$0xff]
    %v1095 = vld [vmem:[#allocation25 + $0x438] sm:$0xff]
    %v1096 = vld [vmem:[#allocation25 + $0x440] sm:$0xff]
    %v1097 = vld [vmem:[#allocation25 + $0x448] sm:$0xff]
    %v1098 = vld [vmem:[#allocation25 + $0x450] sm:$0xff]
    %v1099 = vld [vmem:[#allocation25 + $0x458] sm:$0xff]
    %v1100 = vld [vmem:[#allocation25 + $0x460] sm:$0xff]
    %v1101 = vld [vmem:[#allocation25 + $0x468] sm:$0xff]
    %v1102 = vld [vmem:[#allocation25 + $0x470] sm:$0xff]
    %v1103 = vld [vmem:[#allocation25 + $0x478] sm:$0xff]
    %v1104 = vld [vmem:[#allocation25 + $0x480] sm:$0xff]
    %v1105 = vld [vmem:[#allocation25 + $0x488] sm:$0xff]
    %v1106 = vld [vmem:[#allocation25 + $0x490] sm:$0xff]
    %v1107 = vld [vmem:[#allocation25 + $0x498] sm:$0xff]
    %v1108 = vld [vmem:[#allocation25 + $0x4a0] sm:$0xff]
    %v1109 = vld [vmem:[#allocation25 + $0x4a8] sm:$0xff]
    %v1110 = vld [vmem:[#allocation25 + $0x4b0] sm:$0xff]
    %v1111 = vld [vmem:[#allocation25 + $0x4b8] sm:$0xff]
    %v1112 = vld [vmem:[#allocation25 + $0x4c0] sm:$0xff]
    %v1113 = vld [vmem:[#allocation25 + $0x4c8] sm:$0xff]
    %v1114 = vld [vmem:[#allocation25 + $0x4d0] sm:$0xff]
    %v1115 = vld [vmem:[#allocation25 + $0x4d8] sm:$0xff]
    %v1116 = vld [vmem:[#allocation25 + $0x4e0] sm:$0xff]
    %v1117 = vld [vmem:[#allocation25 + $0x4e8] sm:$0xff]
    %v1118 = vld [vmem:[#allocation25 + $0x4f0] sm:$0xff]
    %v1119 = vld [vmem:[#allocation25 + $0x4f8] sm:$0xff]
    %v1120 = vld [vmem:[#allocation25 + $0x500] sm:$0xff]
    %v1121 = vld [vmem:[#allocation25 + $0x508] sm:$0xff]
    %v1122 = vld [vmem:[#allocation25 + $0x510] sm:$0xff]
    %v1123 = vld [vmem:[#allocation25 + $0x518] sm:$0xff]
    %v1124 = vld [vmem:[#allocation25 + $0x520] sm:$0xff]
    %v1125 = vld [vmem:[#allocation25 + $0x528] sm:$0xff]
    %v1126 = vld [vmem:[#allocation25 + $0x530] sm:$0xff]
    %v1127 = vld [vmem:[#allocation25 + $0x538] sm:$0xff]
    %v1128 = vld [vmem:[#allocation25 + $0x540] sm:$0xff]
    %v1129 = vld [vmem:[#allocation25 + $0x548] sm:$0xff]
    %v1130 = vld [vmem:[#allocation25 + $0x550] sm:$0xff]
    %v1131 = vld [vmem:[#allocation25 + $0x558] sm:$0xff]
    %v1132 = vld [vmem:[#allocation25 + $0x560] sm:$0xff]
    %v1133 = vld [vmem:[#allocation25 + $0x568] sm:$0xff]
    %v1134 = vld [vmem:[#allocation25 + $0x570] sm:$0xff]
    %v1135 = vld [vmem:[#allocation25 + $0x578] sm:$0xff]
    %v1136 = vld [vmem:[#allocation25 + $0x580] sm:$0xff]
    %v1137 = vld [vmem:[#allocation25 + $0x588] sm:$0xff]
    %v1138 = vld [vmem:[#allocation25 + $0x590] sm:$0xff]
    %v1139 = vld [vmem:[#allocation25 + $0x598] sm:$0xff]
    %v1140 = vld [vmem:[#allocation25 + $0x5a0] sm:$0xff]
    %v1141 = vld [vmem:[#allocation25 + $0x5a8] sm:$0xff]
    %v1142 = vld [vmem:[#allocation25 + $0x5b0] sm:$0xff]
    %v1143 = vld [vmem:[#allocation25 + $0x5b8] sm:$0xff]
    %v1144 = vld [vmem:[#allocation25 + $0x5c0] sm:$0xff]
    %v1145 = vld [vmem:[#allocation25 + $0x5c8] sm:$0xff]
    %v1146 = vld [vmem:[#allocation25 + $0x5d0] sm:$0xff]
    %v1147 = vld [vmem:[#allocation25 + $0x5d8] sm:$0xff]
    %v1148 = vld [vmem:[#allocation25 + $0x5e0] sm:$0xff]
    %v1149 = vld [vmem:[#allocation25 + $0x5e8] sm:$0xff]
    %v1150 = vld [vmem:[#allocation25 + $0x5f0] sm:$0xff]
    %v1151 = vld [vmem:[#allocation25 + $0x5f8] sm:$0xff]
    %v1152 = vld [vmem:[#allocation25 + $0x600] sm:$0xff]
    %v1153 = vld [vmem:[#allocation25 + $0x608] sm:$0xff]
    %v1154 = vld [vmem:[#allocation25 + $0x610] sm:$0xff]
    %v1155 = vld [vmem:[#allocation25 + $0x618] sm:$0xff]
    %v1156 = vld [vmem:[#allocation25 + $0x620] sm:$0xff]
    %v1157 = vld [vmem:[#allocation25 + $0x628] sm:$0xff]
    %v1158 = vld [vmem:[#allocation25 + $0x630] sm:$0xff]
    %v1159 = vld [vmem:[#allocation25 + $0x638] sm:$0xff]
    %v1160 = vld [vmem:[#allocation25 + $0x640] sm:$0xff]
    %v1161 = vld [vmem:[#allocation25 + $0x648] sm:$0xff]
    %v1162 = vld [vmem:[#allocation25 + $0x650] sm:$0xff]
    %v1163 = vld [vmem:[#allocation25 + $0x658] sm:$0xff]
    %v1164 = vld [vmem:[#allocation25 + $0x660] sm:$0xff]
    %v1165 = vld [vmem:[#allocation25 + $0x668] sm:$0xff]
    %v1166 = vld [vmem:[#allocation25 + $0x670] sm:$0xff]
    %v1167 = vld [vmem:[#allocation25 + $0x678] sm:$0xff]
    %v1168 = vld [vmem:[#allocation25 + $0x680] sm:$0xff]
    %v1169 = vld [vmem:[#allocation25 + $0x688] sm:$0xff]
    %v1170 = vld [vmem:[#allocation25 + $0x690] sm:$0xff]
    %v1171 = vld [vmem:[#allocation25 + $0x698] sm:$0xff]
    %v1172 = vld [vmem:[#allocation25 + $0x6a0] sm:$0xff]
    %v1173 = vld [vmem:[#allocation25 + $0x6a8] sm:$0xff]
    %v1174 = vld [vmem:[#allocation25 + $0x6b0] sm:$0xff]
    %v1175 = vld [vmem:[#allocation25 + $0x6b8] sm:$0xff]
    %v1176 = vld [vmem:[#allocation25 + $0x6c0] sm:$0xff]
    %v1177 = vld [vmem:[#allocation25 + $0x6c8] sm:$0xff]
    %v1178 = vld [vmem:[#allocation25 + $0x6d0] sm:$0xff]
    %v1179 = vld [vmem:[#allocation25 + $0x6d8] sm:$0xff]
    %v1180 = vld [vmem:[#allocation25 + $0x6e0] sm:$0xff]
    %v1181 = vld [vmem:[#allocation25 + $0x6e8] sm:$0xff]
    %v1182 = vld [vmem:[#allocation25 + $0x6f0] sm:$0xff]
    %v1183 = vld [vmem:[#allocation25 + $0x6f8] sm:$0xff]
    %v1184 = vld [vmem:[#allocation25 + $0x700] sm:$0xff]
    %v1185 = vld [vmem:[#allocation25 + $0x708] sm:$0xff]
    %v1186 = vld [vmem:[#allocation25 + $0x710] sm:$0xff]
    %v1187 = vld [vmem:[#allocation25 + $0x718] sm:$0xff]
    %v1188 = vld [vmem:[#allocation25 + $0x720] sm:$0xff]
    %v1189 = vld [vmem:[#allocation25 + $0x728] sm:$0xff]
    %v1190 = vld [vmem:[#allocation25 + $0x730] sm:$0xff]
    %v1191 = vld [vmem:[#allocation25 + $0x738] sm:$0xff]
    %v1192 = vld [vmem:[#allocation25 + $0x740] sm:$0xff]
    %v1193 = vld [vmem:[#allocation25 + $0x748] sm:$0xff]
    %v1194 = vld [vmem:[#allocation25 + $0x750] sm:$0xff]
    %v1195 = vld [vmem:[#allocation25 + $0x758] sm:$0xff]
    %v1196 = vld [vmem:[#allocation25 + $0x760] sm:$0xff]
    %v1197 = vld [vmem:[#allocation25 + $0x768] sm:$0xff]
    %v1198 = vld [vmem:[#allocation25 + $0x770] sm:$0xff]
    %v1199 = vld [vmem:[#allocation25 + $0x778] sm:$0xff]
    %v1200 = vld [vmem:[#allocation25 + $0x780] sm:$0xff]
    %v1201 = vld [vmem:[#allocation25 + $0x788] sm:$0xff]
    %v1202 = vld [vmem:[#allocation25 + $0x790] sm:$0xff]
    %v1203 = vld [vmem:[#allocation25 + $0x798] sm:$0xff]
    %v1204 = vld [vmem:[#allocation25 + $0x7a0] sm:$0xff]
    %v1205 = vld [vmem:[#allocation25 + $0x7a8] sm:$0xff]
    %v1206 = vld [vmem:[#allocation25 + $0x7b0] sm:$0xff]
    %v1207 = vld [vmem:[#allocation25 + $0x7b8] sm:$0xff]
    %v1208 = vld [vmem:[#allocation25 + $0x7c0] sm:$0xff]
    %v1209 = vld [vmem:[#allocation25 + $0x7c8] sm:$0xff]
    %v1210 = vld [vmem:[#allocation25 + $0x7d0] sm:$0xff]
    %v1211 = vld [vmem:[#allocation25 + $0x7d8] sm:$0xff]
    %v1212 = vld [vmem:[#allocation25 + $0x7e0] sm:$0xff]
    %v1213 = vld [vmem:[#allocation25 + $0x7e8] sm:$0xff]
    %v1214 = vld [vmem:[#allocation25 + $0x7f0] sm:$0xff]
    %v1215 = vld [vmem:[#allocation25 + $0x7f8] sm:$0xff]
    %v1216 = vld [vmem:[#allocation25 + $0x800] sm:$0xff]
    %v1217 = vld [vmem:[#allocation25 + $0x808] sm:$0xff]
    %v1218 = vld [vmem:[#allocation25 + $0x810] sm:$0xff]
    %v1219 = vld [vmem:[#allocation25 + $0x818] sm:$0xff]
    %v1220 = vld [vmem:[#allocation25 + $0x820] sm:$0xff]
    %v1221 = vld [vmem:[#allocation25 + $0x828] sm:$0xff]
    %v1222 = vld [vmem:[#allocation25 + $0x830] sm:$0xff]
    %v1223 = vld [vmem:[#allocation25 + $0x838] sm:$0xff]
    %v1224 = vld [vmem:[#allocation25 + $0x840] sm:$0xff]
    %v1225 = vld [vmem:[#allocation25 + $0x848] sm:$0xff]
    %v1226 = vld [vmem:[#allocation25 + $0x850] sm:$0xff]
    %v1227 = vld [vmem:[#allocation25 + $0x858] sm:$0xff]
    %v1228 = vld [vmem:[#allocation25 + $0x860] sm:$0xff]
    %v1229 = vld [vmem:[#allocation25 + $0x868] sm:$0xff]
    %v1230 = vld [vmem:[#allocation25 + $0x870] sm:$0xff]
    %v1231 = vld [vmem:[#allocation25 + $0x878] sm:$0xff]
    %v1232 = vld [vmem:[#allocation25 + $0x880] sm:$0xff]
    %v1233 = vld [vmem:[#allocation25 + $0x888] sm:$0xff]
    %v1234 = vld [vmem:[#allocation25 + $0x890] sm:$0xff]
    %v1235 = vld [vmem:[#allocation25 + $0x898] sm:$0xff]
    %v1236 = vld [vmem:[#allocation25 + $0x8a0] sm:$0xff]
    %v1237 = vld [vmem:[#allocation25 + $0x8a8] sm:$0xff]
    %v1238 = vld [vmem:[#allocation25 + $0x8b0] sm:$0xff]
    %v1239 = vld [vmem:[#allocation25 + $0x8b8] sm:$0xff]
    %v1240 = vld [vmem:[#allocation25 + $0x8c0] sm:$0xff]
    %v1241 = vld [vmem:[#allocation25 + $0x8c8] sm:$0xff]
    %v1242 = vld [vmem:[#allocation25 + $0x8d0] sm:$0xff]
    %v1243 = vld [vmem:[#allocation25 + $0x8d8] sm:$0xff]
    %v1244 = vld [vmem:[#allocation25 + $0x8e0] sm:$0xff]
    %v1245 = vld [vmem:[#allocation25 + $0x8e8] sm:$0xff]
    %v1246 = vld [vmem:[#allocation25 + $0x8f0] sm:$0xff]
    %v1247 = vld [vmem:[#allocation25 + $0x8f8] sm:$0xff]
    %v1248 = vld [vmem:[#allocation25 + $0x900] sm:$0xff]
    %v1249 = vld [vmem:[#allocation25 + $0x908] sm:$0xff]
    %v1250 = vld [vmem:[#allocation25 + $0x910] sm:$0xff]
    %v1251 = vld [vmem:[#allocation25 + $0x918] sm:$0xff]
    %v1252 = vld [vmem:[#allocation25 + $0x920] sm:$0xff]
    %v1253 = vld [vmem:[#allocation25 + $0x928] sm:$0xff]
    %v1254 = vld [vmem:[#allocation25 + $0x930] sm:$0xff]
    %v1255 = vld [vmem:[#allocation25 + $0x938] sm:$0xff]
    %v1256 = vld [vmem:[#allocation25 + $0x940] sm:$0xff]
    %v1257 = vld [vmem:[#allocation25 + $0x948] sm:$0xff]
    %v1258 = vld [vmem:[#allocation25 + $0x950] sm:$0xff]
    %v1259 = vld [vmem:[#allocation25 + $0x958] sm:$0xff]
    %v1260 = vld [vmem:[#allocation25 + $0x960] sm:$0xff]
    %v1261 = vld [vmem:[#allocation25 + $0x968] sm:$0xff]
    %v1262 = vld [vmem:[#allocation25 + $0x970] sm:$0xff]
    %v1263 = vld [vmem:[#allocation25 + $0x978] sm:$0xff]
    %v1264 = vld [vmem:[#allocation25 + $0x980] sm:$0xff]
    %v1265 = vld [vmem:[#allocation25 + $0x988] sm:$0xff]
    %v1266 = vld [vmem:[#allocation25 + $0x990] sm:$0xff]
    %v1267 = vld [vmem:[#allocation25 + $0x998] sm:$0xff]
    %v1268 = vld [vmem:[#allocation25 + $0x9a0] sm:$0xff]
    %v1269 = vld [vmem:[#allocation25 + $0x9a8] sm:$0xff]
    %v1270 = vld [vmem:[#allocation25 + $0x9b0] sm:$0xff]
    %v1271 = vld [vmem:[#allocation25 + $0x9b8] sm:$0xff]
    %v1272 = vld [vmem:[#allocation25 + $0x9c0] sm:$0xff]
    %v1273 = vld [vmem:[#allocation25 + $0x9c8] sm:$0xff]
    %v1274 = vld [vmem:[#allocation25 + $0x9d0] sm:$0xff]
    %v1275 = vld [vmem:[#allocation25 + $0x9d8] sm:$0xff]
    %v1276 = vld [vmem:[#allocation25 + $0x9e0] sm:$0xff]
    %v1277 = vld [vmem:[#allocation25 + $0x9e8] sm:$0xff]
    %v1278 = vld [vmem:[#allocation25 + $0x9f0] sm:$0xff]
    %v1279 = vld [vmem:[#allocation25 + $0x9f8] sm:$0xff]
    %v1280 = vld [vmem:[#allocation25 + $0xa00] sm:$0xff]
    %v1281 = vld [vmem:[#allocation25 + $0xa08] sm:$0xff]
    %v1282 = vld [vmem:[#allocation25 + $0xa10] sm:$0xff]
    %v1283 = vld [vmem:[#allocation25 + $0xa18] sm:$0xff]
    %v1284 = vld [vmem:[#allocation25 + $0xa20] sm:$0xff]
    %v1285 = vld [vmem:[#allocation25 + $0xa28] sm:$0xff]
    %v1286 = vld [vmem:[#allocation25 + $0xa30] sm:$0xff]
    %v1287 = vld [vmem:[#allocation25 + $0xa38] sm:$0xff]
    %v1288 = vld [vmem:[#allocation25 + $0xa40] sm:$0xff]
    %v1289 = vld [vmem:[#allocation25 + $0xa48] sm:$0xff]
    %v1290 = vld [vmem:[#allocation25 + $0xa50] sm:$0xff]
    %v1291 = vld [vmem:[#allocation25 + $0xa58] sm:$0xff]
    %v1292 = vld [vmem:[#allocation25 + $0xa60] sm:$0xff]
    %v1293 = vld [vmem:[#allocation25 + $0xa68] sm:$0xff]
    %v1294 = vld [vmem:[#allocation25 + $0xa70] sm:$0xff]
    %v1295 = vld [vmem:[#allocation25 + $0xa78] sm:$0xff]
    %v1296 = vld [vmem:[#allocation25 + $0xa80] sm:$0xff]
    %v1297 = vld [vmem:[#allocation25 + $0xa88] sm:$0xff]
    %v1298 = vld [vmem:[#allocation25 + $0xa90] sm:$0xff]
    %v1299 = vld [vmem:[#allocation25 + $0xa98] sm:$0xff]
    %v1300 = vld [vmem:[#allocation25 + $0xaa0] sm:$0xff]
    %v1301 = vld [vmem:[#allocation25 + $0xaa8] sm:$0xff]
    %v1302 = vld [vmem:[#allocation25 + $0xab0] sm:$0xff]
    %v1303 = vld [vmem:[#allocation25 + $0xab8] sm:$0xff]
    %v1304 = vld [vmem:[#allocation25 + $0xac0] sm:$0xff]
    %v1305 = vld [vmem:[#allocation25 + $0xac8] sm:$0xff]
    %v1306 = vld [vmem:[#allocation25 + $0xad0] sm:$0xff]
    %v1307 = vld [vmem:[#allocation25 + $0xad8] sm:$0xff]
    %v1308 = vld [vmem:[#allocation25 + $0xae0] sm:$0xff]
    %v1309 = vld [vmem:[#allocation25 + $0xae8] sm:$0xff]
    %v1310 = vld [vmem:[#allocation25 + $0xaf0] sm:$0xff]
    %v1311 = vld [vmem:[#allocation25 + $0xaf8] sm:$0xff]
    %v1312 = vld [vmem:[#allocation25 + $0xb00] sm:$0xff]
    %v1313 = vld [vmem:[#allocation25 + $0xb08] sm:$0xff]
    %v1314 = vld [vmem:[#allocation25 + $0xb10] sm:$0xff]
    %v1315 = vld [vmem:[#allocation25 + $0xb18] sm:$0xff]
    %v1316 = vld [vmem:[#allocation25 + $0xb20] sm:$0xff]
    %v1317 = vld [vmem:[#allocation25 + $0xb28] sm:$0xff]
    %v1318 = vld [vmem:[#allocation25 + $0xb30] sm:$0xff]
    %v1319 = vld [vmem:[#allocation25 + $0xb38] sm:$0xff]
    %v1320 = vld [vmem:[#allocation25 + $0xb40] sm:$0xff]
    %v1321 = vld [vmem:[#allocation25 + $0xb48] sm:$0xff]
    %v1322 = vld [vmem:[#allocation25 + $0xb50] sm:$0xff]
    %v1323 = vld [vmem:[#allocation25 + $0xb58] sm:$0xff]
    %v1324 = vld [vmem:[#allocation25 + $0xb60] sm:$0xff]
    %v1325 = vld [vmem:[#allocation25 + $0xb68] sm:$0xff]
    %v1326 = vld [vmem:[#allocation25 + $0xb70] sm:$0xff]
    %v1327 = vld [vmem:[#allocation25 + $0xb78] sm:$0xff]
    %v1328 = vld [vmem:[#allocation25 + $0xb80] sm:$0xff]
    %v1329 = vld [vmem:[#allocation25 + $0xb88] sm:$0xff]
    %v1330 = vld [vmem:[#allocation25 + $0xb90] sm:$0xff]
    %v1331 = vld [vmem:[#allocation25 + $0xb98] sm:$0xff]
    %v1332 = vld [vmem:[#allocation25 + $0xba0] sm:$0xff]
    %v1333 = vld [vmem:[#allocation25 + $0xba8] sm:$0xff]
    %v1334 = vld [vmem:[#allocation25 + $0xbb0] sm:$0xff]
    %v1335 = vld [vmem:[#allocation25 + $0xbb8] sm:$0xff]
    %v1336 = vld [vmem:[#allocation25 + $0xbc0] sm:$0xff]
    %v1337 = vld [vmem:[#allocation25 + $0xbc8] sm:$0xff]
    %v1338 = vld [vmem:[#allocation25 + $0xbd0] sm:$0xff]
    %v1339 = vld [vmem:[#allocation25 + $0xbd8] sm:$0xff]
    %v1340 = vld [vmem:[#allocation25 + $0xbe0] sm:$0xff]
    %v1341 = vld [vmem:[#allocation25 + $0xbe8] sm:$0xff]
    %v1342 = vld [vmem:[#allocation25 + $0xbf0] sm:$0xff]
    %v1343 = vld [vmem:[#allocation25 + $0xbf8] sm:$0xff]
    %v1344 = vld [vmem:[#allocation25 + $0xc00] sm:$0xff]
    %v1345 = vld [vmem:[#allocation25 + $0xc08] sm:$0xff]
    %v1346 = vld [vmem:[#allocation25 + $0xc10] sm:$0xff]
    %v1347 = vld [vmem:[#allocation25 + $0xc18] sm:$0xff]
    %v1348 = vld [vmem:[#allocation25 + $0xc20] sm:$0xff]
    %v1349 = vld [vmem:[#allocation25 + $0xc28] sm:$0xff]
    %v1350 = vld [vmem:[#allocation25 + $0xc30] sm:$0xff]
    %v1351 = vld [vmem:[#allocation25 + $0xc38] sm:$0xff]
    %v1352 = vld [vmem:[#allocation25 + $0xc40] sm:$0xff]
    %v1353 = vld [vmem:[#allocation25 + $0xc48] sm:$0xff]
    %v1354 = vld [vmem:[#allocation25 + $0xc50] sm:$0xff]
    %v1355 = vld [vmem:[#allocation25 + $0xc58] sm:$0xff]
    %v1356 = vld [vmem:[#allocation25 + $0xc60] sm:$0xff]
    %v1357 = vld [vmem:[#allocation25 + $0xc68] sm:$0xff]
    %v1358 = vld [vmem:[#allocation25 + $0xc70] sm:$0xff]
    %v1359 = vld [vmem:[#allocation25 + $0xc78] sm:$0xff]
    %v1360 = vld [vmem:[#allocation25 + $0xc80] sm:$0xff]
    %v1361 = vld [vmem:[#allocation25 + $0xc88] sm:$0xff]
    %v1362 = vld [vmem:[#allocation25 + $0xc90] sm:$0xff]
    %v1363 = vld [vmem:[#allocation25 + $0xc98] sm:$0xff]
    %v1364 = vld [vmem:[#allocation25 + $0xca0] sm:$0xff]
    %v1365 = vld [vmem:[#allocation25 + $0xca8] sm:$0xff]
    %v1366 = vld [vmem:[#allocation25 + $0xcb0] sm:$0xff]
    %v1367 = vld [vmem:[#allocation25 + $0xcb8] sm:$0xff]
    %v1368 = vld [vmem:[#allocation25 + $0xcc0] sm:$0xff]
    %v1369 = vld [vmem:[#allocation25 + $0xcc8] sm:$0xff]
    %v1370 = vld [vmem:[#allocation25 + $0xcd0] sm:$0xff]
    %v1371 = vld [vmem:[#allocation25 + $0xcd8] sm:$0xff]
    %v1372 = vld [vmem:[#allocation25 + $0xce0] sm:$0xff]
    %v1373 = vld [vmem:[#allocation25 + $0xce8] sm:$0xff]
    %v1374 = vld [vmem:[#allocation25 + $0xcf0] sm:$0xff]
    %v1375 = vld [vmem:[#allocation25 + $0xcf8] sm:$0xff]
    %v1376 = vld [vmem:[#allocation25 + $0xd00] sm:$0xff]
    %v1377 = vld [vmem:[#allocation25 + $0xd08] sm:$0xff]
    %v1378 = vld [vmem:[#allocation25 + $0xd10] sm:$0xff]
    %v1379 = vld [vmem:[#allocation25 + $0xd18] sm:$0xff]
    %v1380 = vld [vmem:[#allocation25 + $0xd20] sm:$0xff]
    %v1381 = vld [vmem:[#allocation25 + $0xd28] sm:$0xff]
    %v1382 = vld [vmem:[#allocation25 + $0xd30] sm:$0xff]
    %v1383 = vld [vmem:[#allocation25 + $0xd38] sm:$0xff]
    %v1384 = vld [vmem:[#allocation25 + $0xd40] sm:$0xff]
    %v1385 = vld [vmem:[#allocation25 + $0xd48] sm:$0xff]
    %v1386 = vld [vmem:[#allocation25 + $0xd50] sm:$0xff]
    %v1387 = vld [vmem:[#allocation25 + $0xd58] sm:$0xff]
    %v1388 = vld [vmem:[#allocation25 + $0xd60] sm:$0xff]
    %v1389 = vld [vmem:[#allocation25 + $0xd68] sm:$0xff]
    %v1390 = vld [vmem:[#allocation25 + $0xd70] sm:$0xff]
    %v1391 = vld [vmem:[#allocation25 + $0xd78] sm:$0xff]
    %v1392 = vld [vmem:[#allocation25 + $0xd80] sm:$0xff]
    %v1393 = vld [vmem:[#allocation25 + $0xd88] sm:$0xff]
    %v1394 = vld [vmem:[#allocation25 + $0xd90] sm:$0xff]
    %v1395 = vld [vmem:[#allocation25 + $0xd98] sm:$0xff]
    %v1396 = vld [vmem:[#allocation25 + $0xda0] sm:$0xff]
    %v1397 = vld [vmem:[#allocation25 + $0xda8] sm:$0xff]
    %v1398 = vld [vmem:[#allocation25 + $0xdb0] sm:$0xff]
    %v1399 = vld [vmem:[#allocation25 + $0xdb8] sm:$0xff]
    %v1400 = vld [vmem:[#allocation25 + $0xdc0] sm:$0xff]
    %v1401 = vld [vmem:[#allocation25 + $0xdc8] sm:$0xff]
    %v1402 = vld [vmem:[#allocation25 + $0xdd0] sm:$0xff]
    %v1403 = vld [vmem:[#allocation25 + $0xdd8] sm:$0xff]
    %v1404 = vld [vmem:[#allocation25 + $0xde0] sm:$0xff]
    %v1405 = vld [vmem:[#allocation25 + $0xde8] sm:$0xff]
    %v1406 = vld [vmem:[#allocation25 + $0xdf0] sm:$0xff]
    %v1407 = vld [vmem:[#allocation25 + $0xdf8] sm:$0xff]
    %v1408 = vld [vmem:[#allocation25 + $0xe00] sm:$0xff]
    %v1409 = vld [vmem:[#allocation25 + $0xe08] sm:$0xff]
    %v1410 = vld [vmem:[#allocation25 + $0xe10] sm:$0xff]
    %v1411 = vld [vmem:[#allocation25 + $0xe18] sm:$0xff]
    %v1412 = vld [vmem:[#allocation25 + $0xe20] sm:$0xff]
    %v1413 = vld [vmem:[#allocation25 + $0xe28] sm:$0xff]
    %v1414 = vld [vmem:[#allocation25 + $0xe30] sm:$0xff]
    %v1415 = vld [vmem:[#allocation25 + $0xe38] sm:$0xff]
    %v1416 = vld [vmem:[#allocation25 + $0xe40] sm:$0xff]
    %v1417 = vld [vmem:[#allocation25 + $0xe48] sm:$0xff]
    %v1418 = vld [vmem:[#allocation25 + $0xe50] sm:$0xff]
    %v1419 = vld [vmem:[#allocation25 + $0xe58] sm:$0xff]
    %v1420 = vld [vmem:[#allocation25 + $0xe60] sm:$0xff]
    %v1421 = vld [vmem:[#allocation25 + $0xe68] sm:$0xff]
    %v1422 = vld [vmem:[#allocation25 + $0xe70] sm:$0xff]
    %v1423 = vld [vmem:[#allocation25 + $0xe78] sm:$0xff]
    %v1424 = vld [vmem:[#allocation25 + $0xe80] sm:$0xff]
    %v1425 = vld [vmem:[#allocation25 + $0xe88] sm:$0xff]
    %v1426 = vld [vmem:[#allocation25 + $0xe90] sm:$0xff]
    %v1427 = vld [vmem:[#allocation25 + $0xe98] sm:$0xff]
    %v1428 = vld [vmem:[#allocation25 + $0xea0] sm:$0xff]
    %v1429 = vld [vmem:[#allocation25 + $0xea8] sm:$0xff]
    %v1430 = vld [vmem:[#allocation25 + $0xeb0] sm:$0xff]
    %v1431 = vld [vmem:[#allocation25 + $0xeb8] sm:$0xff]
    %v1432 = vld [vmem:[#allocation25 + $0xec0] sm:$0xff]
    %v1433 = vld [vmem:[#allocation25 + $0xec8] sm:$0xff]
    %v1434 = vld [vmem:[#allocation25 + $0xed0] sm:$0xff]
    %v1435 = vld [vmem:[#allocation25 + $0xed8] sm:$0xff]
    %v1436 = vld [vmem:[#allocation25 + $0xee0] sm:$0xff]
    %v1437 = vld [vmem:[#allocation25 + $0xee8] sm:$0xff]
    %v1438 = vld [vmem:[#allocation25 + $0xef0] sm:$0xff]
    %v1439 = vld [vmem:[#allocation25 + $0xef8] sm:$0xff]
    %v1440 = vld [vmem:[#allocation25 + $0xf00] sm:$0xff]
    %v1441 = vld [vmem:[#allocation25 + $0xf08] sm:$0xff]
    %v1442 = vld [vmem:[#allocation25 + $0xf10] sm:$0xff]
    %v1443 = vld [vmem:[#allocation25 + $0xf18] sm:$0xff]
    %v1444 = vld [vmem:[#allocation25 + $0xf20] sm:$0xff]
    %v1445 = vld [vmem:[#allocation25 + $0xf28] sm:$0xff]
    %v1446 = vld [vmem:[#allocation25 + $0xf30] sm:$0xff]
    %v1447 = vld [vmem:[#allocation25 + $0xf38] sm:$0xff]
    %v1448 = vld [vmem:[#allocation25 + $0xf40] sm:$0xff]
    %v1449 = vld [vmem:[#allocation25 + $0xf48] sm:$0xff]
    %v1450 = vld [vmem:[#allocation25 + $0xf50] sm:$0xff]
    %v1451 = vld [vmem:[#allocation25 + $0xf58] sm:$0xff]
    %v1452 = vld [vmem:[#allocation25 + $0xf60] sm:$0xff]
    %v1453 = vld [vmem:[#allocation25 + $0xf68] sm:$0xff]
    %v1454 = vld [vmem:[#allocation25 + $0xf70] sm:$0xff]
    %v1455 = vld [vmem:[#allocation25 + $0xf78] sm:$0xff]
    %v1456 = vld [vmem:[#allocation25 + $0xf80] sm:$0xff]
    %v1457 = vld [vmem:[#allocation25 + $0xf88] sm:$0xff]
    %v1458 = vld [vmem:[#allocation25 + $0xf90] sm:$0xff]
    %v1459 = vld [vmem:[#allocation25 + $0xf98] sm:$0xff]
    %v1460 = vld [vmem:[#allocation25 + $0xfa0] sm:$0xff]
    %v1461 = vld [vmem:[#allocation25 + $0xfa8] sm:$0xff]
    %v1462 = vld [vmem:[#allocation25 + $0xfb0] sm:$0xff]
    %v1463 = vld [vmem:[#allocation25 + $0xfb8] sm:$0xff]
    %v1464 = vld [vmem:[#allocation25 + $0xfc0] sm:$0xff]
    %v1465 = vld [vmem:[#allocation25 + $0xfc8] sm:$0xff]
    %v1466 = vld [vmem:[#allocation25 + $0xfd0] sm:$0xff]
    %v1467 = vld [vmem:[#allocation25 + $0xfd8] sm:$0xff]
    %v1468 = vld [vmem:[#allocation25 + $0xfe0] sm:$0xff]
    %v1469 = vld [vmem:[#allocation25 + $0xfe8] sm:$0xff]
    %v1470 = vld [vmem:[#allocation25 + $0xff0] sm:$0xff]
    %v1471 = vld [vmem:[#allocation25 + $0xff8] sm:$0xff]
    %v1472 = vld [vmem:[#allocation25 + $0x1000] sm:$0xff]
    %v1473 = vld [vmem:[#allocation25 + $0x1008] sm:$0xff]
    %v1474 = vld [vmem:[#allocation25 + $0x1010] sm:$0xff]
    %v1475 = vld [vmem:[#allocation25 + $0x1018] sm:$0xff]
    %v1476 = vld [vmem:[#allocation25 + $0x1020] sm:$0xff]
    %v1477 = vld [vmem:[#allocation25 + $0x1028] sm:$0xff]
    %v1478 = vld [vmem:[#allocation25 + $0x1030] sm:$0xff]
    %v1479 = vld [vmem:[#allocation25 + $0x1038] sm:$0xff]
    %v1480 = vld [vmem:[#allocation25 + $0x1040] sm:$0xff]
    %v1481 = vld [vmem:[#allocation25 + $0x1048] sm:$0xff]
    %v1482 = vld [vmem:[#allocation25 + $0x1050] sm:$0xff]
    %v1483 = vld [vmem:[#allocation25 + $0x1058] sm:$0xff]
    %v1484 = vld [vmem:[#allocation25 + $0x1060] sm:$0xff]
    %v1485 = vld [vmem:[#allocation25 + $0x1068] sm:$0xff]
    %v1486 = vld [vmem:[#allocation25 + $0x1070] sm:$0xff]
    %v1487 = vld [vmem:[#allocation25 + $0x1078] sm:$0xff]
    %v1488 = vld [vmem:[#allocation25 + $0x1080] sm:$0xff]
    %v1489 = vld [vmem:[#allocation25 + $0x1088] sm:$0xff]
    %v1490 = vld [vmem:[#allocation25 + $0x1090] sm:$0xff]
    %v1491 = vld [vmem:[#allocation25 + $0x1098] sm:$0xff]
    %v1492 = vld [vmem:[#allocation25 + $0x10a0] sm:$0xff]
    %v1493 = vld [vmem:[#allocation25 + $0x10a8] sm:$0xff]
    %v1494 = vld [vmem:[#allocation25 + $0x10b0] sm:$0xff]
    %v1495 = vld [vmem:[#allocation25 + $0x10b8] sm:$0xff]
    %v1496 = vld [vmem:[#allocation25 + $0x10c0] sm:$0xff]
    %v1497 = vld [vmem:[#allocation25 + $0x10c8] sm:$0xff]
    %v1498 = vld [vmem:[#allocation25 + $0x10d0] sm:$0xff]
    %v1499 = vld [vmem:[#allocation25 + $0x10d8] sm:$0xff]
    %v1500 = vld [vmem:[#allocation25 + $0x10e0] sm:$0xff]
    %v1501 = vld [vmem:[#allocation25 + $0x10e8] sm:$0xff]
    %v1502 = vld [vmem:[#allocation25 + $0x10f0] sm:$0xff]
    %v1503 = vld [vmem:[#allocation25 + $0x10f8] sm:$0xff]
    %v1504 = vld [vmem:[#allocation25 + $0x1100] sm:$0xff]
    %v1505 = vld [vmem:[#allocation25 + $0x1108] sm:$0xff]
    %v1506 = vld [vmem:[#allocation25 + $0x1110] sm:$0xff]
    %v1507 = vld [vmem:[#allocation25 + $0x1118] sm:$0xff]
    %v1508 = vld [vmem:[#allocation25 + $0x1120] sm:$0xff]
    %v1509 = vld [vmem:[#allocation25 + $0x1128] sm:$0xff]
    %v1510 = vld [vmem:[#allocation25 + $0x1130] sm:$0xff]
    %v1511 = vld [vmem:[#allocation25 + $0x1138] sm:$0xff]
    %v1512 = vld [vmem:[#allocation25 + $0x1140] sm:$0xff]
    %v1513 = vld [vmem:[#allocation25 + $0x1148] sm:$0xff]
    %v1514 = vld [vmem:[#allocation25 + $0x1150] sm:$0xff]
    %v1515 = vld [vmem:[#allocation25 + $0x1158] sm:$0xff]
    %v1516 = vld [vmem:[#allocation25 + $0x1160] sm:$0xff]
    %v1517 = vld [vmem:[#allocation25 + $0x1168] sm:$0xff]
    %v1518 = vld [vmem:[#allocation25 + $0x1170] sm:$0xff]
    %v1519 = vld [vmem:[#allocation25 + $0x1178] sm:$0xff]
    %v1520 = vld [vmem:[#allocation25 + $0x1180] sm:$0xff]
    %v1521 = vld [vmem:[#allocation25 + $0x1188] sm:$0xff]
    %v1522 = vld [vmem:[#allocation25 + $0x1190] sm:$0xff]
    %v1523 = vld [vmem:[#allocation25 + $0x1198] sm:$0xff]
    %v1524 = vld [vmem:[#allocation25 + $0x11a0] sm:$0xff]
    %v1525 = vld [vmem:[#allocation25 + $0x11a8] sm:$0xff]
    %v1526 = vld [vmem:[#allocation25 + $0x11b0] sm:$0xff]
    %v1527 = vld [vmem:[#allocation25 + $0x11b8] sm:$0xff]
    %v1528 = vld [vmem:[#allocation25 + $0x11c0] sm:$0xff]
    %v1529 = vld [vmem:[#allocation25 + $0x11c8] sm:$0xff]
    %v1530 = vld [vmem:[#allocation25 + $0x11d0] sm:$0xff]
    %v1531 = vld [vmem:[#allocation25 + $0x11d8] sm:$0xff]
    %v1532 = vld [vmem:[#allocation25 + $0x11e0] sm:$0xff]
    %v1533 = vld [vmem:[#allocation25 + $0x11e8] sm:$0xff]
    %v1534 = vld [vmem:[#allocation25 + $0x11f0] sm:$0xff]
    %v1535 = vld [vmem:[#allocation25 + $0x11f8] sm:$0xff]
    %v1536 = vld [vmem:[#allocation25 + $0x1200] sm:$0xff]
    %v1537 = vld [vmem:[#allocation25 + $0x1208] sm:$0xff]
    %v1538 = vld [vmem:[#allocation25 + $0x1210] sm:$0xff]
    %v1539 = vld [vmem:[#allocation25 + $0x1218] sm:$0xff]
    %v1540 = vld [vmem:[#allocation25 + $0x1220] sm:$0xff]
    %v1541 = vld [vmem:[#allocation25 + $0x1228] sm:$0xff]
    %v1542 = vld [vmem:[#allocation25 + $0x1230] sm:$0xff]
    %v1543 = vld [vmem:[#allocation25 + $0x1238] sm:$0xff]
    %v1544 = vld [vmem:[#allocation25 + $0x1240] sm:$0xff]
    %v1545 = vld [vmem:[#allocation25 + $0x1248] sm:$0xff]
    %v1546 = vld [vmem:[#allocation25 + $0x1250] sm:$0xff]
    %v1547 = vld [vmem:[#allocation25 + $0x1258] sm:$0xff]
    %v1548 = vld [vmem:[#allocation25 + $0x1260] sm:$0xff]
    %v1549 = vld [vmem:[#allocation25 + $0x1268] sm:$0xff]
    %v1550 = vld [vmem:[#allocation25 + $0x1270] sm:$0xff]
    %v1551 = vld [vmem:[#allocation25 + $0x1278] sm:$0xff]
    %v1552 = vld [vmem:[#allocation25 + $0x1280] sm:$0xff]
    %v1553 = vld [vmem:[#allocation25 + $0x1288] sm:$0xff]
    %v1554 = vld [vmem:[#allocation25 + $0x1290] sm:$0xff]
    %v1555 = vld [vmem:[#allocation25 + $0x1298] sm:$0xff]
    %v1556 = vld [vmem:[#allocation25 + $0x12a0] sm:$0xff]
    %v1557 = vld [vmem:[#allocation25 + $0x12a8] sm:$0xff]
    %v1558 = vld [vmem:[#allocation25 + $0x12b0] sm:$0xff]
    %v1559 = vld [vmem:[#allocation25 + $0x12b8] sm:$0xff]
    %v1560 = vld [vmem:[#allocation25 + $0x12c0] sm:$0xff]
    %v1561 = vld [vmem:[#allocation25 + $0x12c8] sm:$0xff]
    %v1562 = vld [vmem:[#allocation25 + $0x12d0] sm:$0xff]
    %v1563 = vld [vmem:[#allocation25 + $0x12d8] sm:$0xff]
    %v1564 = vld [vmem:[#allocation25 + $0x12e0] sm:$0xff]
    %v1565 = vld [vmem:[#allocation25 + $0x12e8] sm:$0xff]
    %v1566 = vld [vmem:[#allocation25 + $0x12f0] sm:$0xff]
    %v1567 = vld [vmem:[#allocation25 + $0x12f8] sm:$0xff]
    %v1568 = vld [vmem:[#allocation25 + $0x1300] sm:$0xff]
    %v1569 = vld [vmem:[#allocation25 + $0x1308] sm:$0xff]
    %v1570 = vld [vmem:[#allocation25 + $0x1310] sm:$0xff]
    %v1571 = vld [vmem:[#allocation25 + $0x1318] sm:$0xff]
    %v1572 = vld [vmem:[#allocation25 + $0x1320] sm:$0xff]
    %v1573 = vld [vmem:[#allocation25 + $0x1328] sm:$0xff]
    %v1574 = vld [vmem:[#allocation25 + $0x1330] sm:$0xff]
    %v1575 = vld [vmem:[#allocation25 + $0x1338] sm:$0xff]
    %v1576 = vld [vmem:[#allocation25 + $0x1340] sm:$0xff]
    %v1577 = vld [vmem:[#allocation25 + $0x1348] sm:$0xff]
    %v1578 = vld [vmem:[#allocation25 + $0x1350] sm:$0xff]
    %v1579 = vld [vmem:[#allocation25 + $0x1358] sm:$0xff]
    %v1580 = vld [vmem:[#allocation25 + $0x1360] sm:$0xff]
    %v1581 = vld [vmem:[#allocation25 + $0x1368] sm:$0xff]
    %v1582 = vld [vmem:[#allocation25 + $0x1370] sm:$0xff]
    %v1583 = vld [vmem:[#allocation25 + $0x1378] sm:$0xff]
    %v1584 = vld [vmem:[#allocation25 + $0x1380] sm:$0xff]
    %v1585 = vld [vmem:[#allocation25 + $0x1388] sm:$0xff]
    %v1586 = vld [vmem:[#allocation25 + $0x1390] sm:$0xff]
    %v1587 = vld [vmem:[#allocation25 + $0x1398] sm:$0xff]
    %v1588 = vld [vmem:[#allocation25 + $0x13a0] sm:$0xff]
    %v1589 = vld [vmem:[#allocation25 + $0x13a8] sm:$0xff]
    %v1590 = vld [vmem:[#allocation25 + $0x13b0] sm:$0xff]
    %v1591 = vld [vmem:[#allocation25 + $0x13b8] sm:$0xff]
    %v1592 = vld [vmem:[#allocation25 + $0x13c0] sm:$0xff]
    %v1593 = vld [vmem:[#allocation25 + $0x13c8] sm:$0xff]
    %v1594 = vld [vmem:[#allocation25 + $0x13d0] sm:$0xff]
    %v1595 = vld [vmem:[#allocation25 + $0x13d8] sm:$0xff]
    %v1596 = vld [vmem:[#allocation25 + $0x13e0] sm:$0xff]
    %v1597 = vld [vmem:[#allocation25 + $0x13e8] sm:$0xff]
    %v1598 = vld [vmem:[#allocation25 + $0x13f0] sm:$0xff]
    %v1599 = vld [vmem:[#allocation25 + $0x13f8] sm:$0xff]
    %v1600 = vld [vmem:[#allocation25 + $0x1400] sm:$0xff]
    %v1601 = vld [vmem:[#allocation25 + $0x1408] sm:$0xff]
    %v1602 = vld [vmem:[#allocation25 + $0x1410] sm:$0xff]
    %v1603 = vld [vmem:[#allocation25 + $0x1418] sm:$0xff]
    %v1604 = vld [vmem:[#allocation25 + $0x1420] sm:$0xff]
    %v1605 = vld [vmem:[#allocation25 + $0x1428] sm:$0xff]
    %v1606 = vld [vmem:[#allocation25 + $0x1430] sm:$0xff]
    %v1607 = vld [vmem:[#allocation25 + $0x1438] sm:$0xff]
    %v1608 = vld [vmem:[#allocation25 + $0x1440] sm:$0xff]
    %v1609 = vld [vmem:[#allocation25 + $0x1448] sm:$0xff]
    %v1610 = vld [vmem:[#allocation25 + $0x1450] sm:$0xff]
    %v1611 = vld [vmem:[#allocation25 + $0x1458] sm:$0xff]
    %v1612 = vld [vmem:[#allocation25 + $0x1460] sm:$0xff]
    %v1613 = vld [vmem:[#allocation25 + $0x1468] sm:$0xff]
    %v1614 = vld [vmem:[#allocation25 + $0x1470] sm:$0xff]
    %v1615 = vld [vmem:[#allocation25 + $0x1478] sm:$0xff]
    %v1616 = vld [vmem:[#allocation25 + $0x1480] sm:$0xff]
    %v1617 = vld [vmem:[#allocation25 + $0x1488] sm:$0xff]
    %v1618 = vld [vmem:[#allocation25 + $0x1490] sm:$0xff]
    %v1619 = vld [vmem:[#allocation25 + $0x1498] sm:$0xff]
    %v1620 = vld [vmem:[#allocation25 + $0x14a0] sm:$0xff]
    %v1621 = vld [vmem:[#allocation25 + $0x14a8] sm:$0xff]
    %v1622 = vld [vmem:[#allocation25 + $0x14b0] sm:$0xff]
    %v1623 = vld [vmem:[#allocation25 + $0x14b8] sm:$0xff]
    %v1624 = vld [vmem:[#allocation25 + $0x14c0] sm:$0xff]
    %v1625 = vld [vmem:[#allocation25 + $0x14c8] sm:$0xff]
    %v1626 = vld [vmem:[#allocation25 + $0x14d0] sm:$0xff]
    %v1627 = vld [vmem:[#allocation25 + $0x14d8] sm:$0xff]
    %v1628 = vld [vmem:[#allocation25 + $0x14e0] sm:$0xff]
    %v1629 = vld [vmem:[#allocation25 + $0x14e8] sm:$0xff]
    %v1630 = vld [vmem:[#allocation25 + $0x14f0] sm:$0xff]
    %v1631 = vld [vmem:[#allocation25 + $0x14f8] sm:$0xff]
    %v1632 = vld [vmem:[#allocation25 + $0x1500] sm:$0xff]
    %v1633 = vld [vmem:[#allocation25 + $0x1508] sm:$0xff]
    %v1634 = vld [vmem:[#allocation25 + $0x1510] sm:$0xff]
    %v1635 = vld [vmem:[#allocation25 + $0x1518] sm:$0xff]
    %v1636 = vld [vmem:[#allocation25 + $0x1520] sm:$0xff]
    %v1637 = vld [vmem:[#allocation25 + $0x1528] sm:$0xff]
    %v1638 = vld [vmem:[#allocation25 + $0x1530] sm:$0xff]
    %v1639 = vld [vmem:[#allocation25 + $0x1538] sm:$0xff]
    %v1640 = vld [vmem:[#allocation25 + $0x1540] sm:$0xff]
    %v1641 = vld [vmem:[#allocation25 + $0x1548] sm:$0xff]
    %v1642 = vld [vmem:[#allocation25 + $0x1550] sm:$0xff]
    %v1643 = vld [vmem:[#allocation25 + $0x1558] sm:$0xff]
    %v1644 = vld [vmem:[#allocation25 + $0x1560] sm:$0xff]
    %v1645 = vld [vmem:[#allocation25 + $0x1568] sm:$0xff]
    %v1646 = vld [vmem:[#allocation25 + $0x1570] sm:$0xff]
    %v1647 = vld [vmem:[#allocation25 + $0x1578] sm:$0xff]
    %v1648 = vld [vmem:[#allocation25 + $0x1580] sm:$0xff]
    %v1649 = vld [vmem:[#allocation25 + $0x1588] sm:$0xff]
    %v1650 = vld [vmem:[#allocation25 + $0x1590] sm:$0xff]
    %v1651 = vld [vmem:[#allocation25 + $0x1598] sm:$0xff]
    %v1652 = vld [vmem:[#allocation25 + $0x15a0] sm:$0xff]
    %v1653 = vld [vmem:[#allocation25 + $0x15a8] sm:$0xff]
    %v1654 = vld [vmem:[#allocation25 + $0x15b0] sm:$0xff]
    %v1655 = vld [vmem:[#allocation25 + $0x15b8] sm:$0xff]
    %v1656 = vld [vmem:[#allocation25 + $0x15c0] sm:$0xff]
    %v1657 = vld [vmem:[#allocation25 + $0x15c8] sm:$0xff]
    %v1658 = vld [vmem:[#allocation25 + $0x15d0] sm:$0xff]
    %v1659 = vld [vmem:[#allocation25 + $0x15d8] sm:$0xff]
    %v1660 = vld [vmem:[#allocation25 + $0x15e0] sm:$0xff]
    %v1661 = vld [vmem:[#allocation25 + $0x15e8] sm:$0xff]
    %v1662 = vld [vmem:[#allocation25 + $0x15f0] sm:$0xff]
    %v1663 = vld [vmem:[#allocation25 + $0x15f8] sm:$0xff]
    %v1664 = vld [vmem:[#allocation25 + $0x1600] sm:$0xff]
    %v1665 = vld [vmem:[#allocation25 + $0x1608] sm:$0xff]
    %v1666 = vld [vmem:[#allocation25 + $0x1610] sm:$0xff]
    %v1667 = vld [vmem:[#allocation25 + $0x1618] sm:$0xff]
    %v1668 = vld [vmem:[#allocation25 + $0x1620] sm:$0xff]
    %v1669 = vld [vmem:[#allocation25 + $0x1628] sm:$0xff]
    %v1670 = vld [vmem:[#allocation25 + $0x1630] sm:$0xff]
    %v1671 = vld [vmem:[#allocation25 + $0x1638] sm:$0xff]
    %v1672 = vld [vmem:[#allocation25 + $0x1640] sm:$0xff]
    %v1673 = vld [vmem:[#allocation25 + $0x1648] sm:$0xff]
    %v1674 = vld [vmem:[#allocation25 + $0x1650] sm:$0xff]
    %v1675 = vld [vmem:[#allocation25 + $0x1658] sm:$0xff]
    %v1676 = vld [vmem:[#allocation25 + $0x1660] sm:$0xff]
    %v1677 = vld [vmem:[#allocation25 + $0x1668] sm:$0xff]
    %v1678 = vld [vmem:[#allocation25 + $0x1670] sm:$0xff]
    %v1679 = vld [vmem:[#allocation25 + $0x1678] sm:$0xff]
    %v1680 = vld [vmem:[#allocation25 + $0x1680] sm:$0xff]
    %v1681 = vld [vmem:[#allocation25 + $0x1688] sm:$0xff]
    %v1682 = vld [vmem:[#allocation25 + $0x1690] sm:$0xff]
    %v1683 = vld [vmem:[#allocation25 + $0x1698] sm:$0xff]
    %v1684 = vld [vmem:[#allocation25 + $0x16a0] sm:$0xff]
    %v1685 = vld [vmem:[#allocation25 + $0x16a8] sm:$0xff]
    %v1686 = vld [vmem:[#allocation25 + $0x16b0] sm:$0xff]
    %v1687 = vld [vmem:[#allocation25 + $0x16b8] sm:$0xff]
    %v1688 = vld [vmem:[#allocation25 + $0x16c0] sm:$0xff]
    %v1689 = vld [vmem:[#allocation25 + $0x16c8] sm:$0xff]
    %v1690 = vld [vmem:[#allocation25 + $0x16d0] sm:$0xff]
    %v1691 = vld [vmem:[#allocation25 + $0x16d8] sm:$0xff]
    %v1692 = vld [vmem:[#allocation25 + $0x16e0] sm:$0xff]
    %v1693 = vld [vmem:[#allocation25 + $0x16e8] sm:$0xff]
    %v1694 = vld [vmem:[#allocation25 + $0x16f0] sm:$0xff]
    %v1695 = vld [vmem:[#allocation25 + $0x16f8] sm:$0xff]
    %v1696 = vld [vmem:[#allocation25 + $0x1700] sm:$0xff]
    %v1697 = vld [vmem:[#allocation25 + $0x1708] sm:$0xff]
    %v1698 = vld [vmem:[#allocation25 + $0x1710] sm:$0xff]
    %v1699 = vld [vmem:[#allocation25 + $0x1718] sm:$0xff]
    %v1700 = vld [vmem:[#allocation25 + $0x1720] sm:$0xff]
    %v1701 = vld [vmem:[#allocation25 + $0x1728] sm:$0xff]
    %v1702 = vld [vmem:[#allocation25 + $0x1730] sm:$0xff]
    %v1703 = vld [vmem:[#allocation25 + $0x1738] sm:$0xff]
    %v1704 = vld [vmem:[#allocation25 + $0x1740] sm:$0xff]
    %v1705 = vld [vmem:[#allocation25 + $0x1748] sm:$0xff]
    %v1706 = vld [vmem:[#allocation25 + $0x1750] sm:$0xff]
    %v1707 = vld [vmem:[#allocation25 + $0x1758] sm:$0xff]
    %v1708 = vld [vmem:[#allocation25 + $0x1760] sm:$0xff]
    %v1709 = vld [vmem:[#allocation25 + $0x1768] sm:$0xff]
    %v1710 = vld [vmem:[#allocation25 + $0x1770] sm:$0xff]
    %v1711 = vld [vmem:[#allocation25 + $0x1778] sm:$0xff]
    %v1712 = vld [vmem:[#allocation25 + $0x1780] sm:$0xff]
    %v1713 = vld [vmem:[#allocation25 + $0x1788] sm:$0xff]
    %v1714 = vld [vmem:[#allocation25 + $0x1790] sm:$0xff]
    %v1715 = vld [vmem:[#allocation25 + $0x1798] sm:$0xff]
    %v1716 = vld [vmem:[#allocation25 + $0x17a0] sm:$0xff]
    %v1717 = vld [vmem:[#allocation25 + $0x17a8] sm:$0xff]
    %v1718 = vld [vmem:[#allocation25 + $0x17b0] sm:$0xff]
    %v1719 = vld [vmem:[#allocation25 + $0x17b8] sm:$0xff]
    %v1720 = vld [vmem:[#allocation25 + $0x17c0] sm:$0xff]
    %v1721 = vld [vmem:[#allocation25 + $0x17c8] sm:$0xff]
    %v1722 = vld [vmem:[#allocation25 + $0x17d0] sm:$0xff]
    %v1723 = vld [vmem:[#allocation25 + $0x17d8] sm:$0xff]
    %v1724 = vld [vmem:[#allocation25 + $0x17e0] sm:$0xff]
    %v1725 = vld [vmem:[#allocation25 + $0x17e8] sm:$0xff]
    %v1726 = vld [vmem:[#allocation25 + $0x17f0] sm:$0xff]
    %v1727 = vld [vmem:[#allocation25 + $0x17f8] sm:$0xff]
    %v1728 = vld [vmem:[#allocation25 + $0x1800] sm:$0xff]
    %v1729 = vld [vmem:[#allocation25 + $0x1808] sm:$0xff]
    %v1730 = vld [vmem:[#allocation25 + $0x1810] sm:$0xff]
    %v1731 = vld [vmem:[#allocation25 + $0x1818] sm:$0xff]
    %v1732 = vld [vmem:[#allocation25 + $0x1820] sm:$0xff]
    %v1733 = vld [vmem:[#allocation25 + $0x1828] sm:$0xff]
    %v1734 = vld [vmem:[#allocation25 + $0x1830] sm:$0xff]
    %v1735 = vld [vmem:[#allocation25 + $0x1838] sm:$0xff]
    %v1736 = vld [vmem:[#allocation25 + $0x1840] sm:$0xff]
    %v1737 = vld [vmem:[#allocation25 + $0x1848] sm:$0xff]
    %v1738 = vld [vmem:[#allocation25 + $0x1850] sm:$0xff]
    %v1739 = vld [vmem:[#allocation25 + $0x1858] sm:$0xff]
    %v1740 = vld [vmem:[#allocation25 + $0x1860] sm:$0xff]
    %v1741 = vld [vmem:[#allocation25 + $0x1868] sm:$0xff]
    %v1742 = vld [vmem:[#allocation25 + $0x1870] sm:$0xff]
    %v1743 = vld [vmem:[#allocation25 + $0x1878] sm:$0xff]
    %v1744 = vld [vmem:[#allocation25 + $0x1880] sm:$0xff]
    %v1745 = vld [vmem:[#allocation25 + $0x1888] sm:$0xff]
    %v1746 = vld [vmem:[#allocation25 + $0x1890] sm:$0xff]
    %v1747 = vld [vmem:[#allocation25 + $0x1898] sm:$0xff]
    %v1748 = vld [vmem:[#allocation25 + $0x18a0] sm:$0xff]
    %v1749 = vld [vmem:[#allocation25 + $0x18a8] sm:$0xff]
    %v1750 = vld [vmem:[#allocation25 + $0x18b0] sm:$0xff]
    %v1751 = vld [vmem:[#allocation25 + $0x18b8] sm:$0xff]
    %v1752 = vld [vmem:[#allocation25 + $0x18c0] sm:$0xff]
    %v1753 = vld [vmem:[#allocation25 + $0x18c8] sm:$0xff]
    %v1754 = vld [vmem:[#allocation25 + $0x18d0] sm:$0xff]
    %v1755 = vld [vmem:[#allocation25 + $0x18d8] sm:$0xff]
    %v1756 = vld [vmem:[#allocation25 + $0x18e0] sm:$0xff]
    %v1757 = vld [vmem:[#allocation25 + $0x18e8] sm:$0xff]
    %v1758 = vld [vmem:[#allocation25 + $0x18f0] sm:$0xff]
    %v1759 = vld [vmem:[#allocation25 + $0x18f8] sm:$0xff]
    %v1760 = vld [vmem:[#allocation25 + $0x1900] sm:$0xff]
    %v1761 = vld [vmem:[#allocation25 + $0x1908] sm:$0xff]
    %v1762 = vld [vmem:[#allocation25 + $0x1910] sm:$0xff]
    %v1763 = vld [vmem:[#allocation25 + $0x1918] sm:$0xff]
    %v1764 = vld [vmem:[#allocation25 + $0x1920] sm:$0xff]
    %v1765 = vld [vmem:[#allocation25 + $0x1928] sm:$0xff]
    %v1766 = vld [vmem:[#allocation25 + $0x1930] sm:$0xff]
    %v1767 = vld [vmem:[#allocation25 + $0x1938] sm:$0xff]
    %v1768 = vld [vmem:[#allocation25 + $0x1940] sm:$0xff]
    %v1769 = vld [vmem:[#allocation25 + $0x1948] sm:$0xff]
    %v1770 = vld [vmem:[#allocation25 + $0x1950] sm:$0xff]
    %v1771 = vld [vmem:[#allocation25 + $0x1958] sm:$0xff]
    %v1772 = vld [vmem:[#allocation25 + $0x1960] sm:$0xff]
    %v1773 = vld [vmem:[#allocation25 + $0x1968] sm:$0xff]
    %v1774 = vld [vmem:[#allocation25 + $0x1970] sm:$0xff]
    %v1775 = vld [vmem:[#allocation25 + $0x1978] sm:$0xff]
    %v1776 = vld [vmem:[#allocation25 + $0x1980] sm:$0xff]
    %v1777 = vld [vmem:[#allocation25 + $0x1988] sm:$0xff]
    %v1778 = vld [vmem:[#allocation25 + $0x1990] sm:$0xff]
    %v1779 = vld [vmem:[#allocation25 + $0x1998] sm:$0xff]
    %v1780 = vld [vmem:[#allocation25 + $0x19a0] sm:$0xff]
    %v1781 = vld [vmem:[#allocation25 + $0x19a8] sm:$0xff]
    %v1782 = vld [vmem:[#allocation25 + $0x19b0] sm:$0xff]
    %v1783 = vld [vmem:[#allocation25 + $0x19b8] sm:$0xff]
    %v1784 = vld [vmem:[#allocation25 + $0x19c0] sm:$0xff]
    %v1785 = vld [vmem:[#allocation25 + $0x19c8] sm:$0xff]
    %v1786 = vld [vmem:[#allocation25 + $0x19d0] sm:$0xff]
    %v1787 = vld [vmem:[#allocation25 + $0x19d8] sm:$0xff]
    %v1788 = vld [vmem:[#allocation25 + $0x19e0] sm:$0xff]
    %v1789 = vld [vmem:[#allocation25 + $0x19e8] sm:$0xff]
    %v1790 = vld [vmem:[#allocation25 + $0x19f0] sm:$0xff]
    %v1791 = vld [vmem:[#allocation25 + $0x19f8] sm:$0xff]
    %v1792 = vld [vmem:[#allocation25 + $0x1a00] sm:$0xff]
    %v1793 = vld [vmem:[#allocation25 + $0x1a08] sm:$0xff]
    %v1794 = vld [vmem:[#allocation25 + $0x1a10] sm:$0xff]
    %v1795 = vld [vmem:[#allocation25 + $0x1a18] sm:$0xff]
    %v1796 = vld [vmem:[#allocation25 + $0x1a20] sm:$0xff]
    %v1797 = vld [vmem:[#allocation25 + $0x1a28] sm:$0xff]
    %v1798 = vld [vmem:[#allocation25 + $0x1a30] sm:$0xff]
    %v1799 = vld [vmem:[#allocation25 + $0x1a38] sm:$0xff]
    %v1800 = vld [vmem:[#allocation25 + $0x1a40] sm:$0xff]
    %v1801 = vld [vmem:[#allocation25 + $0x1a48] sm:$0xff]
    %v1802 = vld [vmem:[#allocation25 + $0x1a50] sm:$0xff]
    %v1803 = vld [vmem:[#allocation25 + $0x1a58] sm:$0xff]
    %v1804 = vld [vmem:[#allocation25 + $0x1a60] sm:$0xff]
    %v1805 = vld [vmem:[#allocation25 + $0x1a68] sm:$0xff]
    %v1806 = vld [vmem:[#allocation25 + $0x1a70] sm:$0xff]
    %v1807 = vld [vmem:[#allocation25 + $0x1a78] sm:$0xff]
    %v1808 = vld [vmem:[#allocation25 + $0x1a80] sm:$0xff]
    %v1809 = vld [vmem:[#allocation25 + $0x1a88] sm:$0xff]
    %v1810 = vld [vmem:[#allocation25 + $0x1a90] sm:$0xff]
    %v1811 = vld [vmem:[#allocation25 + $0x1a98] sm:$0xff]
    %v1812 = vld [vmem:[#allocation25 + $0x1aa0] sm:$0xff]
    %v1813 = vld [vmem:[#allocation25 + $0x1aa8] sm:$0xff]
    %v1814 = vld [vmem:[#allocation25 + $0x1ab0] sm:$0xff]
    %v1815 = vld [vmem:[#allocation25 + $0x1ab8] sm:$0xff]
    %v1816 = vld [vmem:[#allocation25 + $0x1ac0] sm:$0xff]
    %v1817 = vld [vmem:[#allocation25 + $0x1ac8] sm:$0xff]
    %v1818 = vld [vmem:[#allocation25 + $0x1ad0] sm:$0xff]
    %v1819 = vld [vmem:[#allocation25 + $0x1ad8] sm:$0xff]
    %v1820 = vld [vmem:[#allocation25 + $0x1ae0] sm:$0xff]
    %v1821 = vld [vmem:[#allocation25 + $0x1ae8] sm:$0xff]
    %v1822 = vld [vmem:[#allocation25 + $0x1af0] sm:$0xff]
    %v1823 = vld [vmem:[#allocation25 + $0x1af8] sm:$0xff]
    %v1824 = vld [vmem:[#allocation25 + $0x1b00] sm:$0xff]
    %v1825 = vld [vmem:[#allocation25 + $0x1b08] sm:$0xff]
    %v1826 = vld [vmem:[#allocation25 + $0x1b10] sm:$0xff]
    %v1827 = vld [vmem:[#allocation25 + $0x1b18] sm:$0xff]
    %v1828 = vld [vmem:[#allocation25 + $0x1b20] sm:$0xff]
    %v1829 = vld [vmem:[#allocation25 + $0x1b28] sm:$0xff]
    %v1830 = vld [vmem:[#allocation25 + $0x1b30] sm:$0xff]
    %v1831 = vld [vmem:[#allocation25 + $0x1b38] sm:$0xff]
    %v1832 = vld [vmem:[#allocation25 + $0x1b40] sm:$0xff]
    %v1833 = vld [vmem:[#allocation25 + $0x1b48] sm:$0xff]
    %v1834 = vld [vmem:[#allocation25 + $0x1b50] sm:$0xff]
    %v1835 = vld [vmem:[#allocation25 + $0x1b58] sm:$0xff]
    %v1836 = vld [vmem:[#allocation25 + $0x1b60] sm:$0xff]
    %v1837 = vld [vmem:[#allocation25 + $0x1b68] sm:$0xff]
    %v1838 = vld [vmem:[#allocation25 + $0x1b70] sm:$0xff]
    %v1839 = vld [vmem:[#allocation25 + $0x1b78] sm:$0xff]
    %v1840 = vld [vmem:[#allocation25 + $0x1b80] sm:$0xff]
    %v1841 = vld [vmem:[#allocation25 + $0x1b88] sm:$0xff]
    %v1842 = vld [vmem:[#allocation25 + $0x1b90] sm:$0xff]
    %v1843 = vld [vmem:[#allocation25 + $0x1b98] sm:$0xff]
    %v1844 = vld [vmem:[#allocation25 + $0x1ba0] sm:$0xff]
    %v1845 = vld [vmem:[#allocation25 + $0x1ba8] sm:$0xff]
    %v1846 = vld [vmem:[#allocation25 + $0x1bb0] sm:$0xff]
    %v1847 = vld [vmem:[#allocation25 + $0x1bb8] sm:$0xff]
    %v1848 = vld [vmem:[#allocation25 + $0x1bc0] sm:$0xff]
    %v1849 = vld [vmem:[#allocation25 + $0x1bc8] sm:$0xff]
    %v1850 = vld [vmem:[#allocation25 + $0x1bd0] sm:$0xff]
    %v1851 = vld [vmem:[#allocation25 + $0x1bd8] sm:$0xff]
    %v1852 = vld [vmem:[#allocation25 + $0x1be0] sm:$0xff]
    %v1853 = vld [vmem:[#allocation25 + $0x1be8] sm:$0xff]
    %v1854 = vld [vmem:[#allocation25 + $0x1bf0] sm:$0xff]
    %v1855 = vld [vmem:[#allocation25 + $0x1bf8] sm:$0xff]
    %v1856 = vld [vmem:[#allocation25 + $0x1c00] sm:$0xff]
    %v1857 = vld [vmem:[#allocation25 + $0x1c08] sm:$0xff]
    %v1858 = vld [vmem:[#allocation25 + $0x1c10] sm:$0xff]
    %v1859 = vld [vmem:[#allocation25 + $0x1c18] sm:$0xff]
    %v1860 = vld [vmem:[#allocation25 + $0x1c20] sm:$0xff]
    %v1861 = vld [vmem:[#allocation25 + $0x1c28] sm:$0xff]
    %v1862 = vld [vmem:[#allocation25 + $0x1c30] sm:$0xff]
    %v1863 = vld [vmem:[#allocation25 + $0x1c38] sm:$0xff]
    %v1864 = vld [vmem:[#allocation25 + $0x1c40] sm:$0xff]
    %v1865 = vld [vmem:[#allocation25 + $0x1c48] sm:$0xff]
    %v1866 = vld [vmem:[#allocation25 + $0x1c50] sm:$0xff]
    %v1867 = vld [vmem:[#allocation25 + $0x1c58] sm:$0xff]
    %v1868 = vld [vmem:[#allocation25 + $0x1c60] sm:$0xff]
    %v1869 = vld [vmem:[#allocation25 + $0x1c68] sm:$0xff]
    %v1870 = vld [vmem:[#allocation25 + $0x1c70] sm:$0xff]
    %v1871 = vld [vmem:[#allocation25 + $0x1c78] sm:$0xff]
    %v1872 = vld [vmem:[#allocation25 + $0x1c80] sm:$0xff]
    %v1873 = vld [vmem:[#allocation25 + $0x1c88] sm:$0xff]
    %v1874 = vld [vmem:[#allocation25 + $0x1c90] sm:$0xff]
    %v1875 = vld [vmem:[#allocation25 + $0x1c98] sm:$0xff]
    %v1876 = vld [vmem:[#allocation25 + $0x1ca0] sm:$0xff]
    %v1877 = vld [vmem:[#allocation25 + $0x1ca8] sm:$0xff]
    %v1878 = vld [vmem:[#allocation25 + $0x1cb0] sm:$0xff]
    %v1879 = vld [vmem:[#allocation25 + $0x1cb8] sm:$0xff]
    %v1880 = vld [vmem:[#allocation25 + $0x1cc0] sm:$0xff]
    %v1881 = vld [vmem:[#allocation25 + $0x1cc8] sm:$0xff]
    %v1882 = vld [vmem:[#allocation25 + $0x1cd0] sm:$0xff]
    %v1883 = vld [vmem:[#allocation25 + $0x1cd8] sm:$0xff]
    %v1884 = vld [vmem:[#allocation25 + $0x1ce0] sm:$0xff]
    %v1885 = vld [vmem:[#allocation25 + $0x1ce8] sm:$0xff]
    %v1886 = vld [vmem:[#allocation25 + $0x1cf0] sm:$0xff]
    %v1887 = vld [vmem:[#allocation25 + $0x1cf8] sm:$0xff]
    %v1888 = vld [vmem:[#allocation25 + $0x1d00] sm:$0xff]
    %v1889 = vld [vmem:[#allocation25 + $0x1d08] sm:$0xff]
    %v1890 = vld [vmem:[#allocation25 + $0x1d10] sm:$0xff]
    %v1891 = vld [vmem:[#allocation25 + $0x1d18] sm:$0xff]
    %v1892 = vld [vmem:[#allocation25 + $0x1d20] sm:$0xff]
    %v1893 = vld [vmem:[#allocation25 + $0x1d28] sm:$0xff]
    %v1894 = vld [vmem:[#allocation25 + $0x1d30] sm:$0xff]
    %v1895 = vld [vmem:[#allocation25 + $0x1d38] sm:$0xff]
    %v1896 = vld [vmem:[#allocation25 + $0x1d40] sm:$0xff]
    %v1897 = vld [vmem:[#allocation25 + $0x1d48] sm:$0xff]
    %v1898 = vld [vmem:[#allocation25 + $0x1d50] sm:$0xff]
    %v1899 = vld [vmem:[#allocation25 + $0x1d58] sm:$0xff]
    %v1900 = vld [vmem:[#allocation25 + $0x1d60] sm:$0xff]
    %v1901 = vld [vmem:[#allocation25 + $0x1d68] sm:$0xff]
    %v1902 = vld [vmem:[#allocation25 + $0x1d70] sm:$0xff]
    %v1903 = vld [vmem:[#allocation25 + $0x1d78] sm:$0xff]
    %v1904 = vld [vmem:[#allocation25 + $0x1d80] sm:$0xff]
    %v1905 = vld [vmem:[#allocation25 + $0x1d88] sm:$0xff]
    %v1906 = vld [vmem:[#allocation25 + $0x1d90] sm:$0xff]
    %v1907 = vld [vmem:[#allocation25 + $0x1d98] sm:$0xff]
    %v1908 = vld [vmem:[#allocation25 + $0x1da0] sm:$0xff]
    %v1909 = vld [vmem:[#allocation25 + $0x1da8] sm:$0xff]
    %v1910 = vld [vmem:[#allocation25 + $0x1db0] sm:$0xff]
    %v1911 = vld [vmem:[#allocation25 + $0x1db8] sm:$0xff]
    %v1912 = vld [vmem:[#allocation25 + $0x1dc0] sm:$0xff]
    %v1913 = vld [vmem:[#allocation25 + $0x1dc8] sm:$0xff]
    %v1914 = vld [vmem:[#allocation25 + $0x1dd0] sm:$0xff]
    %v1915 = vld [vmem:[#allocation25 + $0x1dd8] sm:$0xff]
    %v1916 = vld [vmem:[#allocation25 + $0x1de0] sm:$0xff]
    %v1917 = vld [vmem:[#allocation25 + $0x1de8] sm:$0xff]
    %v1918 = vld [vmem:[#allocation25 + $0x1df0] sm:$0xff]
    %v1919 = vld [vmem:[#allocation25 + $0x1df8] sm:$0xff]
    %v1920 = vld [vmem:[#allocation25 + $0x1e00] sm:$0xff]
    %v1921 = vld [vmem:[#allocation25 + $0x1e08] sm:$0xff]
    %v1922 = vld [vmem:[#allocation25 + $0x1e10] sm:$0xff]
    %v1923 = vld [vmem:[#allocation25 + $0x1e18] sm:$0xff]
    %v1924 = vld [vmem:[#allocation25 + $0x1e20] sm:$0xff]
    %v1925 = vld [vmem:[#allocation25 + $0x1e28] sm:$0xff]
    %v1926 = vld [vmem:[#allocation25 + $0x1e30] sm:$0xff]
    %v1927 = vld [vmem:[#allocation25 + $0x1e38] sm:$0xff]
    %v1928 = vld [vmem:[#allocation25 + $0x1e40] sm:$0xff]
    %v1929 = vld [vmem:[#allocation25 + $0x1e48] sm:$0xff]
    %v1930 = vld [vmem:[#allocation25 + $0x1e50] sm:$0xff]
    %v1931 = vld [vmem:[#allocation25 + $0x1e58] sm:$0xff]
    %v1932 = vld [vmem:[#allocation25 + $0x1e60] sm:$0xff]
    %v1933 = vld [vmem:[#allocation25 + $0x1e68] sm:$0xff]
    %v1934 = vld [vmem:[#allocation25 + $0x1e70] sm:$0xff]
    %v1935 = vld [vmem:[#allocation25 + $0x1e78] sm:$0xff]
    %v1936 = vld [vmem:[#allocation25 + $0x1e80] sm:$0xff]
    %v1937 = vld [vmem:[#allocation25 + $0x1e88] sm:$0xff]
    %v1938 = vld [vmem:[#allocation25 + $0x1e90] sm:$0xff]
    %v1939 = vld [vmem:[#allocation25 + $0x1e98] sm:$0xff]
    %v1940 = vld [vmem:[#allocation25 + $0x1ea0] sm:$0xff]
    %v1941 = vld [vmem:[#allocation25 + $0x1ea8] sm:$0xff]
    %v1942 = vld [vmem:[#allocation25 + $0x1eb0] sm:$0xff]
    %v1943 = vld [vmem:[#allocation25 + $0x1eb8] sm:$0xff]
    %v1944 = vld [vmem:[#allocation25 + $0x1ec0] sm:$0xff]
    %v1945 = vld [vmem:[#allocation25 + $0x1ec8] sm:$0xff]
    %v1946 = vld [vmem:[#allocation25 + $0x1ed0] sm:$0xff]
    %v1947 = vld [vmem:[#allocation25 + $0x1ed8] sm:$0xff]
    %v1948 = vld [vmem:[#allocation25 + $0x1ee0] sm:$0xff]
    %v1949 = vld [vmem:[#allocation25 + $0x1ee8] sm:$0xff]
    %v1950 = vld [vmem:[#allocation25 + $0x1ef0] sm:$0xff]
    %v1951 = vld [vmem:[#allocation25 + $0x1ef8] sm:$0xff]
    %v1952 = vld [vmem:[#allocation25 + $0x1f00] sm:$0xff]
    %v1953 = vld [vmem:[#allocation25 + $0x1f08] sm:$0xff]
    %v1954 = vld [vmem:[#allocation25 + $0x1f10] sm:$0xff]
    %v1955 = vld [vmem:[#allocation25 + $0x1f18] sm:$0xff]
    %v1956 = vld [vmem:[#allocation25 + $0x1f20] sm:$0xff]
    %v1957 = vld [vmem:[#allocation25 + $0x1f28] sm:$0xff]
    %v1958 = vld [vmem:[#allocation25 + $0x1f30] sm:$0xff]
    %v1959 = vld [vmem:[#allocation25 + $0x1f38] sm:$0xff]
    %v1960 = vld [vmem:[#allocation25 + $0x1f40] sm:$0xff]
    %v1961 = vld [vmem:[#allocation25 + $0x1f48] sm:$0xff]
    %v1962 = vld [vmem:[#allocation25 + $0x1f50] sm:$0xff]
    %v1963 = vld [vmem:[#allocation25 + $0x1f58] sm:$0xff]
    %v1964 = vld [vmem:[#allocation25 + $0x1f60] sm:$0xff]
    %v1965 = vld [vmem:[#allocation25 + $0x1f68] sm:$0xff]
    %v1966 = vld [vmem:[#allocation25 + $0x1f70] sm:$0xff]
    %v1967 = vld [vmem:[#allocation25 + $0x1f78] sm:$0xff]
    %v1968 = vld [vmem:[#allocation25 + $0x1f80] sm:$0xff]
    %v1969 = vld [vmem:[#allocation25 + $0x1f88] sm:$0xff]
    %v1970 = vld [vmem:[#allocation25 + $0x1f90] sm:$0xff]
    %v1971 = vld [vmem:[#allocation25 + $0x1f98] sm:$0xff]
    %v1972 = vld [vmem:[#allocation25 + $0x1fa0] sm:$0xff]
    %v1973 = vld [vmem:[#allocation25 + $0x1fa8] sm:$0xff]
    %v1974 = vld [vmem:[#allocation25 + $0x1fb0] sm:$0xff]
    %v1975 = vld [vmem:[#allocation25 + $0x1fb8] sm:$0xff]
    %v1976 = vld [vmem:[#allocation25 + $0x1fc0] sm:$0xff]
    %v1977 = vld [vmem:[#allocation25 + $0x1fc8] sm:$0xff]
    %v1978 = vld [vmem:[#allocation25 + $0x1fd0] sm:$0xff]
    %v1979 = vld [vmem:[#allocation25 + $0x1fd8] sm:$0xff]
    %v1980 = vld [vmem:[#allocation25 + $0x1fe0] sm:$0xff]
    %v1981 = vld [vmem:[#allocation25 + $0x1fe8] sm:$0xff]
    %v1982 = vld [vmem:[#allocation25 + $0x1ff0] sm:$0xff]
    %v1983 = vld [vmem:[#allocation25 + $0x1ff8] sm:$0xff]
    %v1984 = vld [vmem:[#allocation25 + $0x2000] sm:$0xff]
    %v1985 = vld [vmem:[#allocation25 + $0x2008] sm:$0xff]
    %v1986 = vld [vmem:[#allocation25 + $0x2010] sm:$0xff]
    %v1987 = vld [vmem:[#allocation25 + $0x2018] sm:$0xff]
    %v1988 = vld [vmem:[#allocation25 + $0x2020] sm:$0xff]
    %v1989 = vld [vmem:[#allocation25 + $0x2028] sm:$0xff]
    %v1990 = vld [vmem:[#allocation25 + $0x2030] sm:$0xff]
    %v1991 = vld [vmem:[#allocation25 + $0x2038] sm:$0xff]
    %v1992 = vld [vmem:[#allocation25 + $0x2040] sm:$0xff]
    %v1993 = vld [vmem:[#allocation25 + $0x2048] sm:$0xff]
    %v1994 = vld [vmem:[#allocation25 + $0x2050] sm:$0xff]
    %v1995 = vld [vmem:[#allocation25 + $0x2058] sm:$0xff]
    %v1996 = vld [vmem:[#allocation25 + $0x2060] sm:$0xff]
    %v1997 = vld [vmem:[#allocation25 + $0x2068] sm:$0xff]
    %v1998 = vld [vmem:[#allocation25 + $0x2070] sm:$0xff]
    %v1999 = vld [vmem:[#allocation25 + $0x2078] sm:$0xff]
    %v2000 = vld [vmem:[#allocation25 + $0x2080] sm:$0xff]
    %v2001 = vld [vmem:[#allocation25 + $0x2088] sm:$0xff]
    %v2002 = vld [vmem:[#allocation25 + $0x2090] sm:$0xff]
    %v2003 = vld [vmem:[#allocation25 + $0x2098] sm:$0xff]
    %v2004 = vld [vmem:[#allocation25 + $0x20a0] sm:$0xff]
    %v2005 = vld [vmem:[#allocation25 + $0x20a8] sm:$0xff]
    %v2006 = vld [vmem:[#allocation25 + $0x20b0] sm:$0xff]
    %v2007 = vld [vmem:[#allocation25 + $0x20b8] sm:$0xff]
    %v2008 = vld [vmem:[#allocation25 + $0x20c0] sm:$0xff]
    %v2009 = vld [vmem:[#allocation25 + $0x20c8] sm:$0xff]
    %v2010 = vld [vmem:[#allocation25 + $0x20d0] sm:$0xff]
    %v2011 = vld [vmem:[#allocation25 + $0x20d8] sm:$0xff]
    %v2012 = vld [vmem:[#allocation25 + $0x20e0] sm:$0xff]
    %v2013 = vld [vmem:[#allocation25 + $0x20e8] sm:$0xff]
    %v2014 = vld [vmem:[#allocation25 + $0x20f0] sm:$0xff]
    %v2015 = vld [vmem:[#allocation25 + $0x20f8] sm:$0xff]
    %v2016 = vld [vmem:[#allocation25 + $0x2100] sm:$0xff]
    %v2017 = vld [vmem:[#allocation25 + $0x2108] sm:$0xff]
    %v2018 = vld [vmem:[#allocation25 + $0x2110] sm:$0xff]
    %v2019 = vld [vmem:[#allocation25 + $0x2118] sm:$0xff]
    %v2020 = vld [vmem:[#allocation25 + $0x2120] sm:$0xff]
    %v2021 = vld [vmem:[#allocation25 + $0x2128] sm:$0xff]
    %v2022 = vld [vmem:[#allocation25 + $0x2130] sm:$0xff]
    %v2023 = vld [vmem:[#allocation25 + $0x2138] sm:$0xff]
    %v2024 = vld [vmem:[#allocation25 + $0x2140] sm:$0xff]
    %v2025 = vld [vmem:[#allocation25 + $0x2148] sm:$0xff]
    %v2026 = vld [vmem:[#allocation25 + $0x2150] sm:$0xff]
    %v2027 = vld [vmem:[#allocation25 + $0x2158] sm:$0xff]
    %v2028 = vld [vmem:[#allocation25 + $0x2160] sm:$0xff]
    %v2029 = vld [vmem:[#allocation25 + $0x2168] sm:$0xff]
    %v2030 = vld [vmem:[#allocation25 + $0x2170] sm:$0xff]
    %v2031 = vld [vmem:[#allocation25 + $0x2178] sm:$0xff]
    %v2032 = vld [vmem:[#allocation25 + $0x2180] sm:$0xff]
    %v2033 = vld [vmem:[#allocation25 + $0x2188] sm:$0xff]
    %v2034 = vld [vmem:[#allocation25 + $0x2190] sm:$0xff]
    %v2035 = vld [vmem:[#allocation25 + $0x2198] sm:$0xff]
    %v2036 = vld [vmem:[#allocation25 + $0x21a0] sm:$0xff]
    %v2037 = vld [vmem:[#allocation25 + $0x21a8] sm:$0xff]
    %v2038 = vld [vmem:[#allocation25 + $0x21b0] sm:$0xff]
    %v2039 = vld [vmem:[#allocation25 + $0x21b8] sm:$0xff]
    %v2040 = vld [vmem:[#allocation25 + $0x21c0] sm:$0xff]
    %v2041 = vld [vmem:[#allocation25 + $0x21c8] sm:$0xff]
    %v2042 = vld [vmem:[#allocation25 + $0x21d0] sm:$0xff]
    %v2043 = vld [vmem:[#allocation25 + $0x21d8] sm:$0xff]
    %v2044 = vld [vmem:[#allocation25 + $0x21e0] sm:$0xff]
    %v2045 = vld [vmem:[#allocation25 + $0x21e8] sm:$0xff]
    %v2046 = vld [vmem:[#allocation25 + $0x21f0] sm:$0xff]
    %v2047 = vld [vmem:[#allocation25 + $0x21f8] sm:$0xff]
    %v2048 = vld [vmem:[#allocation25 + $0x2200] sm:$0xff]
    %v2049 = vld [vmem:[#allocation25 + $0x2208] sm:$0xff]
    %v2050 = vld [vmem:[#allocation25 + $0x2210] sm:$0xff]
    %v2051 = vld [vmem:[#allocation25 + $0x2218] sm:$0xff]
    %v2052 = vld [vmem:[#allocation25 + $0x2220] sm:$0xff]
    %v2053 = vld [vmem:[#allocation25 + $0x2228] sm:$0xff]
    %v2054 = vld [vmem:[#allocation25 + $0x2230] sm:$0xff]
    %v2055 = vld [vmem:[#allocation25 + $0x2238] sm:$0xff]
    %v2056 = vld [vmem:[#allocation25 + $0x2240] sm:$0xff]
    %v2057 = vld [vmem:[#allocation25 + $0x2248] sm:$0xff]
    %v2058 = vld [vmem:[#allocation25 + $0x2250] sm:$0xff]
    %v2059 = vld [vmem:[#allocation25 + $0x2258] sm:$0xff]
    %v2060 = vld [vmem:[#allocation25 + $0x2260] sm:$0xff]
    %v2061 = vld [vmem:[#allocation25 + $0x2268] sm:$0xff]
    %v2062 = vld [vmem:[#allocation25 + $0x2270] sm:$0xff]
    %v2063 = vld [vmem:[#allocation25 + $0x2278] sm:$0xff]
    %v2064 = vld [vmem:[#allocation25 + $0x2280] sm:$0xff]
    %v2065 = vld [vmem:[#allocation25 + $0x2288] sm:$0xff]
    %v2066 = vld [vmem:[#allocation25 + $0x2290] sm:$0xff]
    %v2067 = vld [vmem:[#allocation25 + $0x2298] sm:$0xff]
    %v2068 = vld [vmem:[#allocation25 + $0x22a0] sm:$0xff]
    %v2069 = vld [vmem:[#allocation25 + $0x22a8] sm:$0xff]
    %v2070 = vld [vmem:[#allocation25 + $0x22b0] sm:$0xff]
    %v2071 = vld [vmem:[#allocation25 + $0x22b8] sm:$0xff]
    %v2072 = vld [vmem:[#allocation25 + $0x22c0] sm:$0xff]
    %v2073 = vld [vmem:[#allocation25 + $0x22c8] sm:$0xff]
    %v2074 = vld [vmem:[#allocation25 + $0x22d0] sm:$0xff]
    %v2075 = vld [vmem:[#allocation25 + $0x22d8] sm:$0xff]
    %v2076 = vld [vmem:[#allocation25 + $0x22e0] sm:$0xff]
    %v2077 = vld [vmem:[#allocation25 + $0x22e8] sm:$0xff]
    %v2078 = vld [vmem:[#allocation25 + $0x22f0] sm:$0xff]
    %v2079 = vld [vmem:[#allocation25 + $0x22f8] sm:$0xff]
    %v2080 = vld [vmem:[#allocation25 + $0x2300] sm:$0xff]
    %v2081 = vld [vmem:[#allocation25 + $0x2308] sm:$0xff]
    %v2082 = vld [vmem:[#allocation25 + $0x2310] sm:$0xff]
    %v2083 = vld [vmem:[#allocation25 + $0x2318] sm:$0xff]
    %v2084 = vld [vmem:[#allocation25 + $0x2320] sm:$0xff]
    %v2085 = vld [vmem:[#allocation25 + $0x2328] sm:$0xff]
    %v2086 = vld [vmem:[#allocation25 + $0x2330] sm:$0xff]
    %v2087 = vld [vmem:[#allocation25 + $0x2338] sm:$0xff]
    %v2088 = vld [vmem:[#allocation25 + $0x2340] sm:$0xff]
    %v2089 = vld [vmem:[#allocation25 + $0x2348] sm:$0xff]
    %v2090 = vld [vmem:[#allocation25 + $0x2350] sm:$0xff]
    %v2091 = vld [vmem:[#allocation25 + $0x2358] sm:$0xff]
    %v2092 = vld [vmem:[#allocation25 + $0x2360] sm:$0xff]
    %v2093 = vld [vmem:[#allocation25 + $0x2368] sm:$0xff]
    %v2094 = vld [vmem:[#allocation25 + $0x2370] sm:$0xff]
    %v2095 = vld [vmem:[#allocation25 + $0x2378] sm:$0xff]
    %v2096 = vld [vmem:[#allocation25 + $0x2380] sm:$0xff]
    %v2097 = vld [vmem:[#allocation25 + $0x2388] sm:$0xff]
    %v2098 = vld [vmem:[#allocation25 + $0x2390] sm:$0xff]
    %v2099 = vld [vmem:[#allocation25 + $0x2398] sm:$0xff]
    %v2100 = vld [vmem:[#allocation25 + $0x23a0] sm:$0xff]
    %v2101 = vld [vmem:[#allocation25 + $0x23a8] sm:$0xff]
    %v2102 = vld [vmem:[#allocation25 + $0x23b0] sm:$0xff]
    %v2103 = vld [vmem:[#allocation25 + $0x23b8] sm:$0xff]
    %v2104 = vld [vmem:[#allocation25 + $0x23c0] sm:$0xff]
    %v2105 = vld [vmem:[#allocation25 + $0x23c8] sm:$0xff]
    %v2106 = vld [vmem:[#allocation25 + $0x23d0] sm:$0xff]
    %v2107 = vld [vmem:[#allocation25 + $0x23d8] sm:$0xff]
    %v2108 = vld [vmem:[#allocation25 + $0x23e0] sm:$0xff]
    %v2109 = vld [vmem:[#allocation25 + $0x23e8] sm:$0xff]
    %v2110 = vld [vmem:[#allocation25 + $0x23f0] sm:$0xff]
    %v2111 = vld [vmem:[#allocation25 + $0x23f8] sm:$0xff]
    %v2112 = vld [vmem:[#allocation25 + $0x2400] sm:$0xff]
    %v2113 = vld [vmem:[#allocation25 + $0x2408] sm:$0xff]
    %v2114 = vld [vmem:[#allocation25 + $0x2410] sm:$0xff]
    %v2115 = vld [vmem:[#allocation25 + $0x2418] sm:$0xff]
    %v2116 = vld [vmem:[#allocation25 + $0x2420] sm:$0xff]
    %v2117 = vld [vmem:[#allocation25 + $0x2428] sm:$0xff]
    %v2118 = vld [vmem:[#allocation25 + $0x2430] sm:$0xff]
    %v2119 = vld [vmem:[#allocation25 + $0x2438] sm:$0xff]
    %v2120 = vld [vmem:[#allocation25 + $0x2440] sm:$0xff]
    %v2121 = vld [vmem:[#allocation25 + $0x2448] sm:$0xff]
    %v2122 = vld [vmem:[#allocation25 + $0x2450] sm:$0xff]
    %v2123 = vld [vmem:[#allocation25 + $0x2458] sm:$0xff]
    %v2124 = vld [vmem:[#allocation25 + $0x2460] sm:$0xff]
    %v2125 = vld [vmem:[#allocation25 + $0x2468] sm:$0xff]
    %v2126 = vld [vmem:[#allocation25 + $0x2470] sm:$0xff]
    %v2127 = vld [vmem:[#allocation25 + $0x2478] sm:$0xff]
    %v2128 = vld [vmem:[#allocation25 + $0x2480] sm:$0xff]
    %v2129 = vld [vmem:[#allocation25 + $0x2488] sm:$0xff]
    %v2130 = vld [vmem:[#allocation25 + $0x2490] sm:$0xff]
    %v2131 = vld [vmem:[#allocation25 + $0x2498] sm:$0xff]
    %v2132 = vld [vmem:[#allocation25 + $0x24a0] sm:$0xff]
    %v2133 = vld [vmem:[#allocation25 + $0x24a8] sm:$0xff]
    %v2134 = vld [vmem:[#allocation25 + $0x24b0] sm:$0xff]
    %v2135 = vld [vmem:[#allocation25 + $0x24b8] sm:$0xff]
    %v2136 = vld [vmem:[#allocation25 + $0x24c0] sm:$0xff]
    %v2137 = vld [vmem:[#allocation25 + $0x24c8] sm:$0xff]
    %v2138 = vld [vmem:[#allocation25 + $0x24d0] sm:$0xff]
    %v2139 = vld [vmem:[#allocation25 + $0x24d8] sm:$0xff]
    %v2140 = vld [vmem:[#allocation25 + $0x24e0] sm:$0xff]
    %v2141 = vld [vmem:[#allocation25 + $0x24e8] sm:$0xff]
    %v2142 = vld [vmem:[#allocation25 + $0x24f0] sm:$0xff]
    %v2143 = vld [vmem:[#allocation25 + $0x24f8] sm:$0xff]
    %v2144 = vld [vmem:[#allocation25 + $0x2500] sm:$0xff]
    %v2145 = vld [vmem:[#allocation25 + $0x2508] sm:$0xff]
    %v2146 = vld [vmem:[#allocation25 + $0x2510] sm:$0xff]
    %v2147 = vld [vmem:[#allocation25 + $0x2518] sm:$0xff]
    %v2148 = vld [vmem:[#allocation25 + $0x2520] sm:$0xff]
    %v2149 = vld [vmem:[#allocation25 + $0x2528] sm:$0xff]
    %v2150 = vld [vmem:[#allocation25 + $0x2530] sm:$0xff]
    %v2151 = vld [vmem:[#allocation25 + $0x2538] sm:$0xff]
    %v2152 = vld [vmem:[#allocation25 + $0x2540] sm:$0xff]
    %v2153 = vld [vmem:[#allocation25 + $0x2548] sm:$0xff]
    %v2154 = vld [vmem:[#allocation25 + $0x2550] sm:$0xff]
    %v2155 = vld [vmem:[#allocation25 + $0x2558] sm:$0xff]
    %v2156 = vld [vmem:[#allocation25 + $0x2560] sm:$0xff]
    %v2157 = vld [vmem:[#allocation25 + $0x2568] sm:$0xff]
    %v2158 = vld [vmem:[#allocation25 + $0x2570] sm:$0xff]
    %v2159 = vld [vmem:[#allocation25 + $0x2578] sm:$0xff]
    %v2160 = vld [vmem:[#allocation25 + $0x2580] sm:$0xff]
    %v2161 = vld [vmem:[#allocation25 + $0x2588] sm:$0xff]
    %v2162 = vld [vmem:[#allocation25 + $0x2590] sm:$0xff]
    %v2163 = vld [vmem:[#allocation25 + $0x2598] sm:$0xff]
    %v2164 = vld [vmem:[#allocation25 + $0x25a0] sm:$0xff]
    %v2165 = vld [vmem:[#allocation25 + $0x25a8] sm:$0xff]
    %v2166 = vld [vmem:[#allocation25 + $0x25b0] sm:$0xff]
    %v2167 = vld [vmem:[#allocation25 + $0x25b8] sm:$0xff]
    %v2168 = vld [vmem:[#allocation25 + $0x25c0] sm:$0xff]
    %v2169 = vld [vmem:[#allocation25 + $0x25c8] sm:$0xff]
    %v2170 = vld [vmem:[#allocation25 + $0x25d0] sm:$0xff]
    %v2171 = vld [vmem:[#allocation25 + $0x25d8] sm:$0xff]
    %v2172 = vld [vmem:[#allocation25 + $0x25e0] sm:$0xff]
    %v2173 = vld [vmem:[#allocation25 + $0x25e8] sm:$0xff]
    %v2174 = vld [vmem:[#allocation25 + $0x25f0] sm:$0xff]
    %v2175 = vld [vmem:[#allocation25 + $0x25f8] sm:$0xff]
    %v2176 = vld [vmem:[#allocation25 + $0x2600] sm:$0xff]
    %v2177 = vld [vmem:[#allocation25 + $0x2608] sm:$0xff]
    %v2178 = vld [vmem:[#allocation25 + $0x2610] sm:$0xff]
    %v2179 = vld [vmem:[#allocation25 + $0x2618] sm:$0xff]
    %v2180 = vld [vmem:[#allocation25 + $0x2620] sm:$0xff]
    %v2181 = vld [vmem:[#allocation25 + $0x2628] sm:$0xff]
    %v2182 = vld [vmem:[#allocation25 + $0x2630] sm:$0xff]
    %v2183 = vld [vmem:[#allocation25 + $0x2638] sm:$0xff]
    %v2184 = vld [vmem:[#allocation25 + $0x2640] sm:$0xff]
    %v2185 = vld [vmem:[#allocation25 + $0x2648] sm:$0xff]
    %v2186 = vld [vmem:[#allocation25 + $0x2650] sm:$0xff]
    %v2187 = vld [vmem:[#allocation25 + $0x2658] sm:$0xff]
    %v2188 = vld [vmem:[#allocation25 + $0x2660] sm:$0xff]
    %v2189 = vld [vmem:[#allocation25 + $0x2668] sm:$0xff]
    %v2190 = vld [vmem:[#allocation25 + $0x2670] sm:$0xff]
    %v2191 = vld [vmem:[#allocation25 + $0x2678] sm:$0xff]
    %v2192 = vld [vmem:[#allocation25 + $0x2680] sm:$0xff]
    %v2193 = vld [vmem:[#allocation25 + $0x2688] sm:$0xff]
    %v2194 = vld [vmem:[#allocation25 + $0x2690] sm:$0xff]
    %v2195 = vld [vmem:[#allocation25 + $0x2698] sm:$0xff]
    %v2196 = vld [vmem:[#allocation25 + $0x26a0] sm:$0xff]
    %v2197 = vld [vmem:[#allocation25 + $0x26a8] sm:$0xff]
    %v2198 = vld [vmem:[#allocation25 + $0x26b0] sm:$0xff]
    %v2199 = vld [vmem:[#allocation25 + $0x26b8] sm:$0xff]
    %v2200 = vld [vmem:[#allocation25 + $0x26c0] sm:$0xff]
    %v2201 = vld [vmem:[#allocation25 + $0x26c8] sm:$0xff]
    %v2202 = vld [vmem:[#allocation25 + $0x26d0] sm:$0xff]
    %v2203 = vld [vmem:[#allocation25 + $0x26d8] sm:$0xff]
    %v2204 = vld [vmem:[#allocation25 + $0x26e0] sm:$0xff]
    %v2205 = vld [vmem:[#allocation25 + $0x26e8] sm:$0xff]
    %v2206 = vld [vmem:[#allocation25 + $0x26f0] sm:$0xff]
    %v2207 = vld [vmem:[#allocation25 + $0x26f8] sm:$0xff]
    %v2208 = vld [vmem:[#allocation25 + $0x2700] sm:$0xff]
    %v2209 = vld [vmem:[#allocation25 + $0x2708] sm:$0xff]
    %v2210 = vld [vmem:[#allocation25 + $0x2710] sm:$0xff]
    %v2211 = vld [vmem:[#allocation25 + $0x2718] sm:$0xff]
    %v2212 = vld [vmem:[#allocation25 + $0x2720] sm:$0xff]
    %v2213 = vld [vmem:[#allocation25 + $0x2728] sm:$0xff]
    %v2214 = vld [vmem:[#allocation25 + $0x2730] sm:$0xff]
    %v2215 = vld [vmem:[#allocation25 + $0x2738] sm:$0xff]
    %v2216 = vld [vmem:[#allocation25 + $0x2740] sm:$0xff]
    %v2217 = vld [vmem:[#allocation25 + $0x2748] sm:$0xff]
    %v2218 = vld [vmem:[#allocation25 + $0x2750] sm:$0xff]
    %v2219 = vld [vmem:[#allocation25 + $0x2758] sm:$0xff]
    %v2220 = vld [vmem:[#allocation25 + $0x2760] sm:$0xff]
    %v2221 = vld [vmem:[#allocation25 + $0x2768] sm:$0xff]
    %v2222 = vld [vmem:[#allocation25 + $0x2770] sm:$0xff]
    %v2223 = vld [vmem:[#allocation25 + $0x2778] sm:$0xff]
    %v2224 = vld [vmem:[#allocation25 + $0x2780] sm:$0xff]
    %v2225 = vld [vmem:[#allocation25 + $0x2788] sm:$0xff]
    %v2226 = vld [vmem:[#allocation25 + $0x2790] sm:$0xff]
    %v2227 = vld [vmem:[#allocation25 + $0x2798] sm:$0xff]
    %v2228 = vld [vmem:[#allocation25 + $0x27a0] sm:$0xff]
    %v2229 = vld [vmem:[#allocation25 + $0x27a8] sm:$0xff]
    %v2230 = vld [vmem:[#allocation25 + $0x27b0] sm:$0xff]
    %v2231 = vld [vmem:[#allocation25 + $0x27b8] sm:$0xff]
    %v2232 = vld [vmem:[#allocation25 + $0x27c0] sm:$0xff]
    %v2233 = vld [vmem:[#allocation25 + $0x27c8] sm:$0xff]
    %v2234 = vld [vmem:[#allocation25 + $0x27d0] sm:$0xff]
    %v2235 = vld [vmem:[#allocation25 + $0x27d8] sm:$0xff]
    %v2236 = vld [vmem:[#allocation25 + $0x27e0] sm:$0xff]
    %v2237 = vld [vmem:[#allocation25 + $0x27e8] sm:$0xff]
    %v2238 = vld [vmem:[#allocation25 + $0x27f0] sm:$0xff]
    %v2239 = vld [vmem:[#allocation25 + $0x27f8] sm:$0xff]
    %v2240 = vld [vmem:[#allocation25 + $0x2800] sm:$0xff]
    %v2241 = vld [vmem:[#allocation25 + $0x2808] sm:$0xff]
    %v2242 = vld [vmem:[#allocation25 + $0x2810] sm:$0xff]
    %v2243 = vld [vmem:[#allocation25 + $0x2818] sm:$0xff]
    %v2244 = vld [vmem:[#allocation25 + $0x2820] sm:$0xff]
    %v2245 = vld [vmem:[#allocation25 + $0x2828] sm:$0xff]
    %v2246 = vld [vmem:[#allocation25 + $0x2830] sm:$0xff]
    %v2247 = vld [vmem:[#allocation25 + $0x2838] sm:$0xff]
    %v2248 = vld [vmem:[#allocation25 + $0x2840] sm:$0xff]
    %v2249 = vld [vmem:[#allocation25 + $0x2848] sm:$0xff]
    %v2250 = vld [vmem:[#allocation25 + $0x2850] sm:$0xff]
    %v2251 = vld [vmem:[#allocation25 + $0x2858] sm:$0xff]
    %v2252 = vld [vmem:[#allocation25 + $0x2860] sm:$0xff]
    %v2253 = vld [vmem:[#allocation25 + $0x2868] sm:$0xff]
    %v2254 = vld [vmem:[#allocation25 + $0x2870] sm:$0xff]
    %v2255 = vld [vmem:[#allocation25 + $0x2878] sm:$0xff]
    %v2256 = vld [vmem:[#allocation25 + $0x2880] sm:$0xff]
    %v2257 = vld [vmem:[#allocation25 + $0x2888] sm:$0xff]
    %v2258 = vld [vmem:[#allocation25 + $0x2890] sm:$0xff]
    %v2259 = vld [vmem:[#allocation25 + $0x2898] sm:$0xff]
    %v2260 = vld [vmem:[#allocation25 + $0x28a0] sm:$0xff]
    %v2261 = vld [vmem:[#allocation25 + $0x28a8] sm:$0xff]
    %v2262 = vld [vmem:[#allocation25 + $0x28b0] sm:$0xff]
    %v2263 = vld [vmem:[#allocation25 + $0x28b8] sm:$0xff]
    %v2264 = vld [vmem:[#allocation25 + $0x28c0] sm:$0xff]
    %v2265 = vld [vmem:[#allocation25 + $0x28c8] sm:$0xff]
    %v2266 = vld [vmem:[#allocation25 + $0x28d0] sm:$0xff]
    %v2267 = vld [vmem:[#allocation25 + $0x28d8] sm:$0xff]
    %v2268 = vld [vmem:[#allocation25 + $0x28e0] sm:$0xff]
    %v2269 = vld [vmem:[#allocation25 + $0x28e8] sm:$0xff]
    %v2270 = vld [vmem:[#allocation25 + $0x28f0] sm:$0xff]
    %v2271 = vld [vmem:[#allocation25 + $0x28f8] sm:$0xff]
    %v2272 = vld [vmem:[#allocation25 + $0x2900] sm:$0xff]
    %v2273 = vld [vmem:[#allocation25 + $0x2908] sm:$0xff]
    %v2274 = vld [vmem:[#allocation25 + $0x2910] sm:$0xff]
    %v2275 = vld [vmem:[#allocation25 + $0x2918] sm:$0xff]
    %v2276 = vld [vmem:[#allocation25 + $0x2920] sm:$0xff]
    %v2277 = vld [vmem:[#allocation25 + $0x2928] sm:$0xff]
    %v2278 = vld [vmem:[#allocation25 + $0x2930] sm:$0xff]
    %v2279 = vld [vmem:[#allocation25 + $0x2938] sm:$0xff]
    %v2280 = vld [vmem:[#allocation25 + $0x2940] sm:$0xff]
    %v2281 = vld [vmem:[#allocation25 + $0x2948] sm:$0xff]
    %v2282 = vld [vmem:[#allocation25 + $0x2950] sm:$0xff]
    %v2283 = vld [vmem:[#allocation25 + $0x2958] sm:$0xff]
    %v2284 = vld [vmem:[#allocation25 + $0x2960] sm:$0xff]
    %v2285 = vld [vmem:[#allocation25 + $0x2968] sm:$0xff]
    %v2286 = vld [vmem:[#allocation25 + $0x2970] sm:$0xff]
    %v2287 = vld [vmem:[#allocation25 + $0x2978] sm:$0xff]
    %v2288 = vld [vmem:[#allocation25 + $0x2980] sm:$0xff]
    %v2289 = vld [vmem:[#allocation25 + $0x2988] sm:$0xff]
    %v2290 = vld [vmem:[#allocation25 + $0x2990] sm:$0xff]
    %v2291 = vld [vmem:[#allocation25 + $0x2998] sm:$0xff]
    %v2292 = vld [vmem:[#allocation25 + $0x29a0] sm:$0xff]
    %v2293 = vld [vmem:[#allocation25 + $0x29a8] sm:$0xff]
    %v2294 = vld [vmem:[#allocation25 + $0x29b0] sm:$0xff]
    %v2295 = vld [vmem:[#allocation25 + $0x29b8] sm:$0xff]
    %v2296 = vld [vmem:[#allocation25 + $0x29c0] sm:$0xff]
    %v2297 = vld [vmem:[#allocation25 + $0x29c8] sm:$0xff]
    %v2298 = vld [vmem:[#allocation25 + $0x29d0] sm:$0xff]
    %v2299 = vld [vmem:[#allocation25 + $0x29d8] sm:$0xff]
    %v2300 = vld [vmem:[#allocation25 + $0x29e0] sm:$0xff]
    %v2301 = vld [vmem:[#allocation25 + $0x29e8] sm:$0xff]
    %v2302 = vld [vmem:[#allocation25 + $0x29f0] sm:$0xff]
    %v2303 = vld [vmem:[#allocation25 + $0x29f8] sm:$0xff]
    %v2304 = vld [vmem:[#allocation25 + $0x2a00] sm:$0xff]
    %v2305 = vld [vmem:[#allocation25 + $0x2a08] sm:$0xff]
    %v2306 = vld [vmem:[#allocation25 + $0x2a10] sm:$0xff]
    %v2307 = vld [vmem:[#allocation25 + $0x2a18] sm:$0xff]
    %v2308 = vld [vmem:[#allocation25 + $0x2a20] sm:$0xff]
    %v2309 = vld [vmem:[#allocation25 + $0x2a28] sm:$0xff]
    %v2310 = vld [vmem:[#allocation25 + $0x2a30] sm:$0xff]
    %v2311 = vld [vmem:[#allocation25 + $0x2a38] sm:$0xff]
    %v2312 = vld [vmem:[#allocation25 + $0x2a40] sm:$0xff]
    %v2313 = vld [vmem:[#allocation25 + $0x2a48] sm:$0xff]
    %v2314 = vld [vmem:[#allocation25 + $0x2a50] sm:$0xff]
    %v2315 = vld [vmem:[#allocation25 + $0x2a58] sm:$0xff]
    %v2316 = vld [vmem:[#allocation25 + $0x2a60] sm:$0xff]
    %v2317 = vld [vmem:[#allocation25 + $0x2a68] sm:$0xff]
    %v2318 = vld [vmem:[#allocation25 + $0x2a70] sm:$0xff]
    %v2319 = vld [vmem:[#allocation25 + $0x2a78] sm:$0xff]
    %v2320 = vld [vmem:[#allocation25 + $0x2a80] sm:$0xff]
    %v2321 = vld [vmem:[#allocation25 + $0x2a88] sm:$0xff]
    %v2322 = vld [vmem:[#allocation25 + $0x2a90] sm:$0xff]
    %v2323 = vld [vmem:[#allocation25 + $0x2a98] sm:$0xff]
    %v2324 = vld [vmem:[#allocation25 + $0x2aa0] sm:$0xff]
    %v2325 = vld [vmem:[#allocation25 + $0x2aa8] sm:$0xff]
    %v2326 = vld [vmem:[#allocation25 + $0x2ab0] sm:$0xff]
    %v2327 = vld [vmem:[#allocation25 + $0x2ab8] sm:$0xff]
    %v2328 = vld [vmem:[#allocation25 + $0x2ac0] sm:$0xff]
    %v2329 = vld [vmem:[#allocation25 + $0x2ac8] sm:$0xff]
    %v2330 = vld [vmem:[#allocation25 + $0x2ad0] sm:$0xff]
    %v2331 = vld [vmem:[#allocation25 + $0x2ad8] sm:$0xff]
    %v2332 = vld [vmem:[#allocation25 + $0x2ae0] sm:$0xff]
    %v2333 = vld [vmem:[#allocation25 + $0x2ae8] sm:$0xff]
    %v2334 = vld [vmem:[#allocation25 + $0x2af0] sm:$0xff]
    %v2335 = vld [vmem:[#allocation25 + $0x2af8] sm:$0xff]
    %v2336 = vld [vmem:[#allocation25 + $0x2b00] sm:$0xff]
    %v2337 = vld [vmem:[#allocation25 + $0x2b08] sm:$0xff]
    %v2338 = vld [vmem:[#allocation25 + $0x2b10] sm:$0xff]
    %v2339 = vld [vmem:[#allocation25 + $0x2b18] sm:$0xff]
    %v2340 = vld [vmem:[#allocation25 + $0x2b20] sm:$0xff]
    %v2341 = vld [vmem:[#allocation25 + $0x2b28] sm:$0xff]
    %v2342 = vld [vmem:[#allocation25 + $0x2b30] sm:$0xff]
    %v2343 = vld [vmem:[#allocation25 + $0x2b38] sm:$0xff]
    %v2344 = vld [vmem:[#allocation25 + $0x2b40] sm:$0xff]
    %v2345 = vld [vmem:[#allocation25 + $0x2b48] sm:$0xff]
    %v2346 = vld [vmem:[#allocation25 + $0x2b50] sm:$0xff]
    %v2347 = vld [vmem:[#allocation25 + $0x2b58] sm:$0xff]
    %v2348 = vld [vmem:[#allocation25 + $0x2b60] sm:$0xff]
    %v2349 = vld [vmem:[#allocation25 + $0x2b68] sm:$0xff]
    %v2350 = vld [vmem:[#allocation25 + $0x2b70] sm:$0xff]
    %v2351 = vld [vmem:[#allocation25 + $0x2b78] sm:$0xff]
    %v2352 = vld [vmem:[#allocation25 + $0x2b80] sm:$0xff]
    %v2353 = vld [vmem:[#allocation25 + $0x2b88] sm:$0xff]
    %v2354 = vld [vmem:[#allocation25 + $0x2b90] sm:$0xff]
    %v2355 = vld [vmem:[#allocation25 + $0x2b98] sm:$0xff]
    %v2356 = vld [vmem:[#allocation25 + $0x2ba0] sm:$0xff]
    %v2357 = vld [vmem:[#allocation25 + $0x2ba8] sm:$0xff]
    %v2358 = vld [vmem:[#allocation25 + $0x2bb0] sm:$0xff]
    %v2359 = vld [vmem:[#allocation25 + $0x2bb8] sm:$0xff]
    %v2360 = vld [vmem:[#allocation25 + $0x2bc0] sm:$0xff]
    %v2361 = vld [vmem:[#allocation25 + $0x2bc8] sm:$0xff]
    %v2362 = vld [vmem:[#allocation25 + $0x2bd0] sm:$0xff]
    %v2363 = vld [vmem:[#allocation25 + $0x2bd8] sm:$0xff]
    %v2364 = vld [vmem:[#allocation25 + $0x2be0] sm:$0xff]
    %v2365 = vld [vmem:[#allocation25 + $0x2be8] sm:$0xff]
    %v2366 = vld [vmem:[#allocation25 + $0x2bf0] sm:$0xff]
    %v2367 = vld [vmem:[#allocation25 + $0x2bf8] sm:$0xff]
    %v2368 = vld [vmem:[#allocation25 + $0x2c00] sm:$0xff]
    %v2369 = vld [vmem:[#allocation25 + $0x2c08] sm:$0xff]
    %v2370 = vld [vmem:[#allocation25 + $0x2c10] sm:$0xff]
    %v2371 = vld [vmem:[#allocation25 + $0x2c18] sm:$0xff]
    %v2372 = vld [vmem:[#allocation25 + $0x2c20] sm:$0xff]
    %v2373 = vld [vmem:[#allocation25 + $0x2c28] sm:$0xff]
    %v2374 = vld [vmem:[#allocation25 + $0x2c30] sm:$0xff]
    %v2375 = vld [vmem:[#allocation25 + $0x2c38] sm:$0xff]
    %v2376 = vld [vmem:[#allocation25 + $0x2c40] sm:$0xff]
    %v2377 = vld [vmem:[#allocation25 + $0x2c48] sm:$0xff]
    %v2378 = vld [vmem:[#allocation25 + $0x2c50] sm:$0xff]
    %v2379 = vld [vmem:[#allocation25 + $0x2c58] sm:$0xff]
    %v2380 = vld [vmem:[#allocation25 + $0x2c60] sm:$0xff]
    %v2381 = vld [vmem:[#allocation25 + $0x2c68] sm:$0xff]
    %v2382 = vld [vmem:[#allocation25 + $0x2c70] sm:$0xff]
    %v2383 = vld [vmem:[#allocation25 + $0x2c78] sm:$0xff]
    %v2384 = vld [vmem:[#allocation25 + $0x2c80] sm:$0xff]
    %v2385 = vld [vmem:[#allocation25 + $0x2c88] sm:$0xff]
    %v2386 = vld [vmem:[#allocation25 + $0x2c90] sm:$0xff]
    %v2387 = vld [vmem:[#allocation25 + $0x2c98] sm:$0xff]
    %v2388 = vld [vmem:[#allocation25 + $0x2ca0] sm:$0xff]
    %v2389 = vld [vmem:[#allocation25 + $0x2ca8] sm:$0xff]
    %v2390 = vld [vmem:[#allocation25 + $0x2cb0] sm:$0xff]
    %v2391 = vld [vmem:[#allocation25 + $0x2cb8] sm:$0xff]
    %v2392 = vld [vmem:[#allocation25 + $0x2cc0] sm:$0xff]
    %v2393 = vld [vmem:[#allocation25 + $0x2cc8] sm:$0xff]
    %v2394 = vld [vmem:[#allocation25 + $0x2cd0] sm:$0xff]
    %v2395 = vld [vmem:[#allocation25 + $0x2cd8] sm:$0xff]
    %v2396 = vld [vmem:[#allocation25 + $0x2ce0] sm:$0xff]
    %v2397 = vld [vmem:[#allocation25 + $0x2ce8] sm:$0xff]
    %v2398 = vld [vmem:[#allocation25 + $0x2cf0] sm:$0xff]
    %v2399 = vld [vmem:[#allocation25 + $0x2cf8] sm:$0xff]
    %v2400 = vld [vmem:[#allocation25 + $0x2d00] sm:$0xff]
    %v2401 = vld [vmem:[#allocation25 + $0x2d08] sm:$0xff]
    %v2402 = vld [vmem:[#allocation25 + $0x2d10] sm:$0xff]
    %v2403 = vld [vmem:[#allocation25 + $0x2d18] sm:$0xff]
    %v2404 = vld [vmem:[#allocation25 + $0x2d20] sm:$0xff]
    %v2405 = vld [vmem:[#allocation25 + $0x2d28] sm:$0xff]
    %v2406 = vld [vmem:[#allocation25 + $0x2d30] sm:$0xff]
    %v2407 = vld [vmem:[#allocation25 + $0x2d38] sm:$0xff]
    %v2408 = vld [vmem:[#allocation25 + $0x2d40] sm:$0xff]
    %v2409 = vld [vmem:[#allocation25 + $0x2d48] sm:$0xff]
    %v2410 = vld [vmem:[#allocation25 + $0x2d50] sm:$0xff]
    %v2411 = vld [vmem:[#allocation25 + $0x2d58] sm:$0xff]
    %v2412 = vld [vmem:[#allocation25 + $0x2d60] sm:$0xff]
    %v2413 = vld [vmem:[#allocation25 + $0x2d68] sm:$0xff]
    %v2414 = vld [vmem:[#allocation25 + $0x2d70] sm:$0xff]
    %v2415 = vld [vmem:[#allocation25 + $0x2d78] sm:$0xff]
    %v2416 = vld [vmem:[#allocation25 + $0x2d80] sm:$0xff]
    %v2417 = vld [vmem:[#allocation25 + $0x2d88] sm:$0xff]
    %v2418 = vld [vmem:[#allocation25 + $0x2d90] sm:$0xff]
    %v2419 = vld [vmem:[#allocation25 + $0x2d98] sm:$0xff]
    %v2420 = vld [vmem:[#allocation25 + $0x2da0] sm:$0xff]
    %v2421 = vld [vmem:[#allocation25 + $0x2da8] sm:$0xff]
    %v2422 = vld [vmem:[#allocation25 + $0x2db0] sm:$0xff]
    %v2423 = vld [vmem:[#allocation25 + $0x2db8] sm:$0xff]
    %v2424 = vld [vmem:[#allocation25 + $0x2dc0] sm:$0xff]
    %v2425 = vld [vmem:[#allocation25 + $0x2dc8] sm:$0xff]
    %v2426 = vld [vmem:[#allocation25 + $0x2dd0] sm:$0xff]
    %v2427 = vld [vmem:[#allocation25 + $0x2dd8] sm:$0xff]
    %v2428 = vld [vmem:[#allocation25 + $0x2de0] sm:$0xff]
    %v2429 = vld [vmem:[#allocation25 + $0x2de8] sm:$0xff]
    %v2430 = vld [vmem:[#allocation25 + $0x2df0] sm:$0xff]
    %v2431 = vld [vmem:[#allocation25 + $0x2df8] sm:$0xff]
    %v2432 = vld [vmem:[#allocation25 + $0x2e00] sm:$0xff]
    %v2433 = vld [vmem:[#allocation25 + $0x2e08] sm:$0xff]
    %v2434 = vld [vmem:[#allocation25 + $0x2e10] sm:$0xff]
    %v2435 = vld [vmem:[#allocation25 + $0x2e18] sm:$0xff]
    %v2436 = vld [vmem:[#allocation25 + $0x2e20] sm:$0xff]
    %v2437 = vld [vmem:[#allocation25 + $0x2e28] sm:$0xff]
    %v2438 = vld [vmem:[#allocation25 + $0x2e30] sm:$0xff]
    %v2439 = vld [vmem:[#allocation25 + $0x2e38] sm:$0xff]
    %v2440 = vld [vmem:[#allocation25 + $0x2e40] sm:$0xff]
    %v2441 = vld [vmem:[#allocation25 + $0x2e48] sm:$0xff]
    %v2442 = vld [vmem:[#allocation25 + $0x2e50] sm:$0xff]
    %v2443 = vld [vmem:[#allocation25 + $0x2e58] sm:$0xff]
    %v2444 = vld [vmem:[#allocation25 + $0x2e60] sm:$0xff]
    %v2445 = vld [vmem:[#allocation25 + $0x2e68] sm:$0xff]
    %v2446 = vld [vmem:[#allocation25 + $0x2e70] sm:$0xff]
    %v2447 = vld [vmem:[#allocation25 + $0x2e78] sm:$0xff]
    %v2448 = vld [vmem:[#allocation25 + $0x2e80] sm:$0xff]
    %v2449 = vld [vmem:[#allocation25 + $0x2e88] sm:$0xff]
    %v2450 = vld [vmem:[#allocation25 + $0x2e90] sm:$0xff]
    %v2451 = vld [vmem:[#allocation25 + $0x2e98] sm:$0xff]
    %v2452 = vld [vmem:[#allocation25 + $0x2ea0] sm:$0xff]
    %v2453 = vld [vmem:[#allocation25 + $0x2ea8] sm:$0xff]
    %v2454 = vld [vmem:[#allocation25 + $0x2eb0] sm:$0xff]
    %v2455 = vld [vmem:[#allocation25 + $0x2eb8] sm:$0xff]
    %v2456 = vld [vmem:[#allocation25 + $0x2ec0] sm:$0xff]
    %v2457 = vld [vmem:[#allocation25 + $0x2ec8] sm:$0xff]
    %v2458 = vld [vmem:[#allocation25 + $0x2ed0] sm:$0xff]
    %v2459 = vld [vmem:[#allocation25 + $0x2ed8] sm:$0xff]
    %v2460 = vld [vmem:[#allocation25 + $0x2ee0] sm:$0xff]
    %v2461 = vld [vmem:[#allocation25 + $0x2ee8] sm:$0xff]
    %v2462 = vld [vmem:[#allocation25 + $0x2ef0] sm:$0xff]
    %v2463 = vld [vmem:[#allocation25 + $0x2ef8] sm:$0xff]
    %v2464 = vld [vmem:[#allocation25 + $0x2f00] sm:$0xff]
    %v2465 = vld [vmem:[#allocation25 + $0x2f08] sm:$0xff]
    %v2466 = vld [vmem:[#allocation25 + $0x2f10] sm:$0xff]
    %v2467 = vld [vmem:[#allocation25 + $0x2f18] sm:$0xff]
    %v2468 = vld [vmem:[#allocation25 + $0x2f20] sm:$0xff]
    %v2469 = vld [vmem:[#allocation25 + $0x2f28] sm:$0xff]
    %v2470 = vld [vmem:[#allocation25 + $0x2f30] sm:$0xff]
    %v2471 = vld [vmem:[#allocation25 + $0x2f38] sm:$0xff]
    %v2472 = vld [vmem:[#allocation25 + $0x2f40] sm:$0xff]
    %v2473 = vld [vmem:[#allocation25 + $0x2f48] sm:$0xff]
    %v2474 = vld [vmem:[#allocation25 + $0x2f50] sm:$0xff]
    %v2475 = vld [vmem:[#allocation25 + $0x2f58] sm:$0xff]
    %v2476 = vld [vmem:[#allocation25 + $0x2f60] sm:$0xff]
    %v2477 = vld [vmem:[#allocation25 + $0x2f68] sm:$0xff]
    %v2478 = vld [vmem:[#allocation25 + $0x2f70] sm:$0xff]
    %v2479 = vld [vmem:[#allocation25 + $0x2f78] sm:$0xff]
    %v2480 = vld [vmem:[#allocation25 + $0x2f80] sm:$0xff]
    %v2481 = vld [vmem:[#allocation25 + $0x2f88] sm:$0xff]
    %v2482 = vld [vmem:[#allocation25 + $0x2f90] sm:$0xff]
    %v2483 = vld [vmem:[#allocation25 + $0x2f98] sm:$0xff]
    %v2484 = vld [vmem:[#allocation25 + $0x2fa0] sm:$0xff]
    %v2485 = vld [vmem:[#allocation25 + $0x2fa8] sm:$0xff]
    %v2486 = vld [vmem:[#allocation25 + $0x2fb0] sm:$0xff]
    %v2487 = vld [vmem:[#allocation25 + $0x2fb8] sm:$0xff]
    %v2488 = vld [vmem:[#allocation25 + $0x2fc0] sm:$0xff]
    %v2489 = vld [vmem:[#allocation25 + $0x2fc8] sm:$0xff]
    %v2490 = vld [vmem:[#allocation25 + $0x2fd0] sm:$0xff]
    %v2491 = vld [vmem:[#allocation25 + $0x2fd8] sm:$0xff]
    %v2492 = vld [vmem:[#allocation25 + $0x2fe0] sm:$0xff]
    %v2493 = vld [vmem:[#allocation25 + $0x2fe8] sm:$0xff]
    %v2494 = vld [vmem:[#allocation25 + $0x2ff0] sm:$0xff]
    %v2495 = vld [vmem:[#allocation25 + $0x2ff8] sm:$0xff]
    %v2496 = vld [vmem:[#allocation26] sm:$0xff]
    %v2497 = vld [vmem:[#allocation26 + $0x8] sm:$0xff]
    %v2498 = vld [vmem:[#allocation26 + $0x10] sm:$0xff]
    %v2499 = vld [vmem:[#allocation26 + $0x18] sm:$0xff]
    %v2500 = vld [vmem:[#allocation26 + $0x20] sm:$0xff]
    %v2501 = vld [vmem:[#allocation26 + $0x28] sm:$0xff]
    %v2508 = vperm.slane %v2496, 0
    %v2509 = vperm.slane %v2496, 1
    %v2510 = vperm.slane %v2496, 2
    %v2511 = vperm.slane %v2496, 3
    %v2512 = vperm.slane %v2496, 4
    %v2513 = vperm.slane %v2496, 5
    %v2514 = vperm.slane %v2496, 6
    %v2515 = vperm.slane %v2496, 7
    %v2516 = vperm.slane %v2497, 0
    %v2517 = vperm.slane %v2497, 1
    %v2518 = vperm.slane %v2497, 2
    %v2519 = vperm.slane %v2497, 3
    %v2520 = vperm.slane %v2497, 4
    %v2521 = vperm.slane %v2497, 5
    %v2522 = vperm.slane %v2497, 6
    %v2523 = vperm.slane %v2497, 7
    %v2524 = vperm.slane %v2498, 0
    %v2525 = vperm.slane %v2498, 1
    %v2526 = vperm.slane %v2498, 2
    %v2527 = vperm.slane %v2498, 3
    %v2528 = vperm.slane %v2498, 4
    %v2529 = vperm.slane %v2498, 5
    %v2530 = vperm.slane %v2498, 6
    %v2531 = vperm.slane %v2498, 7
    %v2532 = vperm.slane %v2499, 0
    %v2533 = vperm.slane %v2499, 1
    %v2534 = vperm.slane %v2499, 2
    %v2535 = vperm.slane %v2499, 3
    %v2536 = vperm.slane %v2499, 4
    %v2537 = vperm.slane %v2499, 5
    %v2538 = vperm.slane %v2499, 6
    %v2539 = vperm.slane %v2499, 7
    %v2540 = vperm.slane %v2500, 0
    %v2541 = vperm.slane %v2500, 1
    %v2542 = vperm.slane %v2500, 2
    %v2543 = vperm.slane %v2500, 3
    %v2544 = vperm.slane %v2500, 4
    %v2545 = vperm.slane %v2500, 5
    %v2546 = vperm.slane %v2500, 6
    %v2547 = vperm.slane %v2500, 7
    %v2548 = vperm.slane %v2501, 0
    %v2549 = vperm.slane %v2501, 1
    %v2550 = vperm.slane %v2501, 2
    %v2551 = vperm.slane %v2501, 3
    %v2552 = vperm.slane %v2501, 4
    %v2553 = vperm.slane %v2501, 5
    %v2554 = vperm.slane %v2501, 6
    %v2555 = vperm.slane %v2501, 7
    %2604 = vmatpush.msra.mxu0 %v1680
    %2605 = vmatpush.msra.mxu0 %v1632
    %2606 = vmatpush.msra.mxu0 %v1584
    %2607 = vmatpush.msra.mxu0 %v1536
    %2608 = vmatpush.msra.mxu0 %v1488
    %2609 = vmatpush.msra.mxu0 %v1440
    %2610 = vmatpush.msra.mxu0 %v1392
    %2611 = vmatpush.msra.mxu0 %v1344
    %2612 = vmatpush.msra.mxu0 %v1296
    %2613 = vmatpush.msra.mxu0 %v1248
    %2614 = vmatpush.msra.mxu0 %v1200
    %2615 = vmatpush.msra.mxu0 %v1152
    %2616 = vmatpush.msra.mxu0 %v1104
    %2617 = vmatpush.msra.mxu0 %v1056
    %2618 = vmatpush.msra.mxu0 %v1008
    %2619 = vmatpush.msra.mxu0 %v960
    %2620 = vmatmul.f32.gmra.mxu0 %v958
    %v2621 = vpop.f32.mrf.mxu0
    %v2622 = vadd.f32 %v2508, %v2621
    %2623 = vdwg.mxu0
    %2624 = vmatpush.msra.mxu0 %v2448
    %2625 = vmatpush.msra.mxu0 %v2400
    %2626 = vmatpush.msra.mxu0 %v2352
    %2627 = vmatpush.msra.mxu0 %v2304
    %2628 = vmatpush.msra.mxu0 %v2256
    %2629 = vmatpush.msra.mxu0 %v2208
    %2630 = vmatpush.msra.mxu0 %v2160
    %2631 = vmatpush.msra.mxu0 %v2112
    %2632 = vmatpush.msra.mxu0 %v2064
    %2633 = vmatpush.msra.mxu0 %v2016
    %2634 = vmatpush.msra.mxu0 %v1968
    %2635 = vmatpush.msra.mxu0 %v1920
    %2636 = vmatpush.msra.mxu0 %v1872
    %2637 = vmatpush.msra.mxu0 %v1824
    %2638 = vmatpush.msra.mxu0 %v1776
    %2639 = vmatpush.msra.mxu0 %v1728
    %2640 = vmatmul.f32.gmra.mxu0 %v959
    %v2641 = vpop.f32.mrf.mxu0
    %v2642 = vadd.f32 %v2622, %v2641
    %2643 = vdwg.mxu0
    %2644 = vmatpush.msra.mxu0 %v1681
    %2645 = vmatpush.msra.mxu0 %v1633
    %2646 = vmatpush.msra.mxu0 %v1585
    %2647 = vmatpush.msra.mxu0 %v1537
    %2648 = vmatpush.msra.mxu0 %v1489
    %2649 = vmatpush.msra.mxu0 %v1441
    %2650 = vmatpush.msra.mxu0 %v1393
    %2651 = vmatpush.msra.mxu0 %v1345
    %2652 = vmatpush.msra.mxu0 %v1297
    %2653 = vmatpush.msra.mxu0 %v1249
    %2654 = vmatpush.msra.mxu0 %v1201
    %2655 = vmatpush.msra.mxu0 %v1153
    %2656 = vmatpush.msra.mxu0 %v1105
    %2657 = vmatpush.msra.mxu0 %v1057
    %2658 = vmatpush.msra.mxu0 %v1009
    %2659 = vmatpush.msra.mxu0 %v961
    %2660 = vmatmul.f32.gmra.mxu0 %v958
    %v2661 = vpop.f32.mrf.mxu0
    %v2662 = vadd.f32 %v2509, %v2661
    %2663 = vdwg.mxu0
    %2664 = vmatpush.msra.mxu0 %v2449
    %2665 = vmatpush.msra.mxu0 %v2401
    %2666 = vmatpush.msra.mxu0 %v2353
    %2667 = vmatpush.msra.mxu0 %v2305
    %2668 = vmatpush.msra.mxu0 %v2257
    %2669 = vmatpush.msra.mxu0 %v2209
    %2670 = vmatpush.msra.mxu0 %v2161
    %2671 = vmatpush.msra.mxu0 %v2113
    %2672 = vmatpush.msra.mxu0 %v2065
    %2673 = vmatpush.msra.mxu0 %v2017
    %2674 = vmatpush.msra.mxu0 %v1969
    %2675 = vmatpush.msra.mxu0 %v1921
    %2676 = vmatpush.msra.mxu0 %v1873
    %2677 = vmatpush.msra.mxu0 %v1825
    %2678 = vmatpush.msra.mxu0 %v1777
    %2679 = vmatpush.msra.mxu0 %v1729
    %2680 = vmatmul.f32.gmra.mxu0 %v959
    %v2681 = vpop.f32.mrf.mxu0
    %v2682 = vadd.f32 %v2662, %v2681
    %2683 = vdwg.mxu0
    %2684 = vmatpush.msra.mxu0 %v1682
    %2685 = vmatpush.msra.mxu0 %v1634
    %2686 = vmatpush.msra.mxu0 %v1586
    %2687 = vmatpush.msra.mxu0 %v1538
    %2688 = vmatpush.msra.mxu0 %v1490
    %2689 = vmatpush.msra.mxu0 %v1442
    %2690 = vmatpush.msra.mxu0 %v1394
    %2691 = vmatpush.msra.mxu0 %v1346
    %2692 = vmatpush.msra.mxu0 %v1298
    %2693 = vmatpush.msra.mxu0 %v1250
    %2694 = vmatpush.msra.mxu0 %v1202
    %2695 = vmatpush.msra.mxu0 %v1154
    %2696 = vmatpush.msra.mxu0 %v1106
    %2697 = vmatpush.msra.mxu0 %v1058
    %2698 = vmatpush.msra.mxu0 %v1010
    %2699 = vmatpush.msra.mxu0 %v962
    %2700 = vmatmul.f32.gmra.mxu0 %v958
    %v2701 = vpop.f32.mrf.mxu0
    %v2702 = vadd.f32 %v2510, %v2701
    %2703 = vdwg.mxu0
    %2704 = vmatpush.msra.mxu0 %v2450
    %2705 = vmatpush.msra.mxu0 %v2402
    %2706 = vmatpush.msra.mxu0 %v2354
    %2707 = vmatpush.msra.mxu0 %v2306
    %2708 = vmatpush.msra.mxu0 %v2258
    %2709 = vmatpush.msra.mxu0 %v2210
    %2710 = vmatpush.msra.mxu0 %v2162
    %2711 = vmatpush.msra.mxu0 %v2114
    %2712 = vmatpush.msra.mxu0 %v2066
    %2713 = vmatpush.msra.mxu0 %v2018
    %2714 = vmatpush.msra.mxu0 %v1970
    %2715 = vmatpush.msra.mxu0 %v1922
    %2716 = vmatpush.msra.mxu0 %v1874
    %2717 = vmatpush.msra.mxu0 %v1826
    %2718 = vmatpush.msra.mxu0 %v1778
    %2719 = vmatpush.msra.mxu0 %v1730
    %2720 = vmatmul.f32.gmra.mxu0 %v959
    %v2721 = vpop.f32.mrf.mxu0
    %v2722 = vadd.f32 %v2702, %v2721
    %2723 = vdwg.mxu0
    %2724 = vmatpush.msra.mxu0 %v1683
    %2725 = vmatpush.msra.mxu0 %v1635
    %2726 = vmatpush.msra.mxu0 %v1587
    %2727 = vmatpush.msra.mxu0 %v1539
    %2728 = vmatpush.msra.mxu0 %v1491
    %2729 = vmatpush.msra.mxu0 %v1443
    %2730 = vmatpush.msra.mxu0 %v1395
    %2731 = vmatpush.msra.mxu0 %v1347
    %2732 = vmatpush.msra.mxu0 %v1299
    %2733 = vmatpush.msra.mxu0 %v1251
    %2734 = vmatpush.msra.mxu0 %v1203
    %2735 = vmatpush.msra.mxu0 %v1155
    %2736 = vmatpush.msra.mxu0 %v1107
    %2737 = vmatpush.msra.mxu0 %v1059
    %2738 = vmatpush.msra.mxu0 %v1011
    %2739 = vmatpush.msra.mxu0 %v963
    %2740 = vmatmul.f32.gmra.mxu0 %v958
    %v2741 = vpop.f32.mrf.mxu0
    %v2742 = vadd.f32 %v2511, %v2741
    %2743 = vdwg.mxu0
    %2744 = vmatpush.msra.mxu0 %v2451
    %2745 = vmatpush.msra.mxu0 %v2403
    %2746 = vmatpush.msra.mxu0 %v2355
    %2747 = vmatpush.msra.mxu0 %v2307
    %2748 = vmatpush.msra.mxu0 %v2259
    %2749 = vmatpush.msra.mxu0 %v2211
    %2750 = vmatpush.msra.mxu0 %v2163
    %2751 = vmatpush.msra.mxu0 %v2115
    %2752 = vmatpush.msra.mxu0 %v2067
    %2753 = vmatpush.msra.mxu0 %v2019
    %2754 = vmatpush.msra.mxu0 %v1971
    %2755 = vmatpush.msra.mxu0 %v1923
    %2756 = vmatpush.msra.mxu0 %v1875
    %2757 = vmatpush.msra.mxu0 %v1827
    %2758 = vmatpush.msra.mxu0 %v1779
    %2759 = vmatpush.msra.mxu0 %v1731
    %2760 = vmatmul.f32.gmra.mxu0 %v959
    %v2761 = vpop.f32.mrf.mxu0
    %v2762 = vadd.f32 %v2742, %v2761
    %2763 = vdwg.mxu0
    %2764 = vmatpush.msra.mxu0 %v1684
    %2765 = vmatpush.msra.mxu0 %v1636
    %2766 = vmatpush.msra.mxu0 %v1588
    %2767 = vmatpush.msra.mxu0 %v1540
    %2768 = vmatpush.msra.mxu0 %v1492
    %2769 = vmatpush.msra.mxu0 %v1444
    %2770 = vmatpush.msra.mxu0 %v1396
    %2771 = vmatpush.msra.mxu0 %v1348
    %2772 = vmatpush.msra.mxu0 %v1300
    %2773 = vmatpush.msra.mxu0 %v1252
    %2774 = vmatpush.msra.mxu0 %v1204
    %2775 = vmatpush.msra.mxu0 %v1156
    %2776 = vmatpush.msra.mxu0 %v1108
    %2777 = vmatpush.msra.mxu0 %v1060
    %2778 = vmatpush.msra.mxu0 %v1012
    %2779 = vmatpush.msra.mxu0 %v964
    %2780 = vmatmul.f32.gmra.mxu0 %v958
    %v2781 = vpop.f32.mrf.mxu0
    %v2782 = vadd.f32 %v2512, %v2781
    %2783 = vdwg.mxu0
    %2784 = vmatpush.msra.mxu0 %v2452
    %2785 = vmatpush.msra.mxu0 %v2404
    %2786 = vmatpush.msra.mxu0 %v2356
    %2787 = vmatpush.msra.mxu0 %v2308
    %2788 = vmatpush.msra.mxu0 %v2260
    %2789 = vmatpush.msra.mxu0 %v2212
    %2790 = vmatpush.msra.mxu0 %v2164
    %2791 = vmatpush.msra.mxu0 %v2116
    %2792 = vmatpush.msra.mxu0 %v2068
    %2793 = vmatpush.msra.mxu0 %v2020
    %2794 = vmatpush.msra.mxu0 %v1972
    %2795 = vmatpush.msra.mxu0 %v1924
    %2796 = vmatpush.msra.mxu0 %v1876
    %2797 = vmatpush.msra.mxu0 %v1828
    %2798 = vmatpush.msra.mxu0 %v1780
    %2799 = vmatpush.msra.mxu0 %v1732
    %2800 = vmatmul.f32.gmra.mxu0 %v959
    %v2801 = vpop.f32.mrf.mxu0
    %v2802 = vadd.f32 %v2782, %v2801
    %2803 = vdwg.mxu0
    %2804 = vmatpush.msra.mxu0 %v1685
    %2805 = vmatpush.msra.mxu0 %v1637
    %2806 = vmatpush.msra.mxu0 %v1589
    %2807 = vmatpush.msra.mxu0 %v1541
    %2808 = vmatpush.msra.mxu0 %v1493
    %2809 = vmatpush.msra.mxu0 %v1445
    %2810 = vmatpush.msra.mxu0 %v1397
    %2811 = vmatpush.msra.mxu0 %v1349
    %2812 = vmatpush.msra.mxu0 %v1301
    %2813 = vmatpush.msra.mxu0 %v1253
    %2814 = vmatpush.msra.mxu0 %v1205
    %2815 = vmatpush.msra.mxu0 %v1157
    %2816 = vmatpush.msra.mxu0 %v1109
    %2817 = vmatpush.msra.mxu0 %v1061
    %2818 = vmatpush.msra.mxu0 %v1013
    %2819 = vmatpush.msra.mxu0 %v965
    %2820 = vmatmul.f32.gmra.mxu0 %v958
    %v2821 = vpop.f32.mrf.mxu0
    %v2822 = vadd.f32 %v2513, %v2821
    %2823 = vdwg.mxu0
    %2824 = vmatpush.msra.mxu0 %v2453
    %2825 = vmatpush.msra.mxu0 %v2405
    %2826 = vmatpush.msra.mxu0 %v2357
    %2827 = vmatpush.msra.mxu0 %v2309
    %2828 = vmatpush.msra.mxu0 %v2261
    %2829 = vmatpush.msra.mxu0 %v2213
    %2830 = vmatpush.msra.mxu0 %v2165
    %2831 = vmatpush.msra.mxu0 %v2117
    %2832 = vmatpush.msra.mxu0 %v2069
    %2833 = vmatpush.msra.mxu0 %v2021
    %2834 = vmatpush.msra.mxu0 %v1973
    %2835 = vmatpush.msra.mxu0 %v1925
    %2836 = vmatpush.msra.mxu0 %v1877
    %2837 = vmatpush.msra.mxu0 %v1829
    %2838 = vmatpush.msra.mxu0 %v1781
    %2839 = vmatpush.msra.mxu0 %v1733
    %2840 = vmatmul.f32.gmra.mxu0 %v959
    %v2841 = vpop.f32.mrf.mxu0
    %v2842 = vadd.f32 %v2822, %v2841
    %2843 = vdwg.mxu0
    %2844 = vmatpush.msra.mxu0 %v1686
    %2845 = vmatpush.msra.mxu0 %v1638
    %2846 = vmatpush.msra.mxu0 %v1590
    %2847 = vmatpush.msra.mxu0 %v1542
    %2848 = vmatpush.msra.mxu0 %v1494
    %2849 = vmatpush.msra.mxu0 %v1446
    %2850 = vmatpush.msra.mxu0 %v1398
    %2851 = vmatpush.msra.mxu0 %v1350
    %2852 = vmatpush.msra.mxu0 %v1302
    %2853 = vmatpush.msra.mxu0 %v1254
    %2854 = vmatpush.msra.mxu0 %v1206
    %2855 = vmatpush.msra.mxu0 %v1158
    %2856 = vmatpush.msra.mxu0 %v1110
    %2857 = vmatpush.msra.mxu0 %v1062
    %2858 = vmatpush.msra.mxu0 %v1014
    %2859 = vmatpush.msra.mxu0 %v966
    %2860 = vmatmul.f32.gmra.mxu0 %v958
    %v2861 = vpop.f32.mrf.mxu0
    %v2862 = vadd.f32 %v2514, %v2861
    %2863 = vdwg.mxu0
    %2864 = vmatpush.msra.mxu0 %v2454
    %2865 = vmatpush.msra.mxu0 %v2406
    %2866 = vmatpush.msra.mxu0 %v2358
    %2867 = vmatpush.msra.mxu0 %v2310
    %2868 = vmatpush.msra.mxu0 %v2262
    %2869 = vmatpush.msra.mxu0 %v2214
    %2870 = vmatpush.msra.mxu0 %v2166
    %2871 = vmatpush.msra.mxu0 %v2118
    %2872 = vmatpush.msra.mxu0 %v2070
    %2873 = vmatpush.msra.mxu0 %v2022
    %2874 = vmatpush.msra.mxu0 %v1974
    %2875 = vmatpush.msra.mxu0 %v1926
    %2876 = vmatpush.msra.mxu0 %v1878
    %2877 = vmatpush.msra.mxu0 %v1830
    %2878 = vmatpush.msra.mxu0 %v1782
    %2879 = vmatpush.msra.mxu0 %v1734
    %2880 = vmatmul.f32.gmra.mxu0 %v959
    %v2881 = vpop.f32.mrf.mxu0
    %v2882 = vadd.f32 %v2862, %v2881
    %2883 = vdwg.mxu0
    %2884 = vmatpush.msra.mxu0 %v1687
    %2885 = vmatpush.msra.mxu0 %v1639
    %2886 = vmatpush.msra.mxu0 %v1591
    %2887 = vmatpush.msra.mxu0 %v1543
    %2888 = vmatpush.msra.mxu0 %v1495
    %2889 = vmatpush.msra.mxu0 %v1447
    %2890 = vmatpush.msra.mxu0 %v1399
    %2891 = vmatpush.msra.mxu0 %v1351
    %2892 = vmatpush.msra.mxu0 %v1303
    %2893 = vmatpush.msra.mxu0 %v1255
    %2894 = vmatpush.msra.mxu0 %v1207
    %2895 = vmatpush.msra.mxu0 %v1159
    %2896 = vmatpush.msra.mxu0 %v1111
    %2897 = vmatpush.msra.mxu0 %v1063
    %2898 = vmatpush.msra.mxu0 %v1015
    %2899 = vmatpush.msra.mxu0 %v967
    %2900 = vmatmul.f32.gmra.mxu0 %v958
    %v2901 = vpop.f32.mrf.mxu0
    %v2902 = vadd.f32 %v2515, %v2901
    %2903 = vdwg.mxu0
    %2904 = vmatpush.msra.mxu0 %v2455
    %2905 = vmatpush.msra.mxu0 %v2407
    %2906 = vmatpush.msra.mxu0 %v2359
    %2907 = vmatpush.msra.mxu0 %v2311
    %2908 = vmatpush.msra.mxu0 %v2263
    %2909 = vmatpush.msra.mxu0 %v2215
    %2910 = vmatpush.msra.mxu0 %v2167
    %2911 = vmatpush.msra.mxu0 %v2119
    %2912 = vmatpush.msra.mxu0 %v2071
    %2913 = vmatpush.msra.mxu0 %v2023
    %2914 = vmatpush.msra.mxu0 %v1975
    %2915 = vmatpush.msra.mxu0 %v1927
    %2916 = vmatpush.msra.mxu0 %v1879
    %2917 = vmatpush.msra.mxu0 %v1831
    %2918 = vmatpush.msra.mxu0 %v1783
    %2919 = vmatpush.msra.mxu0 %v1735
    %2920 = vmatmul.f32.gmra.mxu0 %v959
    %v2921 = vpop.f32.mrf.mxu0
    %v2922 = vadd.f32 %v2902, %v2921
    %2923 = vdwg.mxu0
    %2924 = vmatpush.msra.mxu0 %v1688
    %2925 = vmatpush.msra.mxu0 %v1640
    %2926 = vmatpush.msra.mxu0 %v1592
    %2927 = vmatpush.msra.mxu0 %v1544
    %2928 = vmatpush.msra.mxu0 %v1496
    %2929 = vmatpush.msra.mxu0 %v1448
    %2930 = vmatpush.msra.mxu0 %v1400
    %2931 = vmatpush.msra.mxu0 %v1352
    %2932 = vmatpush.msra.mxu0 %v1304
    %2933 = vmatpush.msra.mxu0 %v1256
    %2934 = vmatpush.msra.mxu0 %v1208
    %2935 = vmatpush.msra.mxu0 %v1160
    %2936 = vmatpush.msra.mxu0 %v1112
    %2937 = vmatpush.msra.mxu0 %v1064
    %2938 = vmatpush.msra.mxu0 %v1016
    %2939 = vmatpush.msra.mxu0 %v968
    %2940 = vmatmul.f32.gmra.mxu0 %v958
    %v2941 = vpop.f32.mrf.mxu0
    %v2942 = vadd.f32 %v2516, %v2941
    %2943 = vdwg.mxu0
    %2944 = vmatpush.msra.mxu0 %v2456
    %2945 = vmatpush.msra.mxu0 %v2408
    %2946 = vmatpush.msra.mxu0 %v2360
    %2947 = vmatpush.msra.mxu0 %v2312
    %2948 = vmatpush.msra.mxu0 %v2264
    %2949 = vmatpush.msra.mxu0 %v2216
    %2950 = vmatpush.msra.mxu0 %v2168
    %2951 = vmatpush.msra.mxu0 %v2120
    %2952 = vmatpush.msra.mxu0 %v2072
    %2953 = vmatpush.msra.mxu0 %v2024
    %2954 = vmatpush.msra.mxu0 %v1976
    %2955 = vmatpush.msra.mxu0 %v1928
    %2956 = vmatpush.msra.mxu0 %v1880
    %2957 = vmatpush.msra.mxu0 %v1832
    %2958 = vmatpush.msra.mxu0 %v1784
    %2959 = vmatpush.msra.mxu0 %v1736
    %2960 = vmatmul.f32.gmra.mxu0 %v959
    %v2961 = vpop.f32.mrf.mxu0
    %v2962 = vadd.f32 %v2942, %v2961
    %2963 = vdwg.mxu0
    %2964 = vmatpush.msra.mxu0 %v1689
    %2965 = vmatpush.msra.mxu0 %v1641
    %2966 = vmatpush.msra.mxu0 %v1593
    %2967 = vmatpush.msra.mxu0 %v1545
    %2968 = vmatpush.msra.mxu0 %v1497
    %2969 = vmatpush.msra.mxu0 %v1449
    %2970 = vmatpush.msra.mxu0 %v1401
    %2971 = vmatpush.msra.mxu0 %v1353
    %2972 = vmatpush.msra.mxu0 %v1305
    %2973 = vmatpush.msra.mxu0 %v1257
    %2974 = vmatpush.msra.mxu0 %v1209
    %2975 = vmatpush.msra.mxu0 %v1161
    %2976 = vmatpush.msra.mxu0 %v1113
    %2977 = vmatpush.msra.mxu0 %v1065
    %2978 = vmatpush.msra.mxu0 %v1017
    %2979 = vmatpush.msra.mxu0 %v969
    %2980 = vmatmul.f32.gmra.mxu0 %v958
    %v2981 = vpop.f32.mrf.mxu0
    %v2982 = vadd.f32 %v2517, %v2981
    %2983 = vdwg.mxu0
    %2984 = vmatpush.msra.mxu0 %v2457
    %2985 = vmatpush.msra.mxu0 %v2409
    %2986 = vmatpush.msra.mxu0 %v2361
    %2987 = vmatpush.msra.mxu0 %v2313
    %2988 = vmatpush.msra.mxu0 %v2265
    %2989 = vmatpush.msra.mxu0 %v2217
    %2990 = vmatpush.msra.mxu0 %v2169
    %2991 = vmatpush.msra.mxu0 %v2121
    %2992 = vmatpush.msra.mxu0 %v2073
    %2993 = vmatpush.msra.mxu0 %v2025
    %2994 = vmatpush.msra.mxu0 %v1977
    %2995 = vmatpush.msra.mxu0 %v1929
    %2996 = vmatpush.msra.mxu0 %v1881
    %2997 = vmatpush.msra.mxu0 %v1833
    %2998 = vmatpush.msra.mxu0 %v1785
    %2999 = vmatpush.msra.mxu0 %v1737
    %3000 = vmatmul.f32.gmra.mxu0 %v959
    %v3001 = vpop.f32.mrf.mxu0
    %v3002 = vadd.f32 %v2982, %v3001
    %3003 = vdwg.mxu0
    %3004 = vmatpush.msra.mxu0 %v1690
    %3005 = vmatpush.msra.mxu0 %v1642
    %3006 = vmatpush.msra.mxu0 %v1594
    %3007 = vmatpush.msra.mxu0 %v1546
    %3008 = vmatpush.msra.mxu0 %v1498
    %3009 = vmatpush.msra.mxu0 %v1450
    %3010 = vmatpush.msra.mxu0 %v1402
    %3011 = vmatpush.msra.mxu0 %v1354
    %3012 = vmatpush.msra.mxu0 %v1306
    %3013 = vmatpush.msra.mxu0 %v1258
    %3014 = vmatpush.msra.mxu0 %v1210
    %3015 = vmatpush.msra.mxu0 %v1162
    %3016 = vmatpush.msra.mxu0 %v1114
    %3017 = vmatpush.msra.mxu0 %v1066
    %3018 = vmatpush.msra.mxu0 %v1018
    %3019 = vmatpush.msra.mxu0 %v970
    %3020 = vmatmul.f32.gmra.mxu0 %v958
    %v3021 = vpop.f32.mrf.mxu0
    %v3022 = vadd.f32 %v2518, %v3021
    %3023 = vdwg.mxu0
    %3024 = vmatpush.msra.mxu0 %v2458
    %3025 = vmatpush.msra.mxu0 %v2410
    %3026 = vmatpush.msra.mxu0 %v2362
    %3027 = vmatpush.msra.mxu0 %v2314
    %3028 = vmatpush.msra.mxu0 %v2266
    %3029 = vmatpush.msra.mxu0 %v2218
    %3030 = vmatpush.msra.mxu0 %v2170
    %3031 = vmatpush.msra.mxu0 %v2122
    %3032 = vmatpush.msra.mxu0 %v2074
    %3033 = vmatpush.msra.mxu0 %v2026
    %3034 = vmatpush.msra.mxu0 %v1978
    %3035 = vmatpush.msra.mxu0 %v1930
    %3036 = vmatpush.msra.mxu0 %v1882
    %3037 = vmatpush.msra.mxu0 %v1834
    %3038 = vmatpush.msra.mxu0 %v1786
    %3039 = vmatpush.msra.mxu0 %v1738
    %3040 = vmatmul.f32.gmra.mxu0 %v959
    %v3041 = vpop.f32.mrf.mxu0
    %v3042 = vadd.f32 %v3022, %v3041
    %3043 = vdwg.mxu0
    %3044 = vmatpush.msra.mxu0 %v1691
    %3045 = vmatpush.msra.mxu0 %v1643
    %3046 = vmatpush.msra.mxu0 %v1595
    %3047 = vmatpush.msra.mxu0 %v1547
    %3048 = vmatpush.msra.mxu0 %v1499
    %3049 = vmatpush.msra.mxu0 %v1451
    %3050 = vmatpush.msra.mxu0 %v1403
    %3051 = vmatpush.msra.mxu0 %v1355
    %3052 = vmatpush.msra.mxu0 %v1307
    %3053 = vmatpush.msra.mxu0 %v1259
    %3054 = vmatpush.msra.mxu0 %v1211
    %3055 = vmatpush.msra.mxu0 %v1163
    %3056 = vmatpush.msra.mxu0 %v1115
    %3057 = vmatpush.msra.mxu0 %v1067
    %3058 = vmatpush.msra.mxu0 %v1019
    %3059 = vmatpush.msra.mxu0 %v971
    %3060 = vmatmul.f32.gmra.mxu0 %v958
    %v3061 = vpop.f32.mrf.mxu0
    %v3062 = vadd.f32 %v2519, %v3061
    %3063 = vdwg.mxu0
    %3064 = vmatpush.msra.mxu0 %v2459
    %3065 = vmatpush.msra.mxu0 %v2411
    %3066 = vmatpush.msra.mxu0 %v2363
    %3067 = vmatpush.msra.mxu0 %v2315
    %3068 = vmatpush.msra.mxu0 %v2267
    %3069 = vmatpush.msra.mxu0 %v2219
    %3070 = vmatpush.msra.mxu0 %v2171
    %3071 = vmatpush.msra.mxu0 %v2123
    %3072 = vmatpush.msra.mxu0 %v2075
    %3073 = vmatpush.msra.mxu0 %v2027
    %3074 = vmatpush.msra.mxu0 %v1979
    %3075 = vmatpush.msra.mxu0 %v1931
    %3076 = vmatpush.msra.mxu0 %v1883
    %3077 = vmatpush.msra.mxu0 %v1835
    %3078 = vmatpush.msra.mxu0 %v1787
    %3079 = vmatpush.msra.mxu0 %v1739
    %3080 = vmatmul.f32.gmra.mxu0 %v959
    %v3081 = vpop.f32.mrf.mxu0
    %v3082 = vadd.f32 %v3062, %v3081
    %3083 = vdwg.mxu0
    %3084 = vmatpush.msra.mxu0 %v1692
    %3085 = vmatpush.msra.mxu0 %v1644
    %3086 = vmatpush.msra.mxu0 %v1596
    %3087 = vmatpush.msra.mxu0 %v1548
    %3088 = vmatpush.msra.mxu0 %v1500
    %3089 = vmatpush.msra.mxu0 %v1452
    %3090 = vmatpush.msra.mxu0 %v1404
    %3091 = vmatpush.msra.mxu0 %v1356
    %3092 = vmatpush.msra.mxu0 %v1308
    %3093 = vmatpush.msra.mxu0 %v1260
    %3094 = vmatpush.msra.mxu0 %v1212
    %3095 = vmatpush.msra.mxu0 %v1164
    %3096 = vmatpush.msra.mxu0 %v1116
    %3097 = vmatpush.msra.mxu0 %v1068
    %3098 = vmatpush.msra.mxu0 %v1020
    %3099 = vmatpush.msra.mxu0 %v972
    %3100 = vmatmul.f32.gmra.mxu0 %v958
    %v3101 = vpop.f32.mrf.mxu0
    %v3102 = vadd.f32 %v2520, %v3101
    %3103 = vdwg.mxu0
    %3104 = vmatpush.msra.mxu0 %v2460
    %3105 = vmatpush.msra.mxu0 %v2412
    %3106 = vmatpush.msra.mxu0 %v2364
    %3107 = vmatpush.msra.mxu0 %v2316
    %3108 = vmatpush.msra.mxu0 %v2268
    %3109 = vmatpush.msra.mxu0 %v2220
    %3110 = vmatpush.msra.mxu0 %v2172
    %3111 = vmatpush.msra.mxu0 %v2124
    %3112 = vmatpush.msra.mxu0 %v2076
    %3113 = vmatpush.msra.mxu0 %v2028
    %3114 = vmatpush.msra.mxu0 %v1980
    %3115 = vmatpush.msra.mxu0 %v1932
    %3116 = vmatpush.msra.mxu0 %v1884
    %3117 = vmatpush.msra.mxu0 %v1836
    %3118 = vmatpush.msra.mxu0 %v1788
    %3119 = vmatpush.msra.mxu0 %v1740
    %3120 = vmatmul.f32.gmra.mxu0 %v959
    %v3121 = vpop.f32.mrf.mxu0
    %v3122 = vadd.f32 %v3102, %v3121
    %3123 = vdwg.mxu0
    %3124 = vmatpush.msra.mxu0 %v1693
    %3125 = vmatpush.msra.mxu0 %v1645
    %3126 = vmatpush.msra.mxu0 %v1597
    %3127 = vmatpush.msra.mxu0 %v1549
    %3128 = vmatpush.msra.mxu0 %v1501
    %3129 = vmatpush.msra.mxu0 %v1453
    %3130 = vmatpush.msra.mxu0 %v1405
    %3131 = vmatpush.msra.mxu0 %v1357
    %3132 = vmatpush.msra.mxu0 %v1309
    %3133 = vmatpush.msra.mxu0 %v1261
    %3134 = vmatpush.msra.mxu0 %v1213
    %3135 = vmatpush.msra.mxu0 %v1165
    %3136 = vmatpush.msra.mxu0 %v1117
    %3137 = vmatpush.msra.mxu0 %v1069
    %3138 = vmatpush.msra.mxu0 %v1021
    %3139 = vmatpush.msra.mxu0 %v973
    %3140 = vmatmul.f32.gmra.mxu0 %v958
    %v3141 = vpop.f32.mrf.mxu0
    %v3142 = vadd.f32 %v2521, %v3141
    %3143 = vdwg.mxu0
    %3144 = vmatpush.msra.mxu0 %v2461
    %3145 = vmatpush.msra.mxu0 %v2413
    %3146 = vmatpush.msra.mxu0 %v2365
    %3147 = vmatpush.msra.mxu0 %v2317
    %3148 = vmatpush.msra.mxu0 %v2269
    %3149 = vmatpush.msra.mxu0 %v2221
    %3150 = vmatpush.msra.mxu0 %v2173
    %3151 = vmatpush.msra.mxu0 %v2125
    %3152 = vmatpush.msra.mxu0 %v2077
    %3153 = vmatpush.msra.mxu0 %v2029
    %3154 = vmatpush.msra.mxu0 %v1981
    %3155 = vmatpush.msra.mxu0 %v1933
    %3156 = vmatpush.msra.mxu0 %v1885
    %3157 = vmatpush.msra.mxu0 %v1837
    %3158 = vmatpush.msra.mxu0 %v1789
    %3159 = vmatpush.msra.mxu0 %v1741
    %3160 = vmatmul.f32.gmra.mxu0 %v959
    %v3161 = vpop.f32.mrf.mxu0
    %v3162 = vadd.f32 %v3142, %v3161
    %3163 = vdwg.mxu0
    %3164 = vmatpush.msra.mxu0 %v1694
    %3165 = vmatpush.msra.mxu0 %v1646
    %3166 = vmatpush.msra.mxu0 %v1598
    %3167 = vmatpush.msra.mxu0 %v1550
    %3168 = vmatpush.msra.mxu0 %v1502
    %3169 = vmatpush.msra.mxu0 %v1454
    %3170 = vmatpush.msra.mxu0 %v1406
    %3171 = vmatpush.msra.mxu0 %v1358
    %3172 = vmatpush.msra.mxu0 %v1310
    %3173 = vmatpush.msra.mxu0 %v1262
    %3174 = vmatpush.msra.mxu0 %v1214
    %3175 = vmatpush.msra.mxu0 %v1166
    %3176 = vmatpush.msra.mxu0 %v1118
    %3177 = vmatpush.msra.mxu0 %v1070
    %3178 = vmatpush.msra.mxu0 %v1022
    %3179 = vmatpush.msra.mxu0 %v974
    %3180 = vmatmul.f32.gmra.mxu0 %v958
    %v3181 = vpop.f32.mrf.mxu0
    %v3182 = vadd.f32 %v2522, %v3181
    %3183 = vdwg.mxu0
    %3184 = vmatpush.msra.mxu0 %v2462
    %3185 = vmatpush.msra.mxu0 %v2414
    %3186 = vmatpush.msra.mxu0 %v2366
    %3187 = vmatpush.msra.mxu0 %v2318
    %3188 = vmatpush.msra.mxu0 %v2270
    %3189 = vmatpush.msra.mxu0 %v2222
    %3190 = vmatpush.msra.mxu0 %v2174
    %3191 = vmatpush.msra.mxu0 %v2126
    %3192 = vmatpush.msra.mxu0 %v2078
    %3193 = vmatpush.msra.mxu0 %v2030
    %3194 = vmatpush.msra.mxu0 %v1982
    %3195 = vmatpush.msra.mxu0 %v1934
    %3196 = vmatpush.msra.mxu0 %v1886
    %3197 = vmatpush.msra.mxu0 %v1838
    %3198 = vmatpush.msra.mxu0 %v1790
    %3199 = vmatpush.msra.mxu0 %v1742
    %3200 = vmatmul.f32.gmra.mxu0 %v959
    %v3201 = vpop.f32.mrf.mxu0
    %v3202 = vadd.f32 %v3182, %v3201
    %3203 = vdwg.mxu0
    %3204 = vmatpush.msra.mxu0 %v1695
    %3205 = vmatpush.msra.mxu0 %v1647
    %3206 = vmatpush.msra.mxu0 %v1599
    %3207 = vmatpush.msra.mxu0 %v1551
    %3208 = vmatpush.msra.mxu0 %v1503
    %3209 = vmatpush.msra.mxu0 %v1455
    %3210 = vmatpush.msra.mxu0 %v1407
    %3211 = vmatpush.msra.mxu0 %v1359
    %3212 = vmatpush.msra.mxu0 %v1311
    %3213 = vmatpush.msra.mxu0 %v1263
    %3214 = vmatpush.msra.mxu0 %v1215
    %3215 = vmatpush.msra.mxu0 %v1167
    %3216 = vmatpush.msra.mxu0 %v1119
    %3217 = vmatpush.msra.mxu0 %v1071
    %3218 = vmatpush.msra.mxu0 %v1023
    %3219 = vmatpush.msra.mxu0 %v975
    %3220 = vmatmul.f32.gmra.mxu0 %v958
    %v3221 = vpop.f32.mrf.mxu0
    %v3222 = vadd.f32 %v2523, %v3221
    %3223 = vdwg.mxu0
    %3224 = vmatpush.msra.mxu0 %v2463
    %3225 = vmatpush.msra.mxu0 %v2415
    %3226 = vmatpush.msra.mxu0 %v2367
    %3227 = vmatpush.msra.mxu0 %v2319
    %3228 = vmatpush.msra.mxu0 %v2271
    %3229 = vmatpush.msra.mxu0 %v2223
    %3230 = vmatpush.msra.mxu0 %v2175
    %3231 = vmatpush.msra.mxu0 %v2127
    %3232 = vmatpush.msra.mxu0 %v2079
    %3233 = vmatpush.msra.mxu0 %v2031
    %3234 = vmatpush.msra.mxu0 %v1983
    %3235 = vmatpush.msra.mxu0 %v1935
    %3236 = vmatpush.msra.mxu0 %v1887
    %3237 = vmatpush.msra.mxu0 %v1839
    %3238 = vmatpush.msra.mxu0 %v1791
    %3239 = vmatpush.msra.mxu0 %v1743
    %3240 = vmatmul.f32.gmra.mxu0 %v959
    %v3241 = vpop.f32.mrf.mxu0
    %v3242 = vadd.f32 %v3222, %v3241
    %3243 = vdwg.mxu0
    %3244 = vmatpush.msra.mxu0 %v1696
    %3245 = vmatpush.msra.mxu0 %v1648
    %3246 = vmatpush.msra.mxu0 %v1600
    %3247 = vmatpush.msra.mxu0 %v1552
    %3248 = vmatpush.msra.mxu0 %v1504
    %3249 = vmatpush.msra.mxu0 %v1456
    %3250 = vmatpush.msra.mxu0 %v1408
    %3251 = vmatpush.msra.mxu0 %v1360
    %3252 = vmatpush.msra.mxu0 %v1312
    %3253 = vmatpush.msra.mxu0 %v1264
    %3254 = vmatpush.msra.mxu0 %v1216
    %3255 = vmatpush.msra.mxu0 %v1168
    %3256 = vmatpush.msra.mxu0 %v1120
    %3257 = vmatpush.msra.mxu0 %v1072
    %3258 = vmatpush.msra.mxu0 %v1024
    %3259 = vmatpush.msra.mxu0 %v976
    %3260 = vmatmul.f32.gmra.mxu0 %v958
    %v3261 = vpop.f32.mrf.mxu0
    %v3262 = vadd.f32 %v2524, %v3261
    %3263 = vdwg.mxu0
    %3264 = vmatpush.msra.mxu0 %v2464
    %3265 = vmatpush.msra.mxu0 %v2416
    %3266 = vmatpush.msra.mxu0 %v2368
    %3267 = vmatpush.msra.mxu0 %v2320
    %3268 = vmatpush.msra.mxu0 %v2272
    %3269 = vmatpush.msra.mxu0 %v2224
    %3270 = vmatpush.msra.mxu0 %v2176
    %3271 = vmatpush.msra.mxu0 %v2128
    %3272 = vmatpush.msra.mxu0 %v2080
    %3273 = vmatpush.msra.mxu0 %v2032
    %3274 = vmatpush.msra.mxu0 %v1984
    %3275 = vmatpush.msra.mxu0 %v1936
    %3276 = vmatpush.msra.mxu0 %v1888
    %3277 = vmatpush.msra.mxu0 %v1840
    %3278 = vmatpush.msra.mxu0 %v1792
    %3279 = vmatpush.msra.mxu0 %v1744
    %3280 = vmatmul.f32.gmra.mxu0 %v959
    %v3281 = vpop.f32.mrf.mxu0
    %v3282 = vadd.f32 %v3262, %v3281
    %3283 = vdwg.mxu0
    %3284 = vmatpush.msra.mxu0 %v1697
    %3285 = vmatpush.msra.mxu0 %v1649
    %3286 = vmatpush.msra.mxu0 %v1601
    %3287 = vmatpush.msra.mxu0 %v1553
    %3288 = vmatpush.msra.mxu0 %v1505
    %3289 = vmatpush.msra.mxu0 %v1457
    %3290 = vmatpush.msra.mxu0 %v1409
    %3291 = vmatpush.msra.mxu0 %v1361
    %3292 = vmatpush.msra.mxu0 %v1313
    %3293 = vmatpush.msra.mxu0 %v1265
    %3294 = vmatpush.msra.mxu0 %v1217
    %3295 = vmatpush.msra.mxu0 %v1169
    %3296 = vmatpush.msra.mxu0 %v1121
    %3297 = vmatpush.msra.mxu0 %v1073
    %3298 = vmatpush.msra.mxu0 %v1025
    %3299 = vmatpush.msra.mxu0 %v977
    %3300 = vmatmul.f32.gmra.mxu0 %v958
    %v3301 = vpop.f32.mrf.mxu0
    %v3302 = vadd.f32 %v2525, %v3301
    %3303 = vdwg.mxu0
    %3304 = vmatpush.msra.mxu0 %v2465
    %3305 = vmatpush.msra.mxu0 %v2417
    %3306 = vmatpush.msra.mxu0 %v2369
    %3307 = vmatpush.msra.mxu0 %v2321
    %3308 = vmatpush.msra.mxu0 %v2273
    %3309 = vmatpush.msra.mxu0 %v2225
    %3310 = vmatpush.msra.mxu0 %v2177
    %3311 = vmatpush.msra.mxu0 %v2129
    %3312 = vmatpush.msra.mxu0 %v2081
    %3313 = vmatpush.msra.mxu0 %v2033
    %3314 = vmatpush.msra.mxu0 %v1985
    %3315 = vmatpush.msra.mxu0 %v1937
    %3316 = vmatpush.msra.mxu0 %v1889
    %3317 = vmatpush.msra.mxu0 %v1841
    %3318 = vmatpush.msra.mxu0 %v1793
    %3319 = vmatpush.msra.mxu0 %v1745
    %3320 = vmatmul.f32.gmra.mxu0 %v959
    %v3321 = vpop.f32.mrf.mxu0
    %v3322 = vadd.f32 %v3302, %v3321
    %3323 = vdwg.mxu0
    %3324 = vmatpush.msra.mxu0 %v1698
    %3325 = vmatpush.msra.mxu0 %v1650
    %3326 = vmatpush.msra.mxu0 %v1602
    %3327 = vmatpush.msra.mxu0 %v1554
    %3328 = vmatpush.msra.mxu0 %v1506
    %3329 = vmatpush.msra.mxu0 %v1458
    %3330 = vmatpush.msra.mxu0 %v1410
    %3331 = vmatpush.msra.mxu0 %v1362
    %3332 = vmatpush.msra.mxu0 %v1314
    %3333 = vmatpush.msra.mxu0 %v1266
    %3334 = vmatpush.msra.mxu0 %v1218
    %3335 = vmatpush.msra.mxu0 %v1170
    %3336 = vmatpush.msra.mxu0 %v1122
    %3337 = vmatpush.msra.mxu0 %v1074
    %3338 = vmatpush.msra.mxu0 %v1026
    %3339 = vmatpush.msra.mxu0 %v978
    %3340 = vmatmul.f32.gmra.mxu0 %v958
    %v3341 = vpop.f32.mrf.mxu0
    %v3342 = vadd.f32 %v2526, %v3341
    %3343 = vdwg.mxu0
    %3344 = vmatpush.msra.mxu0 %v2466
    %3345 = vmatpush.msra.mxu0 %v2418
    %3346 = vmatpush.msra.mxu0 %v2370
    %3347 = vmatpush.msra.mxu0 %v2322
    %3348 = vmatpush.msra.mxu0 %v2274
    %3349 = vmatpush.msra.mxu0 %v2226
    %3350 = vmatpush.msra.mxu0 %v2178
    %3351 = vmatpush.msra.mxu0 %v2130
    %3352 = vmatpush.msra.mxu0 %v2082
    %3353 = vmatpush.msra.mxu0 %v2034
    %3354 = vmatpush.msra.mxu0 %v1986
    %3355 = vmatpush.msra.mxu0 %v1938
    %3356 = vmatpush.msra.mxu0 %v1890
    %3357 = vmatpush.msra.mxu0 %v1842
    %3358 = vmatpush.msra.mxu0 %v1794
    %3359 = vmatpush.msra.mxu0 %v1746
    %3360 = vmatmul.f32.gmra.mxu0 %v959
    %v3361 = vpop.f32.mrf.mxu0
    %v3362 = vadd.f32 %v3342, %v3361
    %3363 = vdwg.mxu0
    %3364 = vmatpush.msra.mxu0 %v1699
    %3365 = vmatpush.msra.mxu0 %v1651
    %3366 = vmatpush.msra.mxu0 %v1603
    %3367 = vmatpush.msra.mxu0 %v1555
    %3368 = vmatpush.msra.mxu0 %v1507
    %3369 = vmatpush.msra.mxu0 %v1459
    %3370 = vmatpush.msra.mxu0 %v1411
    %3371 = vmatpush.msra.mxu0 %v1363
    %3372 = vmatpush.msra.mxu0 %v1315
    %3373 = vmatpush.msra.mxu0 %v1267
    %3374 = vmatpush.msra.mxu0 %v1219
    %3375 = vmatpush.msra.mxu0 %v1171
    %3376 = vmatpush.msra.mxu0 %v1123
    %3377 = vmatpush.msra.mxu0 %v1075
    %3378 = vmatpush.msra.mxu0 %v1027
    %3379 = vmatpush.msra.mxu0 %v979
    %3380 = vmatmul.f32.gmra.mxu0 %v958
    %v3381 = vpop.f32.mrf.mxu0
    %v3382 = vadd.f32 %v2527, %v3381
    %3383 = vdwg.mxu0
    %3384 = vmatpush.msra.mxu0 %v2467
    %3385 = vmatpush.msra.mxu0 %v2419
    %3386 = vmatpush.msra.mxu0 %v2371
    %3387 = vmatpush.msra.mxu0 %v2323
    %3388 = vmatpush.msra.mxu0 %v2275
    %3389 = vmatpush.msra.mxu0 %v2227
    %3390 = vmatpush.msra.mxu0 %v2179
    %3391 = vmatpush.msra.mxu0 %v2131
    %3392 = vmatpush.msra.mxu0 %v2083
    %3393 = vmatpush.msra.mxu0 %v2035
    %3394 = vmatpush.msra.mxu0 %v1987
    %3395 = vmatpush.msra.mxu0 %v1939
    %3396 = vmatpush.msra.mxu0 %v1891
    %3397 = vmatpush.msra.mxu0 %v1843
    %3398 = vmatpush.msra.mxu0 %v1795
    %3399 = vmatpush.msra.mxu0 %v1747
    %3400 = vmatmul.f32.gmra.mxu0 %v959
    %v3401 = vpop.f32.mrf.mxu0
    %v3402 = vadd.f32 %v3382, %v3401
    %3403 = vdwg.mxu0
    %3404 = vmatpush.msra.mxu0 %v1700
    %3405 = vmatpush.msra.mxu0 %v1652
    %3406 = vmatpush.msra.mxu0 %v1604
    %3407 = vmatpush.msra.mxu0 %v1556
    %3408 = vmatpush.msra.mxu0 %v1508
    %3409 = vmatpush.msra.mxu0 %v1460
    %3410 = vmatpush.msra.mxu0 %v1412
    %3411 = vmatpush.msra.mxu0 %v1364
    %3412 = vmatpush.msra.mxu0 %v1316
    %3413 = vmatpush.msra.mxu0 %v1268
    %3414 = vmatpush.msra.mxu0 %v1220
    %3415 = vmatpush.msra.mxu0 %v1172
    %3416 = vmatpush.msra.mxu0 %v1124
    %3417 = vmatpush.msra.mxu0 %v1076
    %3418 = vmatpush.msra.mxu0 %v1028
    %3419 = vmatpush.msra.mxu0 %v980
    %3420 = vmatmul.f32.gmra.mxu0 %v958
    %v3421 = vpop.f32.mrf.mxu0
    %v3422 = vadd.f32 %v2528, %v3421
    %3423 = vdwg.mxu0
    %3424 = vmatpush.msra.mxu0 %v2468
    %3425 = vmatpush.msra.mxu0 %v2420
    %3426 = vmatpush.msra.mxu0 %v2372
    %3427 = vmatpush.msra.mxu0 %v2324
    %3428 = vmatpush.msra.mxu0 %v2276
    %3429 = vmatpush.msra.mxu0 %v2228
    %3430 = vmatpush.msra.mxu0 %v2180
    %3431 = vmatpush.msra.mxu0 %v2132
    %3432 = vmatpush.msra.mxu0 %v2084
    %3433 = vmatpush.msra.mxu0 %v2036
    %3434 = vmatpush.msra.mxu0 %v1988
    %3435 = vmatpush.msra.mxu0 %v1940
    %3436 = vmatpush.msra.mxu0 %v1892
    %3437 = vmatpush.msra.mxu0 %v1844
    %3438 = vmatpush.msra.mxu0 %v1796
    %3439 = vmatpush.msra.mxu0 %v1748
    %3440 = vmatmul.f32.gmra.mxu0 %v959
    %v3441 = vpop.f32.mrf.mxu0
    %v3442 = vadd.f32 %v3422, %v3441
    %3443 = vdwg.mxu0
    %3444 = vmatpush.msra.mxu0 %v1701
    %3445 = vmatpush.msra.mxu0 %v1653
    %3446 = vmatpush.msra.mxu0 %v1605
    %3447 = vmatpush.msra.mxu0 %v1557
    %3448 = vmatpush.msra.mxu0 %v1509
    %3449 = vmatpush.msra.mxu0 %v1461
    %3450 = vmatpush.msra.mxu0 %v1413
    %3451 = vmatpush.msra.mxu0 %v1365
    %3452 = vmatpush.msra.mxu0 %v1317
    %3453 = vmatpush.msra.mxu0 %v1269
    %3454 = vmatpush.msra.mxu0 %v1221
    %3455 = vmatpush.msra.mxu0 %v1173
    %3456 = vmatpush.msra.mxu0 %v1125
    %3457 = vmatpush.msra.mxu0 %v1077
    %3458 = vmatpush.msra.mxu0 %v1029
    %3459 = vmatpush.msra.mxu0 %v981
    %3460 = vmatmul.f32.gmra.mxu0 %v958
    %v3461 = vpop.f32.mrf.mxu0
    %v3462 = vadd.f32 %v2529, %v3461
    %3463 = vdwg.mxu0
    %3464 = vmatpush.msra.mxu0 %v2469
    %3465 = vmatpush.msra.mxu0 %v2421
    %3466 = vmatpush.msra.mxu0 %v2373
    %3467 = vmatpush.msra.mxu0 %v2325
    %3468 = vmatpush.msra.mxu0 %v2277
    %3469 = vmatpush.msra.mxu0 %v2229
    %3470 = vmatpush.msra.mxu0 %v2181
    %3471 = vmatpush.msra.mxu0 %v2133
    %3472 = vmatpush.msra.mxu0 %v2085
    %3473 = vmatpush.msra.mxu0 %v2037
    %3474 = vmatpush.msra.mxu0 %v1989
    %3475 = vmatpush.msra.mxu0 %v1941
    %3476 = vmatpush.msra.mxu0 %v1893
    %3477 = vmatpush.msra.mxu0 %v1845
    %3478 = vmatpush.msra.mxu0 %v1797
    %3479 = vmatpush.msra.mxu0 %v1749
    %3480 = vmatmul.f32.gmra.mxu0 %v959
    %v3481 = vpop.f32.mrf.mxu0
    %v3482 = vadd.f32 %v3462, %v3481
    %3483 = vdwg.mxu0
    %3484 = vmatpush.msra.mxu0 %v1702
    %3485 = vmatpush.msra.mxu0 %v1654
    %3486 = vmatpush.msra.mxu0 %v1606
    %3487 = vmatpush.msra.mxu0 %v1558
    %3488 = vmatpush.msra.mxu0 %v1510
    %3489 = vmatpush.msra.mxu0 %v1462
    %3490 = vmatpush.msra.mxu0 %v1414
    %3491 = vmatpush.msra.mxu0 %v1366
    %3492 = vmatpush.msra.mxu0 %v1318
    %3493 = vmatpush.msra.mxu0 %v1270
    %3494 = vmatpush.msra.mxu0 %v1222
    %3495 = vmatpush.msra.mxu0 %v1174
    %3496 = vmatpush.msra.mxu0 %v1126
    %3497 = vmatpush.msra.mxu0 %v1078
    %3498 = vmatpush.msra.mxu0 %v1030
    %3499 = vmatpush.msra.mxu0 %v982
    %3500 = vmatmul.f32.gmra.mxu0 %v958
    %v3501 = vpop.f32.mrf.mxu0
    %v3502 = vadd.f32 %v2530, %v3501
    %3503 = vdwg.mxu0
    %3504 = vmatpush.msra.mxu0 %v2470
    %3505 = vmatpush.msra.mxu0 %v2422
    %3506 = vmatpush.msra.mxu0 %v2374
    %3507 = vmatpush.msra.mxu0 %v2326
    %3508 = vmatpush.msra.mxu0 %v2278
    %3509 = vmatpush.msra.mxu0 %v2230
    %3510 = vmatpush.msra.mxu0 %v2182
    %3511 = vmatpush.msra.mxu0 %v2134
    %3512 = vmatpush.msra.mxu0 %v2086
    %3513 = vmatpush.msra.mxu0 %v2038
    %3514 = vmatpush.msra.mxu0 %v1990
    %3515 = vmatpush.msra.mxu0 %v1942
    %3516 = vmatpush.msra.mxu0 %v1894
    %3517 = vmatpush.msra.mxu0 %v1846
    %3518 = vmatpush.msra.mxu0 %v1798
    %3519 = vmatpush.msra.mxu0 %v1750
    %3520 = vmatmul.f32.gmra.mxu0 %v959
    %v3521 = vpop.f32.mrf.mxu0
    %v3522 = vadd.f32 %v3502, %v3521
    %3523 = vdwg.mxu0
    %3524 = vmatpush.msra.mxu0 %v1703
    %3525 = vmatpush.msra.mxu0 %v1655
    %3526 = vmatpush.msra.mxu0 %v1607
    %3527 = vmatpush.msra.mxu0 %v1559
    %3528 = vmatpush.msra.mxu0 %v1511
    %3529 = vmatpush.msra.mxu0 %v1463
    %3530 = vmatpush.msra.mxu0 %v1415
    %3531 = vmatpush.msra.mxu0 %v1367
    %3532 = vmatpush.msra.mxu0 %v1319
    %3533 = vmatpush.msra.mxu0 %v1271
    %3534 = vmatpush.msra.mxu0 %v1223
    %3535 = vmatpush.msra.mxu0 %v1175
    %3536 = vmatpush.msra.mxu0 %v1127
    %3537 = vmatpush.msra.mxu0 %v1079
    %3538 = vmatpush.msra.mxu0 %v1031
    %3539 = vmatpush.msra.mxu0 %v983
    %3540 = vmatmul.f32.gmra.mxu0 %v958
    %v3541 = vpop.f32.mrf.mxu0
    %v3542 = vadd.f32 %v2531, %v3541
    %3543 = vdwg.mxu0
    %3544 = vmatpush.msra.mxu0 %v2471
    %3545 = vmatpush.msra.mxu0 %v2423
    %3546 = vmatpush.msra.mxu0 %v2375
    %3547 = vmatpush.msra.mxu0 %v2327
    %3548 = vmatpush.msra.mxu0 %v2279
    %3549 = vmatpush.msra.mxu0 %v2231
    %3550 = vmatpush.msra.mxu0 %v2183
    %3551 = vmatpush.msra.mxu0 %v2135
    %3552 = vmatpush.msra.mxu0 %v2087
    %3553 = vmatpush.msra.mxu0 %v2039
    %3554 = vmatpush.msra.mxu0 %v1991
    %3555 = vmatpush.msra.mxu0 %v1943
    %3556 = vmatpush.msra.mxu0 %v1895
    %3557 = vmatpush.msra.mxu0 %v1847
    %3558 = vmatpush.msra.mxu0 %v1799
    %3559 = vmatpush.msra.mxu0 %v1751
    %3560 = vmatmul.f32.gmra.mxu0 %v959
    %v3561 = vpop.f32.mrf.mxu0
    %v3562 = vadd.f32 %v3542, %v3561
    %3563 = vdwg.mxu0
    %3564 = vmatpush.msra.mxu0 %v1704
    %3565 = vmatpush.msra.mxu0 %v1656
    %3566 = vmatpush.msra.mxu0 %v1608
    %3567 = vmatpush.msra.mxu0 %v1560
    %3568 = vmatpush.msra.mxu0 %v1512
    %3569 = vmatpush.msra.mxu0 %v1464
    %3570 = vmatpush.msra.mxu0 %v1416
    %3571 = vmatpush.msra.mxu0 %v1368
    %3572 = vmatpush.msra.mxu0 %v1320
    %3573 = vmatpush.msra.mxu0 %v1272
    %3574 = vmatpush.msra.mxu0 %v1224
    %3575 = vmatpush.msra.mxu0 %v1176
    %3576 = vmatpush.msra.mxu0 %v1128
    %3577 = vmatpush.msra.mxu0 %v1080
    %3578 = vmatpush.msra.mxu0 %v1032
    %3579 = vmatpush.msra.mxu0 %v984
    %3580 = vmatmul.f32.gmra.mxu0 %v958
    %v3581 = vpop.f32.mrf.mxu0
    %v3582 = vadd.f32 %v2532, %v3581
    %3583 = vdwg.mxu0
    %3584 = vmatpush.msra.mxu0 %v2472
    %3585 = vmatpush.msra.mxu0 %v2424
    %3586 = vmatpush.msra.mxu0 %v2376
    %3587 = vmatpush.msra.mxu0 %v2328
    %3588 = vmatpush.msra.mxu0 %v2280
    %3589 = vmatpush.msra.mxu0 %v2232
    %3590 = vmatpush.msra.mxu0 %v2184
    %3591 = vmatpush.msra.mxu0 %v2136
    %3592 = vmatpush.msra.mxu0 %v2088
    %3593 = vmatpush.msra.mxu0 %v2040
    %3594 = vmatpush.msra.mxu0 %v1992
    %3595 = vmatpush.msra.mxu0 %v1944
    %3596 = vmatpush.msra.mxu0 %v1896
    %3597 = vmatpush.msra.mxu0 %v1848
    %3598 = vmatpush.msra.mxu0 %v1800
    %3599 = vmatpush.msra.mxu0 %v1752
    %3600 = vmatmul.f32.gmra.mxu0 %v959
    %v3601 = vpop.f32.mrf.mxu0
    %v3602 = vadd.f32 %v3582, %v3601
    %3603 = vdwg.mxu0
    %3604 = vmatpush.msra.mxu0 %v1705
    %3605 = vmatpush.msra.mxu0 %v1657
    %3606 = vmatpush.msra.mxu0 %v1609
    %3607 = vmatpush.msra.mxu0 %v1561
    %3608 = vmatpush.msra.mxu0 %v1513
    %3609 = vmatpush.msra.mxu0 %v1465
    %3610 = vmatpush.msra.mxu0 %v1417
    %3611 = vmatpush.msra.mxu0 %v1369
    %3612 = vmatpush.msra.mxu0 %v1321
    %3613 = vmatpush.msra.mxu0 %v1273
    %3614 = vmatpush.msra.mxu0 %v1225
    %3615 = vmatpush.msra.mxu0 %v1177
    %3616 = vmatpush.msra.mxu0 %v1129
    %3617 = vmatpush.msra.mxu0 %v1081
    %3618 = vmatpush.msra.mxu0 %v1033
    %3619 = vmatpush.msra.mxu0 %v985
    %3620 = vmatmul.f32.gmra.mxu0 %v958
    %v3621 = vpop.f32.mrf.mxu0
    %v3622 = vadd.f32 %v2533, %v3621
    %3623 = vdwg.mxu0
    %3624 = vmatpush.msra.mxu0 %v2473
    %3625 = vmatpush.msra.mxu0 %v2425
    %3626 = vmatpush.msra.mxu0 %v2377
    %3627 = vmatpush.msra.mxu0 %v2329
    %3628 = vmatpush.msra.mxu0 %v2281
    %3629 = vmatpush.msra.mxu0 %v2233
    %3630 = vmatpush.msra.mxu0 %v2185
    %3631 = vmatpush.msra.mxu0 %v2137
    %3632 = vmatpush.msra.mxu0 %v2089
    %3633 = vmatpush.msra.mxu0 %v2041
    %3634 = vmatpush.msra.mxu0 %v1993
    %3635 = vmatpush.msra.mxu0 %v1945
    %3636 = vmatpush.msra.mxu0 %v1897
    %3637 = vmatpush.msra.mxu0 %v1849
    %3638 = vmatpush.msra.mxu0 %v1801
    %3639 = vmatpush.msra.mxu0 %v1753
    %3640 = vmatmul.f32.gmra.mxu0 %v959
    %v3641 = vpop.f32.mrf.mxu0
    %v3642 = vadd.f32 %v3622, %v3641
    %3643 = vdwg.mxu0
    %3644 = vmatpush.msra.mxu0 %v1706
    %3645 = vmatpush.msra.mxu0 %v1658
    %3646 = vmatpush.msra.mxu0 %v1610
    %3647 = vmatpush.msra.mxu0 %v1562
    %3648 = vmatpush.msra.mxu0 %v1514
    %3649 = vmatpush.msra.mxu0 %v1466
    %3650 = vmatpush.msra.mxu0 %v1418
    %3651 = vmatpush.msra.mxu0 %v1370
    %3652 = vmatpush.msra.mxu0 %v1322
    %3653 = vmatpush.msra.mxu0 %v1274
    %3654 = vmatpush.msra.mxu0 %v1226
    %3655 = vmatpush.msra.mxu0 %v1178
    %3656 = vmatpush.msra.mxu0 %v1130
    %3657 = vmatpush.msra.mxu0 %v1082
    %3658 = vmatpush.msra.mxu0 %v1034
    %3659 = vmatpush.msra.mxu0 %v986
    %3660 = vmatmul.f32.gmra.mxu0 %v958
    %v3661 = vpop.f32.mrf.mxu0
    %v3662 = vadd.f32 %v2534, %v3661
    %3663 = vdwg.mxu0
    %3664 = vmatpush.msra.mxu0 %v2474
    %3665 = vmatpush.msra.mxu0 %v2426
    %3666 = vmatpush.msra.mxu0 %v2378
    %3667 = vmatpush.msra.mxu0 %v2330
    %3668 = vmatpush.msra.mxu0 %v2282
    %3669 = vmatpush.msra.mxu0 %v2234
    %3670 = vmatpush.msra.mxu0 %v2186
    %3671 = vmatpush.msra.mxu0 %v2138
    %3672 = vmatpush.msra.mxu0 %v2090
    %3673 = vmatpush.msra.mxu0 %v2042
    %3674 = vmatpush.msra.mxu0 %v1994
    %3675 = vmatpush.msra.mxu0 %v1946
    %3676 = vmatpush.msra.mxu0 %v1898
    %3677 = vmatpush.msra.mxu0 %v1850
    %3678 = vmatpush.msra.mxu0 %v1802
    %3679 = vmatpush.msra.mxu0 %v1754
    %3680 = vmatmul.f32.gmra.mxu0 %v959
    %v3681 = vpop.f32.mrf.mxu0
    %v3682 = vadd.f32 %v3662, %v3681
    %3683 = vdwg.mxu0
    %3684 = vmatpush.msra.mxu0 %v1707
    %3685 = vmatpush.msra.mxu0 %v1659
    %3686 = vmatpush.msra.mxu0 %v1611
    %3687 = vmatpush.msra.mxu0 %v1563
    %3688 = vmatpush.msra.mxu0 %v1515
    %3689 = vmatpush.msra.mxu0 %v1467
    %3690 = vmatpush.msra.mxu0 %v1419
    %3691 = vmatpush.msra.mxu0 %v1371
    %3692 = vmatpush.msra.mxu0 %v1323
    %3693 = vmatpush.msra.mxu0 %v1275
    %3694 = vmatpush.msra.mxu0 %v1227
    %3695 = vmatpush.msra.mxu0 %v1179
    %3696 = vmatpush.msra.mxu0 %v1131
    %3697 = vmatpush.msra.mxu0 %v1083
    %3698 = vmatpush.msra.mxu0 %v1035
    %3699 = vmatpush.msra.mxu0 %v987
    %3700 = vmatmul.f32.gmra.mxu0 %v958
    %v3701 = vpop.f32.mrf.mxu0
    %v3702 = vadd.f32 %v2535, %v3701
    %3703 = vdwg.mxu0
    %3704 = vmatpush.msra.mxu0 %v2475
    %3705 = vmatpush.msra.mxu0 %v2427
    %3706 = vmatpush.msra.mxu0 %v2379
    %3707 = vmatpush.msra.mxu0 %v2331
    %3708 = vmatpush.msra.mxu0 %v2283
    %3709 = vmatpush.msra.mxu0 %v2235
    %3710 = vmatpush.msra.mxu0 %v2187
    %3711 = vmatpush.msra.mxu0 %v2139
    %3712 = vmatpush.msra.mxu0 %v2091
    %3713 = vmatpush.msra.mxu0 %v2043
    %3714 = vmatpush.msra.mxu0 %v1995
    %3715 = vmatpush.msra.mxu0 %v1947
    %3716 = vmatpush.msra.mxu0 %v1899
    %3717 = vmatpush.msra.mxu0 %v1851
    %3718 = vmatpush.msra.mxu0 %v1803
    %3719 = vmatpush.msra.mxu0 %v1755
    %3720 = vmatmul.f32.gmra.mxu0 %v959
    %v3721 = vpop.f32.mrf.mxu0
    %v3722 = vadd.f32 %v3702, %v3721
    %3723 = vdwg.mxu0
    %3724 = vmatpush.msra.mxu0 %v1708
    %3725 = vmatpush.msra.mxu0 %v1660
    %3726 = vmatpush.msra.mxu0 %v1612
    %3727 = vmatpush.msra.mxu0 %v1564
    %3728 = vmatpush.msra.mxu0 %v1516
    %3729 = vmatpush.msra.mxu0 %v1468
    %3730 = vmatpush.msra.mxu0 %v1420
    %3731 = vmatpush.msra.mxu0 %v1372
    %3732 = vmatpush.msra.mxu0 %v1324
    %3733 = vmatpush.msra.mxu0 %v1276
    %3734 = vmatpush.msra.mxu0 %v1228
    %3735 = vmatpush.msra.mxu0 %v1180
    %3736 = vmatpush.msra.mxu0 %v1132
    %3737 = vmatpush.msra.mxu0 %v1084
    %3738 = vmatpush.msra.mxu0 %v1036
    %3739 = vmatpush.msra.mxu0 %v988
    %3740 = vmatmul.f32.gmra.mxu0 %v958
    %v3741 = vpop.f32.mrf.mxu0
    %v3742 = vadd.f32 %v2536, %v3741
    %3743 = vdwg.mxu0
    %3744 = vmatpush.msra.mxu0 %v2476
    %3745 = vmatpush.msra.mxu0 %v2428
    %3746 = vmatpush.msra.mxu0 %v2380
    %3747 = vmatpush.msra.mxu0 %v2332
    %3748 = vmatpush.msra.mxu0 %v2284
    %3749 = vmatpush.msra.mxu0 %v2236
    %3750 = vmatpush.msra.mxu0 %v2188
    %3751 = vmatpush.msra.mxu0 %v2140
    %3752 = vmatpush.msra.mxu0 %v2092
    %3753 = vmatpush.msra.mxu0 %v2044
    %3754 = vmatpush.msra.mxu0 %v1996
    %3755 = vmatpush.msra.mxu0 %v1948
    %3756 = vmatpush.msra.mxu0 %v1900
    %3757 = vmatpush.msra.mxu0 %v1852
    %3758 = vmatpush.msra.mxu0 %v1804
    %3759 = vmatpush.msra.mxu0 %v1756
    %3760 = vmatmul.f32.gmra.mxu0 %v959
    %v3761 = vpop.f32.mrf.mxu0
    %v3762 = vadd.f32 %v3742, %v3761
    %3763 = vdwg.mxu0
    %3764 = vmatpush.msra.mxu0 %v1709
    %3765 = vmatpush.msra.mxu0 %v1661
    %3766 = vmatpush.msra.mxu0 %v1613
    %3767 = vmatpush.msra.mxu0 %v1565
    %3768 = vmatpush.msra.mxu0 %v1517
    %3769 = vmatpush.msra.mxu0 %v1469
    %3770 = vmatpush.msra.mxu0 %v1421
    %3771 = vmatpush.msra.mxu0 %v1373
    %3772 = vmatpush.msra.mxu0 %v1325
    %3773 = vmatpush.msra.mxu0 %v1277
    %3774 = vmatpush.msra.mxu0 %v1229
    %3775 = vmatpush.msra.mxu0 %v1181
    %3776 = vmatpush.msra.mxu0 %v1133
    %3777 = vmatpush.msra.mxu0 %v1085
    %3778 = vmatpush.msra.mxu0 %v1037
    %3779 = vmatpush.msra.mxu0 %v989
    %3780 = vmatmul.f32.gmra.mxu0 %v958
    %v3781 = vpop.f32.mrf.mxu0
    %v3782 = vadd.f32 %v2537, %v3781
    %3783 = vdwg.mxu0
    %3784 = vmatpush.msra.mxu0 %v2477
    %3785 = vmatpush.msra.mxu0 %v2429
    %3786 = vmatpush.msra.mxu0 %v2381
    %3787 = vmatpush.msra.mxu0 %v2333
    %3788 = vmatpush.msra.mxu0 %v2285
    %3789 = vmatpush.msra.mxu0 %v2237
    %3790 = vmatpush.msra.mxu0 %v2189
    %3791 = vmatpush.msra.mxu0 %v2141
    %3792 = vmatpush.msra.mxu0 %v2093
    %3793 = vmatpush.msra.mxu0 %v2045
    %3794 = vmatpush.msra.mxu0 %v1997
    %3795 = vmatpush.msra.mxu0 %v1949
    %3796 = vmatpush.msra.mxu0 %v1901
    %3797 = vmatpush.msra.mxu0 %v1853
    %3798 = vmatpush.msra.mxu0 %v1805
    %3799 = vmatpush.msra.mxu0 %v1757
    %3800 = vmatmul.f32.gmra.mxu0 %v959
    %v3801 = vpop.f32.mrf.mxu0
    %v3802 = vadd.f32 %v3782, %v3801
    %3803 = vdwg.mxu0
    %3804 = vmatpush.msra.mxu0 %v1710
    %3805 = vmatpush.msra.mxu0 %v1662
    %3806 = vmatpush.msra.mxu0 %v1614
    %3807 = vmatpush.msra.mxu0 %v1566
    %3808 = vmatpush.msra.mxu0 %v1518
    %3809 = vmatpush.msra.mxu0 %v1470
    %3810 = vmatpush.msra.mxu0 %v1422
    %3811 = vmatpush.msra.mxu0 %v1374
    %3812 = vmatpush.msra.mxu0 %v1326
    %3813 = vmatpush.msra.mxu0 %v1278
    %3814 = vmatpush.msra.mxu0 %v1230
    %3815 = vmatpush.msra.mxu0 %v1182
    %3816 = vmatpush.msra.mxu0 %v1134
    %3817 = vmatpush.msra.mxu0 %v1086
    %3818 = vmatpush.msra.mxu0 %v1038
    %3819 = vmatpush.msra.mxu0 %v990
    %3820 = vmatmul.f32.gmra.mxu0 %v958
    %v3821 = vpop.f32.mrf.mxu0
    %v3822 = vadd.f32 %v2538, %v3821
    %3823 = vdwg.mxu0
    %3824 = vmatpush.msra.mxu0 %v2478
    %3825 = vmatpush.msra.mxu0 %v2430
    %3826 = vmatpush.msra.mxu0 %v2382
    %3827 = vmatpush.msra.mxu0 %v2334
    %3828 = vmatpush.msra.mxu0 %v2286
    %3829 = vmatpush.msra.mxu0 %v2238
    %3830 = vmatpush.msra.mxu0 %v2190
    %3831 = vmatpush.msra.mxu0 %v2142
    %3832 = vmatpush.msra.mxu0 %v2094
    %3833 = vmatpush.msra.mxu0 %v2046
    %3834 = vmatpush.msra.mxu0 %v1998
    %3835 = vmatpush.msra.mxu0 %v1950
    %3836 = vmatpush.msra.mxu0 %v1902
    %3837 = vmatpush.msra.mxu0 %v1854
    %3838 = vmatpush.msra.mxu0 %v1806
    %3839 = vmatpush.msra.mxu0 %v1758
    %3840 = vmatmul.f32.gmra.mxu0 %v959
    %v3841 = vpop.f32.mrf.mxu0
    %v3842 = vadd.f32 %v3822, %v3841
    %3843 = vdwg.mxu0
    %3844 = vmatpush.msra.mxu0 %v1711
    %3845 = vmatpush.msra.mxu0 %v1663
    %3846 = vmatpush.msra.mxu0 %v1615
    %3847 = vmatpush.msra.mxu0 %v1567
    %3848 = vmatpush.msra.mxu0 %v1519
    %3849 = vmatpush.msra.mxu0 %v1471
    %3850 = vmatpush.msra.mxu0 %v1423
    %3851 = vmatpush.msra.mxu0 %v1375
    %3852 = vmatpush.msra.mxu0 %v1327
    %3853 = vmatpush.msra.mxu0 %v1279
    %3854 = vmatpush.msra.mxu0 %v1231
    %3855 = vmatpush.msra.mxu0 %v1183
    %3856 = vmatpush.msra.mxu0 %v1135
    %3857 = vmatpush.msra.mxu0 %v1087
    %3858 = vmatpush.msra.mxu0 %v1039
    %3859 = vmatpush.msra.mxu0 %v991
    %3860 = vmatmul.f32.gmra.mxu0 %v958
    %v3861 = vpop.f32.mrf.mxu0
    %v3862 = vadd.f32 %v2539, %v3861
    %3863 = vdwg.mxu0
    %3864 = vmatpush.msra.mxu0 %v2479
    %3865 = vmatpush.msra.mxu0 %v2431
    %3866 = vmatpush.msra.mxu0 %v2383
    %3867 = vmatpush.msra.mxu0 %v2335
    %3868 = vmatpush.msra.mxu0 %v2287
    %3869 = vmatpush.msra.mxu0 %v2239
    %3870 = vmatpush.msra.mxu0 %v2191
    %3871 = vmatpush.msra.mxu0 %v2143
    %3872 = vmatpush.msra.mxu0 %v2095
    %3873 = vmatpush.msra.mxu0 %v2047
    %3874 = vmatpush.msra.mxu0 %v1999
    %3875 = vmatpush.msra.mxu0 %v1951
    %3876 = vmatpush.msra.mxu0 %v1903
    %3877 = vmatpush.msra.mxu0 %v1855
    %3878 = vmatpush.msra.mxu0 %v1807
    %3879 = vmatpush.msra.mxu0 %v1759
    %3880 = vmatmul.f32.gmra.mxu0 %v959
    %v3881 = vpop.f32.mrf.mxu0
    %v3882 = vadd.f32 %v3862, %v3881
    %3883 = vdwg.mxu0
    %3884 = vmatpush.msra.mxu0 %v1712
    %3885 = vmatpush.msra.mxu0 %v1664
    %3886 = vmatpush.msra.mxu0 %v1616
    %3887 = vmatpush.msra.mxu0 %v1568
    %3888 = vmatpush.msra.mxu0 %v1520
    %3889 = vmatpush.msra.mxu0 %v1472
    %3890 = vmatpush.msra.mxu0 %v1424
    %3891 = vmatpush.msra.mxu0 %v1376
    %3892 = vmatpush.msra.mxu0 %v1328
    %3893 = vmatpush.msra.mxu0 %v1280
    %3894 = vmatpush.msra.mxu0 %v1232
    %3895 = vmatpush.msra.mxu0 %v1184
    %3896 = vmatpush.msra.mxu0 %v1136
    %3897 = vmatpush.msra.mxu0 %v1088
    %3898 = vmatpush.msra.mxu0 %v1040
    %3899 = vmatpush.msra.mxu0 %v992
    %3900 = vmatmul.f32.gmra.mxu0 %v958
    %v3901 = vpop.f32.mrf.mxu0
    %v3902 = vadd.f32 %v2540, %v3901
    %3903 = vdwg.mxu0
    %3904 = vmatpush.msra.mxu0 %v2480
    %3905 = vmatpush.msra.mxu0 %v2432
    %3906 = vmatpush.msra.mxu0 %v2384
    %3907 = vmatpush.msra.mxu0 %v2336
    %3908 = vmatpush.msra.mxu0 %v2288
    %3909 = vmatpush.msra.mxu0 %v2240
    %3910 = vmatpush.msra.mxu0 %v2192
    %3911 = vmatpush.msra.mxu0 %v2144
    %3912 = vmatpush.msra.mxu0 %v2096
    %3913 = vmatpush.msra.mxu0 %v2048
    %3914 = vmatpush.msra.mxu0 %v2000
    %3915 = vmatpush.msra.mxu0 %v1952
    %3916 = vmatpush.msra.mxu0 %v1904
    %3917 = vmatpush.msra.mxu0 %v1856
    %3918 = vmatpush.msra.mxu0 %v1808
    %3919 = vmatpush.msra.mxu0 %v1760
    %3920 = vmatmul.f32.gmra.mxu0 %v959
    %v3921 = vpop.f32.mrf.mxu0
    %v3922 = vadd.f32 %v3902, %v3921
    %3923 = vdwg.mxu0
    %3924 = vmatpush.msra.mxu0 %v1713
    %3925 = vmatpush.msra.mxu0 %v1665
    %3926 = vmatpush.msra.mxu0 %v1617
    %3927 = vmatpush.msra.mxu0 %v1569
    %3928 = vmatpush.msra.mxu0 %v1521
    %3929 = vmatpush.msra.mxu0 %v1473
    %3930 = vmatpush.msra.mxu0 %v1425
    %3931 = vmatpush.msra.mxu0 %v1377
    %3932 = vmatpush.msra.mxu0 %v1329
    %3933 = vmatpush.msra.mxu0 %v1281
    %3934 = vmatpush.msra.mxu0 %v1233
    %3935 = vmatpush.msra.mxu0 %v1185
    %3936 = vmatpush.msra.mxu0 %v1137
    %3937 = vmatpush.msra.mxu0 %v1089
    %3938 = vmatpush.msra.mxu0 %v1041
    %3939 = vmatpush.msra.mxu0 %v993
    %3940 = vmatmul.f32.gmra.mxu0 %v958
    %v3941 = vpop.f32.mrf.mxu0
    %v3942 = vadd.f32 %v2541, %v3941
    %3943 = vdwg.mxu0
    %3944 = vmatpush.msra.mxu0 %v2481
    %3945 = vmatpush.msra.mxu0 %v2433
    %3946 = vmatpush.msra.mxu0 %v2385
    %3947 = vmatpush.msra.mxu0 %v2337
    %3948 = vmatpush.msra.mxu0 %v2289
    %3949 = vmatpush.msra.mxu0 %v2241
    %3950 = vmatpush.msra.mxu0 %v2193
    %3951 = vmatpush.msra.mxu0 %v2145
    %3952 = vmatpush.msra.mxu0 %v2097
    %3953 = vmatpush.msra.mxu0 %v2049
    %3954 = vmatpush.msra.mxu0 %v2001
    %3955 = vmatpush.msra.mxu0 %v1953
    %3956 = vmatpush.msra.mxu0 %v1905
    %3957 = vmatpush.msra.mxu0 %v1857
    %3958 = vmatpush.msra.mxu0 %v1809
    %3959 = vmatpush.msra.mxu0 %v1761
    %3960 = vmatmul.f32.gmra.mxu0 %v959
    %v3961 = vpop.f32.mrf.mxu0
    %v3962 = vadd.f32 %v3942, %v3961
    %3963 = vdwg.mxu0
    %3964 = vmatpush.msra.mxu0 %v1714
    %3965 = vmatpush.msra.mxu0 %v1666
    %3966 = vmatpush.msra.mxu0 %v1618
    %3967 = vmatpush.msra.mxu0 %v1570
    %3968 = vmatpush.msra.mxu0 %v1522
    %3969 = vmatpush.msra.mxu0 %v1474
    %3970 = vmatpush.msra.mxu0 %v1426
    %3971 = vmatpush.msra.mxu0 %v1378
    %3972 = vmatpush.msra.mxu0 %v1330
    %3973 = vmatpush.msra.mxu0 %v1282
    %3974 = vmatpush.msra.mxu0 %v1234
    %3975 = vmatpush.msra.mxu0 %v1186
    %3976 = vmatpush.msra.mxu0 %v1138
    %3977 = vmatpush.msra.mxu0 %v1090
    %3978 = vmatpush.msra.mxu0 %v1042
    %3979 = vmatpush.msra.mxu0 %v994
    %3980 = vmatmul.f32.gmra.mxu0 %v958
    %v3981 = vpop.f32.mrf.mxu0
    %v3982 = vadd.f32 %v2542, %v3981
    %3983 = vdwg.mxu0
    %3984 = vmatpush.msra.mxu0 %v2482
    %3985 = vmatpush.msra.mxu0 %v2434
    %3986 = vmatpush.msra.mxu0 %v2386
    %3987 = vmatpush.msra.mxu0 %v2338
    %3988 = vmatpush.msra.mxu0 %v2290
    %3989 = vmatpush.msra.mxu0 %v2242
    %3990 = vmatpush.msra.mxu0 %v2194
    %3991 = vmatpush.msra.mxu0 %v2146
    %3992 = vmatpush.msra.mxu0 %v2098
    %3993 = vmatpush.msra.mxu0 %v2050
    %3994 = vmatpush.msra.mxu0 %v2002
    %3995 = vmatpush.msra.mxu0 %v1954
    %3996 = vmatpush.msra.mxu0 %v1906
    %3997 = vmatpush.msra.mxu0 %v1858
    %3998 = vmatpush.msra.mxu0 %v1810
    %3999 = vmatpush.msra.mxu0 %v1762
    %4000 = vmatmul.f32.gmra.mxu0 %v959
    %v4001 = vpop.f32.mrf.mxu0
    %v4002 = vadd.f32 %v3982, %v4001
    %4003 = vdwg.mxu0
    %4004 = vmatpush.msra.mxu0 %v1715
    %4005 = vmatpush.msra.mxu0 %v1667
    %4006 = vmatpush.msra.mxu0 %v1619
    %4007 = vmatpush.msra.mxu0 %v1571
    %4008 = vmatpush.msra.mxu0 %v1523
    %4009 = vmatpush.msra.mxu0 %v1475
    %4010 = vmatpush.msra.mxu0 %v1427
    %4011 = vmatpush.msra.mxu0 %v1379
    %4012 = vmatpush.msra.mxu0 %v1331
    %4013 = vmatpush.msra.mxu0 %v1283
    %4014 = vmatpush.msra.mxu0 %v1235
    %4015 = vmatpush.msra.mxu0 %v1187
    %4016 = vmatpush.msra.mxu0 %v1139
    %4017 = vmatpush.msra.mxu0 %v1091
    %4018 = vmatpush.msra.mxu0 %v1043
    %4019 = vmatpush.msra.mxu0 %v995
    %4020 = vmatmul.f32.gmra.mxu0 %v958
    %v4021 = vpop.f32.mrf.mxu0
    %v4022 = vadd.f32 %v2543, %v4021
    %4023 = vdwg.mxu0
    %4024 = vmatpush.msra.mxu0 %v2483
    %4025 = vmatpush.msra.mxu0 %v2435
    %4026 = vmatpush.msra.mxu0 %v2387
    %4027 = vmatpush.msra.mxu0 %v2339
    %4028 = vmatpush.msra.mxu0 %v2291
    %4029 = vmatpush.msra.mxu0 %v2243
    %4030 = vmatpush.msra.mxu0 %v2195
    %4031 = vmatpush.msra.mxu0 %v2147
    %4032 = vmatpush.msra.mxu0 %v2099
    %4033 = vmatpush.msra.mxu0 %v2051
    %4034 = vmatpush.msra.mxu0 %v2003
    %4035 = vmatpush.msra.mxu0 %v1955
    %4036 = vmatpush.msra.mxu0 %v1907
    %4037 = vmatpush.msra.mxu0 %v1859
    %4038 = vmatpush.msra.mxu0 %v1811
    %4039 = vmatpush.msra.mxu0 %v1763
    %4040 = vmatmul.f32.gmra.mxu0 %v959
    %v4041 = vpop.f32.mrf.mxu0
    %v4042 = vadd.f32 %v4022, %v4041
    %4043 = vdwg.mxu0
    %4044 = vmatpush.msra.mxu0 %v1716
    %4045 = vmatpush.msra.mxu0 %v1668
    %4046 = vmatpush.msra.mxu0 %v1620
    %4047 = vmatpush.msra.mxu0 %v1572
    %4048 = vmatpush.msra.mxu0 %v1524
    %4049 = vmatpush.msra.mxu0 %v1476
    %4050 = vmatpush.msra.mxu0 %v1428
    %4051 = vmatpush.msra.mxu0 %v1380
    %4052 = vmatpush.msra.mxu0 %v1332
    %4053 = vmatpush.msra.mxu0 %v1284
    %4054 = vmatpush.msra.mxu0 %v1236
    %4055 = vmatpush.msra.mxu0 %v1188
    %4056 = vmatpush.msra.mxu0 %v1140
    %4057 = vmatpush.msra.mxu0 %v1092
    %4058 = vmatpush.msra.mxu0 %v1044
    %4059 = vmatpush.msra.mxu0 %v996
    %4060 = vmatmul.f32.gmra.mxu0 %v958
    %v4061 = vpop.f32.mrf.mxu0
    %v4062 = vadd.f32 %v2544, %v4061
    %4063 = vdwg.mxu0
    %4064 = vmatpush.msra.mxu0 %v2484
    %4065 = vmatpush.msra.mxu0 %v2436
    %4066 = vmatpush.msra.mxu0 %v2388
    %4067 = vmatpush.msra.mxu0 %v2340
    %4068 = vmatpush.msra.mxu0 %v2292
    %4069 = vmatpush.msra.mxu0 %v2244
    %4070 = vmatpush.msra.mxu0 %v2196
    %4071 = vmatpush.msra.mxu0 %v2148
    %4072 = vmatpush.msra.mxu0 %v2100
    %4073 = vmatpush.msra.mxu0 %v2052
    %4074 = vmatpush.msra.mxu0 %v2004
    %4075 = vmatpush.msra.mxu0 %v1956
    %4076 = vmatpush.msra.mxu0 %v1908
    %4077 = vmatpush.msra.mxu0 %v1860
    %4078 = vmatpush.msra.mxu0 %v1812
    %4079 = vmatpush.msra.mxu0 %v1764
    %4080 = vmatmul.f32.gmra.mxu0 %v959
    %v4081 = vpop.f32.mrf.mxu0
    %v4082 = vadd.f32 %v4062, %v4081
    %4083 = vdwg.mxu0
    %4084 = vmatpush.msra.mxu0 %v1717
    %4085 = vmatpush.msra.mxu0 %v1669
    %4086 = vmatpush.msra.mxu0 %v1621
    %4087 = vmatpush.msra.mxu0 %v1573
    %4088 = vmatpush.msra.mxu0 %v1525
    %4089 = vmatpush.msra.mxu0 %v1477
    %4090 = vmatpush.msra.mxu0 %v1429
    %4091 = vmatpush.msra.mxu0 %v1381
    %4092 = vmatpush.msra.mxu0 %v1333
    %4093 = vmatpush.msra.mxu0 %v1285
    %4094 = vmatpush.msra.mxu0 %v1237
    %4095 = vmatpush.msra.mxu0 %v1189
    %4096 = vmatpush.msra.mxu0 %v1141
    %4097 = vmatpush.msra.mxu0 %v1093
    %4098 = vmatpush.msra.mxu0 %v1045
    %4099 = vmatpush.msra.mxu0 %v997
    %4100 = vmatmul.f32.gmra.mxu0 %v958
    %v4101 = vpop.f32.mrf.mxu0
    %v4102 = vadd.f32 %v2545, %v4101
    %4103 = vdwg.mxu0
    %4104 = vmatpush.msra.mxu0 %v2485
    %4105 = vmatpush.msra.mxu0 %v2437
    %4106 = vmatpush.msra.mxu0 %v2389
    %4107 = vmatpush.msra.mxu0 %v2341
    %4108 = vmatpush.msra.mxu0 %v2293
    %4109 = vmatpush.msra.mxu0 %v2245
    %4110 = vmatpush.msra.mxu0 %v2197
    %4111 = vmatpush.msra.mxu0 %v2149
    %4112 = vmatpush.msra.mxu0 %v2101
    %4113 = vmatpush.msra.mxu0 %v2053
    %4114 = vmatpush.msra.mxu0 %v2005
    %4115 = vmatpush.msra.mxu0 %v1957
    %4116 = vmatpush.msra.mxu0 %v1909
    %4117 = vmatpush.msra.mxu0 %v1861
    %4118 = vmatpush.msra.mxu0 %v1813
    %4119 = vmatpush.msra.mxu0 %v1765
    %4120 = vmatmul.f32.gmra.mxu0 %v959
    %v4121 = vpop.f32.mrf.mxu0
    %v4122 = vadd.f32 %v4102, %v4121
    %4123 = vdwg.mxu0
    %4124 = vmatpush.msra.mxu0 %v1718
    %4125 = vmatpush.msra.mxu0 %v1670
    %4126 = vmatpush.msra.mxu0 %v1622
    %4127 = vmatpush.msra.mxu0 %v1574
    %4128 = vmatpush.msra.mxu0 %v1526
    %4129 = vmatpush.msra.mxu0 %v1478
    %4130 = vmatpush.msra.mxu0 %v1430
    %4131 = vmatpush.msra.mxu0 %v1382
    %4132 = vmatpush.msra.mxu0 %v1334
    %4133 = vmatpush.msra.mxu0 %v1286
    %4134 = vmatpush.msra.mxu0 %v1238
    %4135 = vmatpush.msra.mxu0 %v1190
    %4136 = vmatpush.msra.mxu0 %v1142
    %4137 = vmatpush.msra.mxu0 %v1094
    %4138 = vmatpush.msra.mxu0 %v1046
    %4139 = vmatpush.msra.mxu0 %v998
    %4140 = vmatmul.f32.gmra.mxu0 %v958
    %v4141 = vpop.f32.mrf.mxu0
    %v4142 = vadd.f32 %v2546, %v4141
    %4143 = vdwg.mxu0
    %4144 = vmatpush.msra.mxu0 %v2486
    %4145 = vmatpush.msra.mxu0 %v2438
    %4146 = vmatpush.msra.mxu0 %v2390
    %4147 = vmatpush.msra.mxu0 %v2342
    %4148 = vmatpush.msra.mxu0 %v2294
    %4149 = vmatpush.msra.mxu0 %v2246
    %4150 = vmatpush.msra.mxu0 %v2198
    %4151 = vmatpush.msra.mxu0 %v2150
    %4152 = vmatpush.msra.mxu0 %v2102
    %4153 = vmatpush.msra.mxu0 %v2054
    %4154 = vmatpush.msra.mxu0 %v2006
    %4155 = vmatpush.msra.mxu0 %v1958
    %4156 = vmatpush.msra.mxu0 %v1910
    %4157 = vmatpush.msra.mxu0 %v1862
    %4158 = vmatpush.msra.mxu0 %v1814
    %4159 = vmatpush.msra.mxu0 %v1766
    %4160 = vmatmul.f32.gmra.mxu0 %v959
    %v4161 = vpop.f32.mrf.mxu0
    %v4162 = vadd.f32 %v4142, %v4161
    %4163 = vdwg.mxu0
    %4164 = vmatpush.msra.mxu0 %v1719
    %4165 = vmatpush.msra.mxu0 %v1671
    %4166 = vmatpush.msra.mxu0 %v1623
    %4167 = vmatpush.msra.mxu0 %v1575
    %4168 = vmatpush.msra.mxu0 %v1527
    %4169 = vmatpush.msra.mxu0 %v1479
    %4170 = vmatpush.msra.mxu0 %v1431
    %4171 = vmatpush.msra.mxu0 %v1383
    %4172 = vmatpush.msra.mxu0 %v1335
    %4173 = vmatpush.msra.mxu0 %v1287
    %4174 = vmatpush.msra.mxu0 %v1239
    %4175 = vmatpush.msra.mxu0 %v1191
    %4176 = vmatpush.msra.mxu0 %v1143
    %4177 = vmatpush.msra.mxu0 %v1095
    %4178 = vmatpush.msra.mxu0 %v1047
    %4179 = vmatpush.msra.mxu0 %v999
    %4180 = vmatmul.f32.gmra.mxu0 %v958
    %v4181 = vpop.f32.mrf.mxu0
    %v4182 = vadd.f32 %v2547, %v4181
    %4183 = vdwg.mxu0
    %4184 = vmatpush.msra.mxu0 %v2487
    %4185 = vmatpush.msra.mxu0 %v2439
    %4186 = vmatpush.msra.mxu0 %v2391
    %4187 = vmatpush.msra.mxu0 %v2343
    %4188 = vmatpush.msra.mxu0 %v2295
    %4189 = vmatpush.msra.mxu0 %v2247
    %4190 = vmatpush.msra.mxu0 %v2199
    %4191 = vmatpush.msra.mxu0 %v2151
    %4192 = vmatpush.msra.mxu0 %v2103
    %4193 = vmatpush.msra.mxu0 %v2055
    %4194 = vmatpush.msra.mxu0 %v2007
    %4195 = vmatpush.msra.mxu0 %v1959
    %4196 = vmatpush.msra.mxu0 %v1911
    %4197 = vmatpush.msra.mxu0 %v1863
    %4198 = vmatpush.msra.mxu0 %v1815
    %4199 = vmatpush.msra.mxu0 %v1767
    %4200 = vmatmul.f32.gmra.mxu0 %v959
    %v4201 = vpop.f32.mrf.mxu0
    %v4202 = vadd.f32 %v4182, %v4201
    %4203 = vdwg.mxu0
    %4204 = vmatpush.msra.mxu0 %v1720
    %4205 = vmatpush.msra.mxu0 %v1672
    %4206 = vmatpush.msra.mxu0 %v1624
    %4207 = vmatpush.msra.mxu0 %v1576
    %4208 = vmatpush.msra.mxu0 %v1528
    %4209 = vmatpush.msra.mxu0 %v1480
    %4210 = vmatpush.msra.mxu0 %v1432
    %4211 = vmatpush.msra.mxu0 %v1384
    %4212 = vmatpush.msra.mxu0 %v1336
    %4213 = vmatpush.msra.mxu0 %v1288
    %4214 = vmatpush.msra.mxu0 %v1240
    %4215 = vmatpush.msra.mxu0 %v1192
    %4216 = vmatpush.msra.mxu0 %v1144
    %4217 = vmatpush.msra.mxu0 %v1096
    %4218 = vmatpush.msra.mxu0 %v1048
    %4219 = vmatpush.msra.mxu0 %v1000
    %4220 = vmatmul.f32.gmra.mxu0 %v958
    %v4221 = vpop.f32.mrf.mxu0
    %v4222 = vadd.f32 %v2548, %v4221
    %4223 = vdwg.mxu0
    %4224 = vmatpush.msra.mxu0 %v2488
    %4225 = vmatpush.msra.mxu0 %v2440
    %4226 = vmatpush.msra.mxu0 %v2392
    %4227 = vmatpush.msra.mxu0 %v2344
    %4228 = vmatpush.msra.mxu0 %v2296
    %4229 = vmatpush.msra.mxu0 %v2248
    %4230 = vmatpush.msra.mxu0 %v2200
    %4231 = vmatpush.msra.mxu0 %v2152
    %4232 = vmatpush.msra.mxu0 %v2104
    %4233 = vmatpush.msra.mxu0 %v2056
    %4234 = vmatpush.msra.mxu0 %v2008
    %4235 = vmatpush.msra.mxu0 %v1960
    %4236 = vmatpush.msra.mxu0 %v1912
    %4237 = vmatpush.msra.mxu0 %v1864
    %4238 = vmatpush.msra.mxu0 %v1816
    %4239 = vmatpush.msra.mxu0 %v1768
    %4240 = vmatmul.f32.gmra.mxu0 %v959
    %v4241 = vpop.f32.mrf.mxu0
    %v4242 = vadd.f32 %v4222, %v4241
    %4243 = vdwg.mxu0
    %4244 = vmatpush.msra.mxu0 %v1721
    %4245 = vmatpush.msra.mxu0 %v1673
    %4246 = vmatpush.msra.mxu0 %v1625
    %4247 = vmatpush.msra.mxu0 %v1577
    %4248 = vmatpush.msra.mxu0 %v1529
    %4249 = vmatpush.msra.mxu0 %v1481
    %4250 = vmatpush.msra.mxu0 %v1433
    %4251 = vmatpush.msra.mxu0 %v1385
    %4252 = vmatpush.msra.mxu0 %v1337
    %4253 = vmatpush.msra.mxu0 %v1289
    %4254 = vmatpush.msra.mxu0 %v1241
    %4255 = vmatpush.msra.mxu0 %v1193
    %4256 = vmatpush.msra.mxu0 %v1145
    %4257 = vmatpush.msra.mxu0 %v1097
    %4258 = vmatpush.msra.mxu0 %v1049
    %4259 = vmatpush.msra.mxu0 %v1001
    %4260 = vmatmul.f32.gmra.mxu0 %v958
    %v4261 = vpop.f32.mrf.mxu0
    %v4262 = vadd.f32 %v2549, %v4261
    %4263 = vdwg.mxu0
    %4264 = vmatpush.msra.mxu0 %v2489
    %4265 = vmatpush.msra.mxu0 %v2441
    %4266 = vmatpush.msra.mxu0 %v2393
    %4267 = vmatpush.msra.mxu0 %v2345
    %4268 = vmatpush.msra.mxu0 %v2297
    %4269 = vmatpush.msra.mxu0 %v2249
    %4270 = vmatpush.msra.mxu0 %v2201
    %4271 = vmatpush.msra.mxu0 %v2153
    %4272 = vmatpush.msra.mxu0 %v2105
    %4273 = vmatpush.msra.mxu0 %v2057
    %4274 = vmatpush.msra.mxu0 %v2009
    %4275 = vmatpush.msra.mxu0 %v1961
    %4276 = vmatpush.msra.mxu0 %v1913
    %4277 = vmatpush.msra.mxu0 %v1865
    %4278 = vmatpush.msra.mxu0 %v1817
    %4279 = vmatpush.msra.mxu0 %v1769
    %4280 = vmatmul.f32.gmra.mxu0 %v959
    %v4281 = vpop.f32.mrf.mxu0
    %v4282 = vadd.f32 %v4262, %v4281
    %4283 = vdwg.mxu0
    %4284 = vmatpush.msra.mxu0 %v1722
    %4285 = vmatpush.msra.mxu0 %v1674
    %4286 = vmatpush.msra.mxu0 %v1626
    %4287 = vmatpush.msra.mxu0 %v1578
    %4288 = vmatpush.msra.mxu0 %v1530
    %4289 = vmatpush.msra.mxu0 %v1482
    %4290 = vmatpush.msra.mxu0 %v1434
    %4291 = vmatpush.msra.mxu0 %v1386
    %4292 = vmatpush.msra.mxu0 %v1338
    %4293 = vmatpush.msra.mxu0 %v1290
    %4294 = vmatpush.msra.mxu0 %v1242
    %4295 = vmatpush.msra.mxu0 %v1194
    %4296 = vmatpush.msra.mxu0 %v1146
    %4297 = vmatpush.msra.mxu0 %v1098
    %4298 = vmatpush.msra.mxu0 %v1050
    %4299 = vmatpush.msra.mxu0 %v1002
    %4300 = vmatmul.f32.gmra.mxu0 %v958
    %v4301 = vpop.f32.mrf.mxu0
    %v4302 = vadd.f32 %v2550, %v4301
    %4303 = vdwg.mxu0
    %4304 = vmatpush.msra.mxu0 %v2490
    %4305 = vmatpush.msra.mxu0 %v2442
    %4306 = vmatpush.msra.mxu0 %v2394
    %4307 = vmatpush.msra.mxu0 %v2346
    %4308 = vmatpush.msra.mxu0 %v2298
    %4309 = vmatpush.msra.mxu0 %v2250
    %4310 = vmatpush.msra.mxu0 %v2202
    %4311 = vmatpush.msra.mxu0 %v2154
    %4312 = vmatpush.msra.mxu0 %v2106
    %4313 = vmatpush.msra.mxu0 %v2058
    %4314 = vmatpush.msra.mxu0 %v2010
    %4315 = vmatpush.msra.mxu0 %v1962
    %4316 = vmatpush.msra.mxu0 %v1914
    %4317 = vmatpush.msra.mxu0 %v1866
    %4318 = vmatpush.msra.mxu0 %v1818
    %4319 = vmatpush.msra.mxu0 %v1770
    %4320 = vmatmul.f32.gmra.mxu0 %v959
    %v4321 = vpop.f32.mrf.mxu0
    %v4322 = vadd.f32 %v4302, %v4321
    %4323 = vdwg.mxu0
    %4324 = vmatpush.msra.mxu0 %v1723
    %4325 = vmatpush.msra.mxu0 %v1675
    %4326 = vmatpush.msra.mxu0 %v1627
    %4327 = vmatpush.msra.mxu0 %v1579
    %4328 = vmatpush.msra.mxu0 %v1531
    %4329 = vmatpush.msra.mxu0 %v1483
    %4330 = vmatpush.msra.mxu0 %v1435
    %4331 = vmatpush.msra.mxu0 %v1387
    %4332 = vmatpush.msra.mxu0 %v1339
    %4333 = vmatpush.msra.mxu0 %v1291
    %4334 = vmatpush.msra.mxu0 %v1243
    %4335 = vmatpush.msra.mxu0 %v1195
    %4336 = vmatpush.msra.mxu0 %v1147
    %4337 = vmatpush.msra.mxu0 %v1099
    %4338 = vmatpush.msra.mxu0 %v1051
    %4339 = vmatpush.msra.mxu0 %v1003
    %4340 = vmatmul.f32.gmra.mxu0 %v958
    %v4341 = vpop.f32.mrf.mxu0
    %v4342 = vadd.f32 %v2551, %v4341
    %4343 = vdwg.mxu0
    %4344 = vmatpush.msra.mxu0 %v2491
    %4345 = vmatpush.msra.mxu0 %v2443
    %4346 = vmatpush.msra.mxu0 %v2395
    %4347 = vmatpush.msra.mxu0 %v2347
    %4348 = vmatpush.msra.mxu0 %v2299
    %4349 = vmatpush.msra.mxu0 %v2251
    %4350 = vmatpush.msra.mxu0 %v2203
    %4351 = vmatpush.msra.mxu0 %v2155
    %4352 = vmatpush.msra.mxu0 %v2107
    %4353 = vmatpush.msra.mxu0 %v2059
    %4354 = vmatpush.msra.mxu0 %v2011
    %4355 = vmatpush.msra.mxu0 %v1963
    %4356 = vmatpush.msra.mxu0 %v1915
    %4357 = vmatpush.msra.mxu0 %v1867
    %4358 = vmatpush.msra.mxu0 %v1819
    %4359 = vmatpush.msra.mxu0 %v1771
    %4360 = vmatmul.f32.gmra.mxu0 %v959
    %v4361 = vpop.f32.mrf.mxu0
    %v4362 = vadd.f32 %v4342, %v4361
    %4363 = vdwg.mxu0
    %4364 = vmatpush.msra.mxu0 %v1724
    %4365 = vmatpush.msra.mxu0 %v1676
    %4366 = vmatpush.msra.mxu0 %v1628
    %4367 = vmatpush.msra.mxu0 %v1580
    %4368 = vmatpush.msra.mxu0 %v1532
    %4369 = vmatpush.msra.mxu0 %v1484
    %4370 = vmatpush.msra.mxu0 %v1436
    %4371 = vmatpush.msra.mxu0 %v1388
    %4372 = vmatpush.msra.mxu0 %v1340
    %4373 = vmatpush.msra.mxu0 %v1292
    %4374 = vmatpush.msra.mxu0 %v1244
    %4375 = vmatpush.msra.mxu0 %v1196
    %4376 = vmatpush.msra.mxu0 %v1148
    %4377 = vmatpush.msra.mxu0 %v1100
    %4378 = vmatpush.msra.mxu0 %v1052
    %4379 = vmatpush.msra.mxu0 %v1004
    %4380 = vmatmul.f32.gmra.mxu0 %v958
    %v4381 = vpop.f32.mrf.mxu0
    %v4382 = vadd.f32 %v2552, %v4381
    %4383 = vdwg.mxu0
    %4384 = vmatpush.msra.mxu0 %v2492
    %4385 = vmatpush.msra.mxu0 %v2444
    %4386 = vmatpush.msra.mxu0 %v2396
    %4387 = vmatpush.msra.mxu0 %v2348
    %4388 = vmatpush.msra.mxu0 %v2300
    %4389 = vmatpush.msra.mxu0 %v2252
    %4390 = vmatpush.msra.mxu0 %v2204
    %4391 = vmatpush.msra.mxu0 %v2156
    %4392 = vmatpush.msra.mxu0 %v2108
    %4393 = vmatpush.msra.mxu0 %v2060
    %4394 = vmatpush.msra.mxu0 %v2012
    %4395 = vmatpush.msra.mxu0 %v1964
    %4396 = vmatpush.msra.mxu0 %v1916
    %4397 = vmatpush.msra.mxu0 %v1868
    %4398 = vmatpush.msra.mxu0 %v1820
    %4399 = vmatpush.msra.mxu0 %v1772
    %4400 = vmatmul.f32.gmra.mxu0 %v959
    %v4401 = vpop.f32.mrf.mxu0
    %v4402 = vadd.f32 %v4382, %v4401
    %4403 = vdwg.mxu0
    %4404 = vmatpush.msra.mxu0 %v1725
    %4405 = vmatpush.msra.mxu0 %v1677
    %4406 = vmatpush.msra.mxu0 %v1629
    %4407 = vmatpush.msra.mxu0 %v1581
    %4408 = vmatpush.msra.mxu0 %v1533
    %4409 = vmatpush.msra.mxu0 %v1485
    %4410 = vmatpush.msra.mxu0 %v1437
    %4411 = vmatpush.msra.mxu0 %v1389
    %4412 = vmatpush.msra.mxu0 %v1341
    %4413 = vmatpush.msra.mxu0 %v1293
    %4414 = vmatpush.msra.mxu0 %v1245
    %4415 = vmatpush.msra.mxu0 %v1197
    %4416 = vmatpush.msra.mxu0 %v1149
    %4417 = vmatpush.msra.mxu0 %v1101
    %4418 = vmatpush.msra.mxu0 %v1053
    %4419 = vmatpush.msra.mxu0 %v1005
    %4420 = vmatmul.f32.gmra.mxu0 %v958
    %v4421 = vpop.f32.mrf.mxu0
    %v4422 = vadd.f32 %v2553, %v4421
    %4423 = vdwg.mxu0
    %4424 = vmatpush.msra.mxu0 %v2493
    %4425 = vmatpush.msra.mxu0 %v2445
    %4426 = vmatpush.msra.mxu0 %v2397
    %4427 = vmatpush.msra.mxu0 %v2349
    %4428 = vmatpush.msra.mxu0 %v2301
    %4429 = vmatpush.msra.mxu0 %v2253
    %4430 = vmatpush.msra.mxu0 %v2205
    %4431 = vmatpush.msra.mxu0 %v2157
    %4432 = vmatpush.msra.mxu0 %v2109
    %4433 = vmatpush.msra.mxu0 %v2061
    %4434 = vmatpush.msra.mxu0 %v2013
    %4435 = vmatpush.msra.mxu0 %v1965
    %4436 = vmatpush.msra.mxu0 %v1917
    %4437 = vmatpush.msra.mxu0 %v1869
    %4438 = vmatpush.msra.mxu0 %v1821
    %4439 = vmatpush.msra.mxu0 %v1773
    %4440 = vmatmul.f32.gmra.mxu0 %v959
    %v4441 = vpop.f32.mrf.mxu0
    %v4442 = vadd.f32 %v4422, %v4441
    %4443 = vdwg.mxu0
    %4444 = vmatpush.msra.mxu0 %v1726
    %4445 = vmatpush.msra.mxu0 %v1678
    %4446 = vmatpush.msra.mxu0 %v1630
    %4447 = vmatpush.msra.mxu0 %v1582
    %4448 = vmatpush.msra.mxu0 %v1534
    %4449 = vmatpush.msra.mxu0 %v1486
    %4450 = vmatpush.msra.mxu0 %v1438
    %4451 = vmatpush.msra.mxu0 %v1390
    %4452 = vmatpush.msra.mxu0 %v1342
    %4453 = vmatpush.msra.mxu0 %v1294
    %4454 = vmatpush.msra.mxu0 %v1246
    %4455 = vmatpush.msra.mxu0 %v1198
    %4456 = vmatpush.msra.mxu0 %v1150
    %4457 = vmatpush.msra.mxu0 %v1102
    %4458 = vmatpush.msra.mxu0 %v1054
    %4459 = vmatpush.msra.mxu0 %v1006
    %4460 = vmatmul.f32.gmra.mxu0 %v958
    %v4461 = vpop.f32.mrf.mxu0
    %v4462 = vadd.f32 %v2554, %v4461
    %4463 = vdwg.mxu0
    %4464 = vmatpush.msra.mxu0 %v2494
    %4465 = vmatpush.msra.mxu0 %v2446
    %4466 = vmatpush.msra.mxu0 %v2398
    %4467 = vmatpush.msra.mxu0 %v2350
    %4468 = vmatpush.msra.mxu0 %v2302
    %4469 = vmatpush.msra.mxu0 %v2254
    %4470 = vmatpush.msra.mxu0 %v2206
    %4471 = vmatpush.msra.mxu0 %v2158
    %4472 = vmatpush.msra.mxu0 %v2110
    %4473 = vmatpush.msra.mxu0 %v2062
    %4474 = vmatpush.msra.mxu0 %v2014
    %4475 = vmatpush.msra.mxu0 %v1966
    %4476 = vmatpush.msra.mxu0 %v1918
    %4477 = vmatpush.msra.mxu0 %v1870
    %4478 = vmatpush.msra.mxu0 %v1822
    %4479 = vmatpush.msra.mxu0 %v1774
    %4480 = vmatmul.f32.gmra.mxu0 %v959
    %v4481 = vpop.f32.mrf.mxu0
    %v4482 = vadd.f32 %v4462, %v4481
    %4483 = vdwg.mxu0
    %4484 = vmatpush.msra.mxu0 %v1727
    %4485 = vmatpush.msra.mxu0 %v1679
    %4486 = vmatpush.msra.mxu0 %v1631
    %4487 = vmatpush.msra.mxu0 %v1583
    %4488 = vmatpush.msra.mxu0 %v1535
    %4489 = vmatpush.msra.mxu0 %v1487
    %4490 = vmatpush.msra.mxu0 %v1439
    %4491 = vmatpush.msra.mxu0 %v1391
    %4492 = vmatpush.msra.mxu0 %v1343
    %4493 = vmatpush.msra.mxu0 %v1295
    %4494 = vmatpush.msra.mxu0 %v1247
    %4495 = vmatpush.msra.mxu0 %v1199
    %4496 = vmatpush.msra.mxu0 %v1151
    %4497 = vmatpush.msra.mxu0 %v1103
    %4498 = vmatpush.msra.mxu0 %v1055
    %4499 = vmatpush.msra.mxu0 %v1007
    %4500 = vmatmul.f32.gmra.mxu0 %v958
    %v4501 = vpop.f32.mrf.mxu0
    %v4502 = vadd.f32 %v2555, %v4501
    %4503 = vdwg.mxu0
    %4504 = vmatpush.msra.mxu0 %v2495
    %4505 = vmatpush.msra.mxu0 %v2447
    %4506 = vmatpush.msra.mxu0 %v2399
    %4507 = vmatpush.msra.mxu0 %v2351
    %4508 = vmatpush.msra.mxu0 %v2303
    %4509 = vmatpush.msra.mxu0 %v2255
    %4510 = vmatpush.msra.mxu0 %v2207
    %4511 = vmatpush.msra.mxu0 %v2159
    %4512 = vmatpush.msra.mxu0 %v2111
    %4513 = vmatpush.msra.mxu0 %v2063
    %4514 = vmatpush.msra.mxu0 %v2015
    %4515 = vmatpush.msra.mxu0 %v1967
    %4516 = vmatpush.msra.mxu0 %v1919
    %4517 = vmatpush.msra.mxu0 %v1871
    %4518 = vmatpush.msra.mxu0 %v1823
    %4519 = vmatpush.msra.mxu0 %v1775
    %4520 = vmatmul.f32.gmra.mxu0 %v959
    %v4521 = vpop.f32.mrf.mxu0
    %v4522 = vadd.f32 %v4502, %v4521
    %4523 = vdwg.mxu0
    %v4524 = vmax.f32 %v2642, 0.0
    %v4525 = vmax.f32 %v2682, 0.0
    %v4526 = vmax.f32 %v2722, 0.0
    %v4527 = vmax.f32 %v2762, 0.0
    %v4528 = vmax.f32 %v2802, 0.0
    %v4529 = vmax.f32 %v2842, 0.0
    %v4530 = vmax.f32 %v2882, 0.0
    %v4531 = vmax.f32 %v2922, 0.0
    %v4532 = vmax.f32 %v2962, 0.0
    %v4533 = vmax.f32 %v3002, 0.0
    %v4534 = vmax.f32 %v3042, 0.0
    %v4535 = vmax.f32 %v3082, 0.0
    %v4536 = vmax.f32 %v3122, 0.0
    %v4537 = vmax.f32 %v3162, 0.0
    %v4538 = vmax.f32 %v3202, 0.0
    %v4539 = vmax.f32 %v3242, 0.0
    %v4540 = vmax.f32 %v3282, 0.0
    %v4541 = vmax.f32 %v3322, 0.0
    %v4542 = vmax.f32 %v3362, 0.0
    %v4543 = vmax.f32 %v3402, 0.0
    %v4544 = vmax.f32 %v3442, 0.0
    %v4545 = vmax.f32 %v3482, 0.0
    %v4546 = vmax.f32 %v3522, 0.0
    %v4547 = vmax.f32 %v3562, 0.0
    %v4548 = vmax.f32 %v3602, 0.0
    %v4549 = vmax.f32 %v3642, 0.0
    %v4550 = vmax.f32 %v3682, 0.0
    %v4551 = vmax.f32 %v3722, 0.0
    %v4552 = vmax.f32 %v3762, 0.0
    %v4553 = vmax.f32 %v3802, 0.0
    %v4554 = vmax.f32 %v3842, 0.0
    %v4555 = vmax.f32 %v3882, 0.0
    %v4556 = vmax.f32 %v3922, 0.0
    %v4557 = vmax.f32 %v3962, 0.0
    %v4558 = vmax.f32 %v4002, 0.0
    %v4559 = vmax.f32 %v4042, 0.0
    %v4560 = vmax.f32 %v4082, 0.0
    %v4561 = vmax.f32 %v4122, 0.0
    %v4562 = vmax.f32 %v4162, 0.0
    %v4563 = vmax.f32 %v4202, 0.0
    %v4564 = vmax.f32 %v4242, 0.0
    %v4565 = vmax.f32 %v4282, 0.0
    %v4566 = vmax.f32 %v4322, 0.0
    %v4567 = vmax.f32 %v4362, 0.0
    %v4568 = vmax.f32 %v4402, 0.0
    %v4569 = vmax.f32 %v4442, 0.0
    %v4570 = vmax.f32 %v4482, 0.0
    %v4571 = vmax.f32 %v4522, 0.0
    %v4620 = vrot.slane %v4525, 6
    %v4621 = vrot.slane %v4526, 4
    %v4622 = vrot.slane %v4527, 2
    %v4623 = vrot.slane %v4529, 6
    %v4624 = vrot.slane %v4530, 4
    %v4625 = vrot.slane %v4531, 2
    %v4626 = vrot.slane %v4533, 6
    %v4627 = vrot.slane %v4534, 4
    %v4628 = vrot.slane %v4535, 2
    %v4629 = vrot.slane %v4537, 6
    %v4630 = vrot.slane %v4538, 4
    %v4631 = vrot.slane %v4539, 2
    %v4632 = vrot.slane %v4541, 6
    %v4633 = vrot.slane %v4542, 4
    %v4634 = vrot.slane %v4543, 2
    %v4635 = vrot.slane %v4545, 6
    %v4636 = vrot.slane %v4546, 4
    %v4637 = vrot.slane %v4547, 2
    %v4638 = vrot.slane %v4549, 6
    %v4639 = vrot.slane %v4550, 4
    %v4640 = vrot.slane %v4551, 2
    %v4641 = vrot.slane %v4553, 6
    %v4642 = vrot.slane %v4554, 4
    %v4643 = vrot.slane %v4555, 2
    %v4644 = vrot.slane %v4557, 6
    %v4645 = vrot.slane %v4558, 4
    %v4646 = vrot.slane %v4559, 2
    %v4647 = vrot.slane %v4561, 6
    %v4648 = vrot.slane %v4562, 4
    %v4649 = vrot.slane %v4563, 2
    %v4650 = vrot.slane %v4565, 6
    %v4651 = vrot.slane %v4566, 4
    %v4652 = vrot.slane %v4567, 2
    %v4653 = vrot.slane %v4569, 6
    %v4654 = vrot.slane %v4570, 4
    %v4655 = vrot.slane %v4571, 2
    %vm4656 = vcmask 1041408
    %v4657 = vsel %vm4656, %v4524, %v4620
    %vm4658 = vcmask 1045508
    %v4659 = vsel %vm4658, %v4621, %v4622
    %vm4660 = vcmask 1043456
    %v4661 = vsel %vm4660, %v4657, %v4659
    %v4662 = vsel %vm4656, %v4528, %v4623
    %v4663 = vsel %vm4658, %v4624, %v4625
    %v4664 = vsel %vm4660, %v4662, %v4663
    %v4665 = vsel %vm4656, %v4532, %v4626
    %v4666 = vsel %vm4658, %v4627, %v4628
    %v4667 = vsel %vm4660, %v4665, %v4666
    %v4668 = vsel %vm4656, %v4536, %v4629
    %v4669 = vsel %vm4658, %v4630, %v4631
    %v4670 = vsel %vm4660, %v4668, %v4669
    %v4671 = vsel %vm4656, %v4540, %v4632
    %v4672 = vsel %vm4658, %v4633, %v4634
    %v4673 = vsel %vm4660, %v4671, %v4672
    %v4674 = vsel %vm4656, %v4544, %v4635
    %v4675 = vsel %vm4658, %v4636, %v4637
    %v4676 = vsel %vm4660, %v4674, %v4675
    %v4677 = vsel %vm4656, %v4548, %v4638
    %v4678 = vsel %vm4658, %v4639, %v4640
    %v4679 = vsel %vm4660, %v4677, %v4678
    %v4680 = vsel %vm4656, %v4552, %v4641
    %v4681 = vsel %vm4658, %v4642, %v4643
    %v4682 = vsel %vm4660, %v4680, %v4681
    %v4683 = vsel %vm4656, %v4556, %v4644
    %v4684 = vsel %vm4658, %v4645, %v4646
    %v4685 = vsel %vm4660, %v4683, %v4684
    %v4686 = vsel %vm4656, %v4560, %v4647
    %v4687 = vsel %vm4658, %v4648, %v4649
    %v4688 = vsel %vm4660, %v4686, %v4687
    %v4689 = vsel %vm4656, %v4564, %v4650
    %v4690 = vsel %vm4658, %v4651, %v4652
    %v4691 = vsel %vm4660, %v4689, %v4690
    %v4692 = vsel %vm4656, %v4568, %v4653
    %v4693 = vsel %vm4658, %v4654, %v4655
    %v4694 = vsel %vm4660, %v4692, %v4693
    %4707 = vst [vmem:[#allocation28] sm:$0xff] %v4661
    %4708 = vst [vmem:[#allocation28 + $0x8] sm:$0xff] %v4664
    %4709 = vst [vmem:[#allocation28 + $0x10] sm:$0xff] %v4667
    %4710 = vst [vmem:[#allocation28 + $0x18] sm:$0xff] %v4670
    %4711 = vst [vmem:[#allocation28 + $0x20] sm:$0xff] %v4673
    %4712 = vst [vmem:[#allocation28 + $0x28] sm:$0xff] %v4676
    %4713 = vst [vmem:[#allocation28 + $0x30] sm:$0xff] %v4679
    %4714 = vst [vmem:[#allocation28 + $0x38] sm:$0xff] %v4682
    %4715 = vst [vmem:[#allocation28 + $0x40] sm:$0xff] %v4685
    %4716 = vst [vmem:[#allocation28 + $0x48] sm:$0xff] %v4688
    %4717 = vst [vmem:[#allocation28 + $0x50] sm:$0xff] %v4691
    %4718 = vst [vmem:[#allocation28 + $0x58] sm:$0xff] %v4694
    // Predicated region
    $region134: #{tpu_custom_call.1} parent=1 // pred_check
      _
    $region135: #{tpu_custom_call.1} parent=1 // pred_check_branch
      %4720 = sbr.rel (0) target = $region137
    $region136: #{tpu_custom_call.1} parent=1 // pred_region
      %4722 = vsyncadd [#allocation4], 0
      %s4724 = sshll.u32 [#allocation28], 4
      %s4725 = int_to_ptr.vmem [resolvable:$true] %s4724
      %s4726 = sshll.u32 %s17, 4
      %s4727 = int_to_ptr.hbm [resolvable:$true] %s4726
      %4729 = dma.vmem_to_hbm [thread:$0]  %s4725, 1536, %s4727, [#allocation4]
    $region137: #{tpu_custom_call.1} parent=1 // pred_fallthru
      _
    // Predicated region
    $region138: #{tpu_custom_call.1} parent=1 // pred_check
      _
    $region139: #{tpu_custom_call.1} parent=1 // pred_check_branch
      %4731 = sbr.rel (0) target = $region141
    $region140: #{tpu_custom_call.1} parent=1 // pred_region
      %4733 = dma.done [#allocation4], 1536
    $region141: #{tpu_custom_call.1} parent=1 // pred_fallthru
      _
    %4734 = vsyncpa [#allocation3], 1
    %4735 = vsyncpa [#allocation6], 1
    %4736 = vsyncpa [#allocation9], 1
    %4737 = vsyncpa [#allocation12], 1
    %4738 = vsyncpa [#allocation15], 1
    %4739 = vsyncpa [#allocation18], 1
    %4740 = vsyncpa [#allocation21], 1
    %4741 = vsyncpa [#allocation24], 1
    %4742 = vsyncpa [#allocation27], 1
    %4743 = vsyncpa [#allocation4], 1

</llo_original>
